<compile_context>
chip_gen: v6e
topology: v6e:2x2x1
jax: 0.10.0
libtpu: 0.0.40
codegen_flags: <defaults>
</compile_context>

<pallas_src>
import functools

import jax
import jax.numpy as jnp
from jax import lax
from jax.experimental import pallas as pl
from jax.experimental.pallas import tpu as pltpu

KS = 4        # ConvTranspose2d kernel_size
STRIDE = 2
PAD = 1
EPS = 1e-5    # GroupNorm default eps


def _up_block_kernel(x_ref, w_ref, b_ref, gamma_ref, beta_ref, gm_ref, o_ref,
                     *, H, W, Cin, Cout, Cg):
    """One batch element per grid step.

    x_ref:     (1, H+2, W+2, Cin)    zero-padded NHWC input tile (bf16)
    w_ref:     (2, 2, 4*Cin, Cout)   parity-packed ConvTranspose weights (bf16)
    b_ref:     (1, Cout)             conv bias (f32)
    gamma_ref: (1, Cout)             GroupNorm weight (f32)
    beta_ref:  (1, Cout)             GroupNorm bias (f32)
    gm_ref:    (Cout, Cout)          group-membership matrix (f32, 1.0 iff same group)
    o_ref:     (1, H, 2, W, 2*Cout)  output: o[0,h,r,w,s*Cout+c] = y[2h+r, 2w+s, c]
    """
    S = H * W
    M = 4.0 * S                         # number of spatial positions in the output

    # Memoized shifted windows of the padded input (only 9 distinct (pr, pc) exist).
    win_cache = {}

    def win(pr, pc):
        if (pr, pc) not in win_cache:
            win_cache[(pr, pc)] = x_ref[0, pr:pr + H, pc:pc + W, :]   # (H, W, Cin)
        return win_cache[(pr, pc)]

    ch_sum = jnp.zeros((1, Cout), jnp.float32)   # per-channel sum of bias-less conv
    ch_sq = jnp.zeros((1, Cout), jnp.float32)    # per-channel sum of squares

    for r in (0, 1):
        accs = []
        for s in (0, 1):
            # Fuse the 4 taps of this output parity along the contraction dim.
            # Window order (a, b) must match the wrapper's weight packing.
            xs = jnp.concatenate(
                [win(r + a, s + b) for a in (0, 1) for b in (0, 1)], axis=-1)
            acc = jnp.dot(xs.reshape(S, 4 * Cin), w_ref[r, s],
                          preferred_element_type=jnp.float32)         # (S, Cout) f32
            ch_sum = ch_sum + jnp.sum(acc, axis=0, keepdims=True)
            ch_sq = ch_sq + jnp.sum(acc * acc, axis=0, keepdims=True)
            accs.append(acc)
        # Lane-dense pre-activation store straight into the output block (bias-less;
        # the bias is folded into the affine below before the final overwrite).
        o_ref[0, :, r] = jnp.concatenate(accs, axis=-1).reshape(H, W, 2 * Cout)

    # Correct the per-channel stats for the (not yet applied) conv bias b:
    #   sum(y + b)  = sum(y)  + M*b
    #   sum((y+b)^2)= sum(y^2)+ 2*b*sum(y) + M*b^2
    bias = b_ref[...]                                    # (1, Cout)
    p_sum = ch_sum + M * bias
    p_sq = ch_sq + 2.0 * bias * ch_sum + M * bias * bias

    # GroupNorm: per-group sums via one tiny (1,Cout)@(Cout,Cout) matmul, then fold
    # bias/gamma/beta/mean/rsqrt(var) into a per-channel scale/shift.
    inv_cnt = 1.0 / (M * Cg)
    gsum = jnp.dot(p_sum, gm_ref[...], preferred_element_type=jnp.float32)
    gsq = jnp.dot(p_sq, gm_ref[...], preferred_element_type=jnp.float32)
    mean = gsum * inv_cnt                                # (1, Cout) group mean per channel
    var = gsq * inv_cnt - mean * mean
    scale = gamma_ref[...] * lax.rsqrt(var + EPS)        # (1, Cout)
    shift = beta_ref[...] + (bias - mean) * scale        # bias folded in here
    scale2 = jnp.concatenate([scale, scale], axis=-1)    # (1, 2*Cout) for packed lanes
    shift2 = jnp.concatenate([shift, shift], axis=-1)

    # Fused normalize + SiLU, in place over the output block.
    for r in (0, 1):
        z = o_ref[0, :, r] * scale2 + shift2             # (H, W, 2*Cout)
        o_ref[0, :, r] = z * jax.nn.sigmoid(z)


def vqvae_up_block(x_nchw, weight, bias, gamma, beta):
    """weight: (Cin, Cout, 4, 4) PyTorch ConvTranspose2d layout."""
    N, Cin, H, W = x_nchw.shape
    Cout = weight.shape[1]
    G = max(Cout // 8, 1)        # matches nn.GroupNorm(max(out_channels // 8, 1), out_channels)
    Cg = Cout // G
    S = H * W

    # Input-side glue (the small side of the upsampler): NCHW -> NHWC, 1-pixel halo
    # pad, bf16 cast so the MXU runs at its bf16 rate (accumulation stays f32).
    # XLA fuses transpose+pad+cast into one pass over the (small) input.
    x = jnp.transpose(x_nchw, (0, 2, 3, 1))
    xp = jnp.pad(x, ((0, 0), (1, 1), (1, 1), (0, 0))).astype(jnp.bfloat16)

    # Parity-packed weights: w_par[r, s] is (4*Cin, Cout) with taps stacked along the
    # contraction dim in the same (a, b) order the kernel concatenates its windows.
    # Tap mapping: padded row offset pr = r + a  <->  kh = 3 - 2a - r (same for cols).
    w_t = jnp.transpose(weight, (2, 3, 0, 1))            # (kh, kw, Cin, Cout)
    w_par = jnp.stack([
        jnp.stack([
            jnp.concatenate(
                [w_t[3 - 2 * a - r, 3 - 2 * b - s] for a in (0, 1) for b in (0, 1)],
                axis=0)
            for s in (0, 1)], axis=0)
        for r in (0, 1)], axis=0).astype(jnp.bfloat16)   # (2, 2, 4*Cin, Cout)

    b2 = bias.reshape(1, Cout).astype(jnp.float32)
    g2 = gamma.reshape(1, Cout).astype(jnp.float32)
    be2 = beta.reshape(1, Cout).astype(jnp.float32)
    gidx = jnp.arange(Cout) // Cg
    gm = (gidx[:, None] == gidx[None, :]).astype(jnp.float32)   # (Cout, Cout)

    kernel = functools.partial(_up_block_kernel, H=H, W=W, Cin=Cin, Cout=Cout, Cg=Cg)

    # Scoped-VMEM budget: double-buffered blocks + transient headroom, clamped sanely.
    blk_bytes = 2 * ((H + 2) * (W + 2) * Cin * 2          # input (bf16)
                     + 4 * S * Cout * 4                   # output block (f32)
                     + 16 * Cin * Cout * 2                # packed weights (bf16)
                     + Cout * Cout * 4 + 3 * Cout * 4)    # gm + bias/gamma/beta
    tran_bytes = 4 * S * 4 * Cin * 2 + 4 * S * Cout * 4   # xs_cat + acc temporaries
    vmem_limit = int(min(max(2 * (blk_bytes + tran_bytes), 32 * 1024 * 1024),
                         127 * 1024 * 1024))

    # TODO(synk): for very large H*W*Cout (v7x 64 MiB VMEM) add a spatial grid axis
    # with a two-pass GroupNorm (conv+stats pass, then normalize+SiLU pass).
    out = pl.pallas_call(
        kernel,
        out_shape=jax.ShapeDtypeStruct((N, H, 2, W, 2 * Cout), jnp.float32),
        grid_spec=pltpu.PrefetchScalarGridSpec(
            num_scalar_prefetch=0,
            grid=(N,),
            in_specs=[
                pl.BlockSpec((1, H + 2, W + 2, Cin), lambda n: (n, 0, 0, 0)),
                pl.BlockSpec((2, 2, 4 * Cin, Cout), lambda n: (0, 0, 0, 0)),
                pl.BlockSpec((1, Cout), lambda n: (0, 0)),
                pl.BlockSpec((1, Cout), lambda n: (0, 0)),
                pl.BlockSpec((1, Cout), lambda n: (0, 0)),
                pl.BlockSpec((Cout, Cout), lambda n: (0, 0)),
            ],
            out_specs=pl.BlockSpec((1, H, 2, W, 2 * Cout),
                                   lambda n: (n, 0, 0, 0, 0)),
        ),
        compiler_params=pltpu.CompilerParams(
            dimension_semantics=("parallel",),
            vmem_limit_bytes=vmem_limit),
    )(xp, w_par, b2, g2, be2, gm)

    # out[n, h, r, w, s*Cout + c] == y[n, 2h+r, 2w+s, c]  ->  free reshape to NHWC.
    y_nhwc = out.reshape(N, 2 * H, 2 * W, Cout)
    # TODO(synk): skip this final transpose if the consumer accepts NHWC; it is the
    # only remaining full HBM round trip of the 4x-sized output.
    return jnp.transpose(y_nhwc, (0, 3, 1, 2))            # NCHW


def _reference(x_nchw, weight, bias, gamma, beta):
    """Pure-JAX reference with the module's semantics (for verification)."""
    N, Cin, H, W = x_nchw.shape
    Cout = weight.shape[1]
    G = max(Cout // 8, 1)
    x = jnp.transpose(x_nchw, (0, 2, 3, 1)).astype(jnp.float32)
    # ConvTranspose2d == lhs-dilated conv with spatially-flipped kernel,
    # padding = kernel - 1 - padding = 2.
    rhs = jnp.flip(weight.astype(jnp.float32), axis=(2, 3)).transpose(2, 3, 0, 1)  # HWIO
    y = lax.conv_general_dilated(
        x, rhs, window_strides=(1, 1), padding=((2, 2), (2, 2)),
        lhs_dilation=(2, 2), dimension_numbers=('NHWC', 'HWIO', 'NHWC'),
        precision=lax.Precision.HIGHEST)
    y = y + bias.astype(jnp.float32)
    Ho, Wo = 2 * H, 2 * W
    Cg = Cout // G
    yg = y.reshape(N, Ho, Wo, G, Cg)
    mu = yg.mean(axis=(1, 2, 4), keepdims=True)
    var = ((yg - mu) ** 2).mean(axis=(1, 2, 4), keepdims=True)
    yn = ((yg - mu) / jnp.sqrt(var + EPS)).reshape(N, Ho, Wo, Cout)
    yn = yn * gamma.astype(jnp.float32) + beta.astype(jnp.float32)
    yn = yn * jax.nn.sigmoid(yn)
    return jnp.transpose(yn, (0, 3, 1, 2))


if __name__ == "__main__":
    N, Cin, Cout, H, W = 2, 4, 16, 16, 16

    key = jax.random.PRNGKey(0)
    kx, kw, kb, kg, kbe = jax.random.split(key, 5)
    x = jax.random.normal(kx, (N, Cin, H, W), jnp.float32)
    weight = 0.1 * jax.random.normal(kw, (Cin, Cout, KS, KS), jnp.float32)
    bias = 0.1 * jax.random.normal(kb, (Cout,), jnp.float32)
    gamma = 1.0 + 0.1 * jax.random.normal(kg, (Cout,), jnp.float32)
    beta = 0.1 * jax.random.normal(kbe, (Cout,), jnp.float32)

    out = jax.block_until_ready(vqvae_up_block(x, weight, bias, gamma, beta))

    # The kernel feeds the MXU bf16 inputs (with f32 accumulation); compare against
    # an f32 reference computed on identically bf16-rounded conv inputs so the check
    # isolates implementation error rather than input-rounding error.
    x_r = x.astype(jnp.bfloat16).astype(jnp.float32)
    w_r = weight.astype(jnp.bfloat16).astype(jnp.float32)
    ref = jax.block_until_ready(_reference(x_r, w_r, bias, gamma, beta))

    assert out.shape == (N, Cout, 2 * H, 2 * W), out.shape
    max_diff = jnp.max(jnp.abs(out - ref))
    assert jnp.allclose(out, ref, atol=1e-3, rtol=1e-3), f"max abs diff {max_diff}"

    print("KERNEL_OK")
</pallas_src>

<mosaic_0001>
module attributes {stable_mosaic.version = 11 : i64} {
  func.func @_up_block_kernel(%arg0: i32, %arg1: memref<1x18x18x4xbf16, #tpu.memory_space<vmem>>, %arg2: memref<2x2x16x16xbf16, #tpu.memory_space<vmem>>, %arg3: memref<1x16xf32, #tpu.memory_space<vmem>>, %arg4: memref<1x16xf32, #tpu.memory_space<vmem>>, %arg5: memref<1x16xf32, #tpu.memory_space<vmem>>, %arg6: memref<16x16xf32, #tpu.memory_space<vmem>>, %arg7: memref<1x16x2x16x32xf32, #tpu.memory_space<vmem>>) attributes {dimension_semantics = [#tpu.dimension_semantics<parallel>], iteration_bounds = array<i64: 2>, scalar_prefetch = 0 : i64, scratch_operands = 0 : i64, tpu.core_type = #tpu.core_type<tc>, window_params = [{transform_indices = @transform_0, window_bounds = array<i64: 1, 18, 18, 4>}, {pipeline_mode = #tpu.pipeline_mode<synchronous>, transform_indices = @transform_1, window_bounds = array<i64: 2, 2, 16, 16>}, {pipeline_mode = #tpu.pipeline_mode<synchronous>, transform_indices = @transform_2, window_bounds = array<i64: 1, 16>}, {pipeline_mode = #tpu.pipeline_mode<synchronous>, transform_indices = @transform_3, window_bounds = array<i64: 1, 16>}, {pipeline_mode = #tpu.pipeline_mode<synchronous>, transform_indices = @transform_4, window_bounds = array<i64: 1, 16>}, {pipeline_mode = #tpu.pipeline_mode<synchronous>, transform_indices = @transform_5, window_bounds = array<i64: 16, 16>}, {transform_indices = @transform_6, window_bounds = array<i64: 1, 16, 2, 16, 32>}]} {
    %cst = arith.constant 0.000000e+00 : f32
    %0 = vector.broadcast %cst : f32 to vector<1x16xf32>
    %cst_0 = arith.constant 0.000000e+00 : f32
    %1 = vector.broadcast %cst_0 : f32 to vector<1x16xf32>
    %c0 = arith.constant 0 : index
    %c0_1 = arith.constant 0 : index
    %c0_2 = arith.constant 0 : index
    %c0_3 = arith.constant 0 : index
    %2 = vector.load %arg1[%c0, %c0_1, %c0_2, %c0_3] : memref<1x18x18x4xbf16, #tpu.memory_space<vmem>>, vector<1x16x16x4xbf16>
    %3 = vector.shape_cast %2 : vector<1x16x16x4xbf16> to vector<16x16x4xbf16>
    %c0_4 = arith.constant 0 : index
    %c0_5 = arith.constant 0 : index
    %c1 = arith.constant 1 : index
    %c0_6 = arith.constant 0 : index
    %4 = vector.load %arg1[%c0_4, %c0_5, %c1, %c0_6] : memref<1x18x18x4xbf16, #tpu.memory_space<vmem>>, vector<1x16x16x4xbf16>
    %5 = vector.shape_cast %4 : vector<1x16x16x4xbf16> to vector<16x16x4xbf16>
    %c0_7 = arith.constant 0 : index
    %c1_8 = arith.constant 1 : index
    %c0_9 = arith.constant 0 : index
    %c0_10 = arith.constant 0 : index
    %6 = vector.load %arg1[%c0_7, %c1_8, %c0_9, %c0_10] : memref<1x18x18x4xbf16, #tpu.memory_space<vmem>>, vector<1x16x16x4xbf16>
    %7 = vector.shape_cast %6 : vector<1x16x16x4xbf16> to vector<16x16x4xbf16>
    %c0_11 = arith.constant 0 : index
    %c1_12 = arith.constant 1 : index
    %c1_13 = arith.constant 1 : index
    %c0_14 = arith.constant 0 : index
    %8 = vector.load %arg1[%c0_11, %c1_12, %c1_13, %c0_14] : memref<1x18x18x4xbf16, #tpu.memory_space<vmem>>, vector<1x16x16x4xbf16>
    %9 = vector.shape_cast %8 : vector<1x16x16x4xbf16> to vector<16x16x4xbf16>
    %10 = tpu.concatenate %3, %5, %7, %9 in 2 : vector<16x16x4xbf16>, vector<16x16x4xbf16>, vector<16x16x4xbf16>, vector<16x16x4xbf16> -> vector<16x16x16xbf16>
    %11 = vector.shape_cast %10 : vector<16x16x16xbf16> to vector<256x16xbf16>
    %c0_15 = arith.constant 0 : index
    %c0_16 = arith.constant 0 : index
    %c0_17 = arith.constant 0 : index
    %c0_18 = arith.constant 0 : index
    %12 = vector.load %arg2[%c0_15, %c0_16, %c0_17, %c0_18] : memref<2x2x16x16xbf16, #tpu.memory_space<vmem>>, vector<1x1x16x16xbf16>
    %13 = vector.shape_cast %12 : vector<1x1x16x16xbf16> to vector<16x16xbf16>
    %cst_19 = arith.constant dense<0.000000e+00> : vector<256x16xf32>
    %14 = tpu.matmul %11, %13, %cst_19 {dimension_numbers = #tpu.dot_dimension_numbers<[1], [0], [0], [1], [0, 0, 1, 1], [], []>} : vector<256x16xbf16>, vector<16x16xbf16>, vector<256x16xf32> -> vector<256x16xf32>
    %cst_20 = arith.constant dense<0.000000e+00> : vector<16xf32>
    %15 = vector.multi_reduction <add>, %14, %cst_20 [0] : vector<256x16xf32> to vector<16xf32>
    %16 = vector.shape_cast %15 : vector<16xf32> to vector<1x16xf32>
    %17 = arith.addf %0, %16 : vector<1x16xf32>
    %18 = arith.mulf %14, %14 : vector<256x16xf32>
    %cst_21 = arith.constant dense<0.000000e+00> : vector<16xf32>
    %19 = vector.multi_reduction <add>, %18, %cst_21 [0] : vector<256x16xf32> to vector<16xf32>
    %20 = vector.shape_cast %19 : vector<16xf32> to vector<1x16xf32>
    %21 = arith.addf %1, %20 : vector<1x16xf32>
    %c0_22 = arith.constant 0 : index
    %c0_23 = arith.constant 0 : index
    %c2 = arith.constant 2 : index
    %c0_24 = arith.constant 0 : index
    %22 = vector.load %arg1[%c0_22, %c0_23, %c2, %c0_24] : memref<1x18x18x4xbf16, #tpu.memory_space<vmem>>, vector<1x16x16x4xbf16>
    %23 = vector.shape_cast %22 : vector<1x16x16x4xbf16> to vector<16x16x4xbf16>
    %c0_25 = arith.constant 0 : index
    %c1_26 = arith.constant 1 : index
    %c2_27 = arith.constant 2 : index
    %c0_28 = arith.constant 0 : index
    %24 = vector.load %arg1[%c0_25, %c1_26, %c2_27, %c0_28] : memref<1x18x18x4xbf16, #tpu.memory_space<vmem>>, vector<1x16x16x4xbf16>
    %25 = vector.shape_cast %24 : vector<1x16x16x4xbf16> to vector<16x16x4xbf16>
    %26 = tpu.concatenate %5, %23, %9, %25 in 2 : vector<16x16x4xbf16>, vector<16x16x4xbf16>, vector<16x16x4xbf16>, vector<16x16x4xbf16> -> vector<16x16x16xbf16>
    %27 = vector.shape_cast %26 : vector<16x16x16xbf16> to vector<256x16xbf16>
    %c0_29 = arith.constant 0 : index
    %c1_30 = arith.constant 1 : index
    %c0_31 = arith.constant 0 : index
    %c0_32 = arith.constant 0 : index
    %28 = vector.load %arg2[%c0_29, %c1_30, %c0_31, %c0_32] : memref<2x2x16x16xbf16, #tpu.memory_space<vmem>>, vector<1x1x16x16xbf16>
    %29 = vector.shape_cast %28 : vector<1x1x16x16xbf16> to vector<16x16xbf16>
    %cst_33 = arith.constant dense<0.000000e+00> : vector<256x16xf32>
    %30 = tpu.matmul %27, %29, %cst_33 {dimension_numbers = #tpu.dot_dimension_numbers<[1], [0], [0], [1], [0, 0, 1, 1], [], []>} : vector<256x16xbf16>, vector<16x16xbf16>, vector<256x16xf32> -> vector<256x16xf32>
    %cst_34 = arith.constant dense<0.000000e+00> : vector<16xf32>
    %31 = vector.multi_reduction <add>, %30, %cst_34 [0] : vector<256x16xf32> to vector<16xf32>
    %32 = vector.shape_cast %31 : vector<16xf32> to vector<1x16xf32>
    %33 = arith.addf %17, %32 : vector<1x16xf32>
    %34 = arith.mulf %30, %30 : vector<256x16xf32>
    %cst_35 = arith.constant dense<0.000000e+00> : vector<16xf32>
    %35 = vector.multi_reduction <add>, %34, %cst_35 [0] : vector<256x16xf32> to vector<16xf32>
    %36 = vector.shape_cast %35 : vector<16xf32> to vector<1x16xf32>
    %37 = arith.addf %21, %36 : vector<1x16xf32>
    %38 = tpu.concatenate %14, %30 in 1 : vector<256x16xf32>, vector<256x16xf32> -> vector<256x32xf32>
    %39 = vector.shape_cast %38 : vector<256x32xf32> to vector<16x16x32xf32>
    %c0_36 = arith.constant 0 : index
    %c0_37 = arith.constant 0 : index
    %c0_38 = arith.constant 0 : index
    %c0_39 = arith.constant 0 : index
    %c0_40 = arith.constant 0 : index
    %40 = vector.load %arg7[%c0_36, %c0_37, %c0_38, %c0_39, %c0_40] : memref<1x16x2x16x32xf32, #tpu.memory_space<vmem>>, vector<1x16x1x16x32xf32>
    %41 = vector.shape_cast %40 : vector<1x16x1x16x32xf32> to vector<16x16x32xf32>
    %42 = vector.shape_cast %39 : vector<16x16x32xf32> to vector<1x16x1x16x32xf32>
    tpu.vector_store %arg7[%c0_36, %c0_37, %c0_38, %c0_39, %c0_40], %42 {strides = array<i32>} : memref<1x16x2x16x32xf32, #tpu.memory_space<vmem>>, vector<1x16x1x16x32xf32>,
    %c0_41 = arith.constant 0 : index
    %c2_42 = arith.constant 2 : index
    %c0_43 = arith.constant 0 : index
    %c0_44 = arith.constant 0 : index
    %43 = vector.load %arg1[%c0_41, %c2_42, %c0_43, %c0_44] : memref<1x18x18x4xbf16, #tpu.memory_space<vmem>>, vector<1x16x16x4xbf16>
    %44 = vector.shape_cast %43 : vector<1x16x16x4xbf16> to vector<16x16x4xbf16>
    %c0_45 = arith.constant 0 : index
    %c2_46 = arith.constant 2 : index
    %c1_47 = arith.constant 1 : index
    %c0_48 = arith.constant 0 : index
    %45 = vector.load %arg1[%c0_45, %c2_46, %c1_47, %c0_48] : memref<1x18x18x4xbf16, #tpu.memory_space<vmem>>, vector<1x16x16x4xbf16>
    %46 = vector.shape_cast %45 : vector<1x16x16x4xbf16> to vector<16x16x4xbf16>
    %47 = tpu.concatenate %7, %9, %44, %46 in 2 : vector<16x16x4xbf16>, vector<16x16x4xbf16>, vector<16x16x4xbf16>, vector<16x16x4xbf16> -> vector<16x16x16xbf16>
    %48 = vector.shape_cast %47 : vector<16x16x16xbf16> to vector<256x16xbf16>
    %c1_49 = arith.constant 1 : index
    %c0_50 = arith.constant 0 : index
    %c0_51 = arith.constant 0 : index
    %c0_52 = arith.constant 0 : index
    %49 = vector.load %arg2[%c1_49, %c0_50, %c0_51, %c0_52] : memref<2x2x16x16xbf16, #tpu.memory_space<vmem>>, vector<1x1x16x16xbf16>
    %50 = vector.shape_cast %49 : vector<1x1x16x16xbf16> to vector<16x16xbf16>
    %cst_53 = arith.constant dense<0.000000e+00> : vector<256x16xf32>
    %51 = tpu.matmul %48, %50, %cst_53 {dimension_numbers = #tpu.dot_dimension_numbers<[1], [0], [0], [1], [0, 0, 1, 1], [], []>} : vector<256x16xbf16>, vector<16x16xbf16>, vector<256x16xf32> -> vector<256x16xf32>
    %cst_54 = arith.constant dense<0.000000e+00> : vector<16xf32>
    %52 = vector.multi_reduction <add>, %51, %cst_54 [0] : vector<256x16xf32> to vector<16xf32>
    %53 = vector.shape_cast %52 : vector<16xf32> to vector<1x16xf32>
    %54 = arith.addf %33, %53 : vector<1x16xf32>
    %55 = arith.mulf %51, %51 : vector<256x16xf32>
    %cst_55 = arith.constant dense<0.000000e+00> : vector<16xf32>
    %56 = vector.multi_reduction <add>, %55, %cst_55 [0] : vector<256x16xf32> to vector<16xf32>
    %57 = vector.shape_cast %56 : vector<16xf32> to vector<1x16xf32>
    %58 = arith.addf %37, %57 : vector<1x16xf32>
    %c0_56 = arith.constant 0 : index
    %c2_57 = arith.constant 2 : index
    %c2_58 = arith.constant 2 : index
    %c0_59 = arith.constant 0 : index
    %59 = vector.load %arg1[%c0_56, %c2_57, %c2_58, %c0_59] : memref<1x18x18x4xbf16, #tpu.memory_space<vmem>>, vector<1x16x16x4xbf16>
    %60 = vector.shape_cast %59 : vector<1x16x16x4xbf16> to vector<16x16x4xbf16>
    %61 = tpu.concatenate %9, %25, %46, %60 in 2 : vector<16x16x4xbf16>, vector<16x16x4xbf16>, vector<16x16x4xbf16>, vector<16x16x4xbf16> -> vector<16x16x16xbf16>
    %62 = vector.shape_cast %61 : vector<16x16x16xbf16> to vector<256x16xbf16>
    %c1_60 = arith.constant 1 : index
    %c1_61 = arith.constant 1 : index
    %c0_62 = arith.constant 0 : index
    %c0_63 = arith.constant 0 : index
    %63 = vector.load %arg2[%c1_60, %c1_61, %c0_62, %c0_63] : memref<2x2x16x16xbf16, #tpu.memory_space<vmem>>, vector<1x1x16x16xbf16>
    %64 = vector.shape_cast %63 : vector<1x1x16x16xbf16> to vector<16x16xbf16>
    %cst_64 = arith.constant dense<0.000000e+00> : vector<256x16xf32>
    %65 = tpu.matmul %62, %64, %cst_64 {dimension_numbers = #tpu.dot_dimension_numbers<[1], [0], [0], [1], [0, 0, 1, 1], [], []>} : vector<256x16xbf16>, vector<16x16xbf16>, vector<256x16xf32> -> vector<256x16xf32>
    %cst_65 = arith.constant dense<0.000000e+00> : vector<16xf32>
    %66 = vector.multi_reduction <add>, %65, %cst_65 [0] : vector<256x16xf32> to vector<16xf32>
    %67 = vector.shape_cast %66 : vector<16xf32> to vector<1x16xf32>
    %68 = arith.addf %54, %67 : vector<1x16xf32>
    %69 = arith.mulf %65, %65 : vector<256x16xf32>
    %cst_66 = arith.constant dense<0.000000e+00> : vector<16xf32>
    %70 = vector.multi_reduction <add>, %69, %cst_66 [0] : vector<256x16xf32> to vector<16xf32>
    %71 = vector.shape_cast %70 : vector<16xf32> to vector<1x16xf32>
    %72 = arith.addf %58, %71 : vector<1x16xf32>
    %73 = tpu.concatenate %51, %65 in 1 : vector<256x16xf32>, vector<256x16xf32> -> vector<256x32xf32>
    %74 = vector.shape_cast %73 : vector<256x32xf32> to vector<16x16x32xf32>
    %c0_67 = arith.constant 0 : index
    %c0_68 = arith.constant 0 : index
    %c1_69 = arith.constant 1 : index
    %c0_70 = arith.constant 0 : index
    %c0_71 = arith.constant 0 : index
    %75 = vector.load %arg7[%c0_67, %c0_68, %c1_69, %c0_70, %c0_71] : memref<1x16x2x16x32xf32, #tpu.memory_space<vmem>>, vector<1x16x1x16x32xf32>
    %76 = vector.shape_cast %75 : vector<1x16x1x16x32xf32> to vector<16x16x32xf32>
    %77 = vector.shape_cast %74 : vector<16x16x32xf32> to vector<1x16x1x16x32xf32>
    tpu.vector_store %arg7[%c0_67, %c0_68, %c1_69, %c0_70, %c0_71], %77 {strides = array<i32>} : memref<1x16x2x16x32xf32, #tpu.memory_space<vmem>>, vector<1x16x1x16x32xf32>,
    %c0_72 = arith.constant 0 : index
    %c0_73 = arith.constant 0 : index
    %78 = vector.load %arg3[%c0_72, %c0_73] : memref<1x16xf32, #tpu.memory_space<vmem>>, vector<1x16xf32>
    %cst_74 = arith.constant 1.024000e+03 : f32
    %79 = vector.broadcast %cst_74 : f32 to vector<1x16xf32>
    %80 = arith.mulf %79, %78 : vector<1x16xf32>
    %81 = arith.addf %68, %80 : vector<1x16xf32>
    %cst_75 = arith.constant 2.000000e+00 : f32
    %82 = vector.broadcast %cst_75 : f32 to vector<1x16xf32>
    %83 = arith.mulf %82, %78 : vector<1x16xf32>
    %84 = arith.mulf %83, %68 : vector<1x16xf32>
    %85 = arith.addf %72, %84 : vector<1x16xf32>
    %cst_76 = arith.constant 1.024000e+03 : f32
    %86 = vector.broadcast %cst_76 : f32 to vector<1x16xf32>
    %87 = arith.mulf %86, %78 : vector<1x16xf32>
    %88 = arith.mulf %87, %78 : vector<1x16xf32>
    %89 = arith.addf %85, %88 : vector<1x16xf32>
    %c0_77 = arith.constant 0 : index
    %c0_78 = arith.constant 0 : index
    %90 = vector.load %arg6[%c0_77, %c0_78] : memref<16x16xf32, #tpu.memory_space<vmem>>, vector<16x16xf32>
    %cst_79 = arith.constant dense<0.000000e+00> : vector<1x16xf32>
    %91 = tpu.matmul %81, %90, %cst_79 {dimension_numbers = #tpu.dot_dimension_numbers<[1], [0], [0], [1], [0, 0, 1, 1], [], []>} : vector<1x16xf32>, vector<16x16xf32>, vector<1x16xf32> -> vector<1x16xf32>
    %c0_80 = arith.constant 0 : index
    %c0_81 = arith.constant 0 : index
    %92 = vector.load %arg6[%c0_80, %c0_81] : memref<16x16xf32, #tpu.memory_space<vmem>>, vector<16x16xf32>
    %cst_82 = arith.constant dense<0.000000e+00> : vector<1x16xf32>
    %93 = tpu.matmul %89, %92, %cst_82 {dimension_numbers = #tpu.dot_dimension_numbers<[1], [0], [0], [1], [0, 0, 1, 1], [], []>} : vector<1x16xf32>, vector<16x16xf32>, vector<1x16xf32> -> vector<1x16xf32>
    %cst_83 = arith.constant 1.22070313E-4 : f32
    %94 = vector.broadcast %cst_83 : f32 to vector<1x16xf32>
    %95 = arith.mulf %91, %94 : vector<1x16xf32>
    %cst_84 = arith.constant 1.22070313E-4 : f32
    %96 = vector.broadcast %cst_84 : f32 to vector<1x16xf32>
    %97 = arith.mulf %93, %96 : vector<1x16xf32>
    %98 = arith.mulf %95, %95 : vector<1x16xf32>
    %99 = arith.subf %97, %98 : vector<1x16xf32>
    %c0_85 = arith.constant 0 : index
    %c0_86 = arith.constant 0 : index
    %100 = vector.load %arg4[%c0_85, %c0_86] : memref<1x16xf32, #tpu.memory_space<vmem>>, vector<1x16xf32>
    %cst_87 = arith.constant 9.99999974E-6 : f32
    %101 = vector.broadcast %cst_87 : f32 to vector<1x16xf32>
    %102 = arith.addf %99, %101 : vector<1x16xf32>
    %103 = math.rsqrt %102 : vector<1x16xf32>
    %104 = arith.mulf %100, %103 : vector<1x16xf32>
    %c0_88 = arith.constant 0 : index
    %c0_89 = arith.constant 0 : index
    %105 = vector.load %arg5[%c0_88, %c0_89] : memref<1x16xf32, #tpu.memory_space<vmem>>, vector<1x16xf32>
    %106 = arith.subf %78, %95 : vector<1x16xf32>
    %107 = arith.mulf %106, %104 : vector<1x16xf32>
    %108 = arith.addf %105, %107 : vector<1x16xf32>
    %109 = tpu.concatenate %104, %104 in 1 : vector<1x16xf32>, vector<1x16xf32> -> vector<1x32xf32>
    %110 = tpu.concatenate %108, %108 in 1 : vector<1x16xf32>, vector<1x16xf32> -> vector<1x32xf32>
    %c0_90 = arith.constant 0 : index
    %c0_91 = arith.constant 0 : index
    %c0_92 = arith.constant 0 : index
    %c0_93 = arith.constant 0 : index
    %c0_94 = arith.constant 0 : index
    %111 = vector.load %arg7[%c0_90, %c0_91, %c0_92, %c0_93, %c0_94] : memref<1x16x2x16x32xf32, #tpu.memory_space<vmem>>, vector<1x16x1x16x32xf32>
    %112 = vector.shape_cast %111 : vector<1x16x1x16x32xf32> to vector<16x16x32xf32>
    %113 = vector.shape_cast %109 : vector<1x32xf32> to vector<1x1x32xf32>
    %114 = vector.broadcast %113 : vector<1x1x32xf32> to vector<16x16x32xf32>
    %115 = arith.mulf %112, %114 : vector<16x16x32xf32>
    %116 = vector.shape_cast %110 : vector<1x32xf32> to vector<1x1x32xf32>
    %117 = vector.broadcast %116 : vector<1x1x32xf32> to vector<16x16x32xf32>
    %118 = arith.addf %115, %117 : vector<16x16x32xf32>
    %119 = arith.negf %118 : vector<16x16x32xf32>
    %120 = math.exp %119 : vector<16x16x32xf32>
    %cst_95 = arith.constant 1.000000e+00 : f32
    %121 = vector.broadcast %cst_95 : f32 to vector<16x16x32xf32>
    %122 = arith.addf %121, %120 : vector<16x16x32xf32>
    %123 = arith.divf %121, %122 : vector<16x16x32xf32>
    %124 = arith.mulf %118, %123 : vector<16x16x32xf32>
    %c0_96 = arith.constant 0 : index
    %c0_97 = arith.constant 0 : index
    %c0_98 = arith.constant 0 : index
    %c0_99 = arith.constant 0 : index
    %c0_100 = arith.constant 0 : index
    %125 = vector.load %arg7[%c0_96, %c0_97, %c0_98, %c0_99, %c0_100] : memref<1x16x2x16x32xf32, #tpu.memory_space<vmem>>, vector<1x16x1x16x32xf32>
    %126 = vector.shape_cast %125 : vector<1x16x1x16x32xf32> to vector<16x16x32xf32>
    %127 = vector.shape_cast %124 : vector<16x16x32xf32> to vector<1x16x1x16x32xf32>
    tpu.vector_store %arg7[%c0_96, %c0_97, %c0_98, %c0_99, %c0_100], %127 {strides = array<i32>} : memref<1x16x2x16x32xf32, #tpu.memory_space<vmem>>, vector<1x16x1x16x32xf32>,
    %c0_101 = arith.constant 0 : index
    %c0_102 = arith.constant 0 : index
    %c1_103 = arith.constant 1 : index
    %c0_104 = arith.constant 0 : index
    %c0_105 = arith.constant 0 : index
    %128 = vector.load %arg7[%c0_101, %c0_102, %c1_103, %c0_104, %c0_105] : memref<1x16x2x16x32xf32, #tpu.memory_space<vmem>>, vector<1x16x1x16x32xf32>
    %129 = vector.shape_cast %128 : vector<1x16x1x16x32xf32> to vector<16x16x32xf32>
    %130 = vector.shape_cast %109 : vector<1x32xf32> to vector<1x1x32xf32>
    %131 = vector.broadcast %130 : vector<1x1x32xf32> to vector<16x16x32xf32>
    %132 = arith.mulf %129, %131 : vector<16x16x32xf32>
    %133 = vector.shape_cast %110 : vector<1x32xf32> to vector<1x1x32xf32>
    %134 = vector.broadcast %133 : vector<1x1x32xf32> to vector<16x16x32xf32>
    %135 = arith.addf %132, %134 : vector<16x16x32xf32>
    %136 = arith.negf %135 : vector<16x16x32xf32>
    %137 = math.exp %136 : vector<16x16x32xf32>
    %cst_106 = arith.constant 1.000000e+00 : f32
    %138 = vector.broadcast %cst_106 : f32 to vector<16x16x32xf32>
    %139 = arith.addf %138, %137 : vector<16x16x32xf32>
    %140 = arith.divf %138, %139 : vector<16x16x32xf32>
    %141 = arith.mulf %135, %140 : vector<16x16x32xf32>
    %c0_107 = arith.constant 0 : index
    %c0_108 = arith.constant 0 : index
    %c1_109 = arith.constant 1 : index
    %c0_110 = arith.constant 0 : index
    %c0_111 = arith.constant 0 : index
    %142 = vector.load %arg7[%c0_107, %c0_108, %c1_109, %c0_110, %c0_111] : memref<1x16x2x16x32xf32, #tpu.memory_space<vmem>>, vector<1x16x1x16x32xf32>
    %143 = vector.shape_cast %142 : vector<1x16x1x16x32xf32> to vector<16x16x32xf32>
    %144 = vector.shape_cast %141 : vector<16x16x32xf32> to vector<1x16x1x16x32xf32>
    tpu.vector_store %arg7[%c0_107, %c0_108, %c1_109, %c0_110, %c0_111], %144 {strides = array<i32>} : memref<1x16x2x16x32xf32, #tpu.memory_space<vmem>>, vector<1x16x1x16x32xf32>,
    return
  }
  func.func @transform_0(%arg0: i32) -> (i32, i32, i32, i32) {
    %c0_i32 = arith.constant 0 : i32
    %c0_i32_0 = arith.constant 0 : i32
    %c0_i32_1 = arith.constant 0 : i32
    %c0_i32_2 = arith.constant 0 : i32
    return %arg0, %c0_i32, %c0_i32_0, %c0_i32_1 : i32, i32, i32, i32
  }
  func.func @transform_1(%arg0: i32) -> (i32, i32, i32, i32) {
    %c0_i32 = arith.constant 0 : i32
    %c0_i32_0 = arith.constant 0 : i32
    %c0_i32_1 = arith.constant 0 : i32
    %c0_i32_2 = arith.constant 0 : i32
    %c0_i32_3 = arith.constant 0 : i32
    return %c0_i32, %c0_i32_0, %c0_i32_1, %c0_i32_2 : i32, i32, i32, i32
  }
  func.func @transform_2(%arg0: i32) -> (i32, i32) {
    %c0_i32 = arith.constant 0 : i32
    %c0_i32_0 = arith.constant 0 : i32
    %c0_i32_1 = arith.constant 0 : i32
    return %c0_i32, %c0_i32_0 : i32, i32
  }
  func.func @transform_3(%arg0: i32) -> (i32, i32) {
    %c0_i32 = arith.constant 0 : i32
    %c0_i32_0 = arith.constant 0 : i32
    %c0_i32_1 = arith.constant 0 : i32
    return %c0_i32, %c0_i32_0 : i32, i32
  }
  func.func @transform_4(%arg0: i32) -> (i32, i32) {
    %c0_i32 = arith.constant 0 : i32
    %c0_i32_0 = arith.constant 0 : i32
    %c0_i32_1 = arith.constant 0 : i32
    return %c0_i32, %c0_i32_0 : i32, i32
  }
  func.func @transform_5(%arg0: i32) -> (i32, i32) {
    %c0_i32 = arith.constant 0 : i32
    %c0_i32_0 = arith.constant 0 : i32
    %c0_i32_1 = arith.constant 0 : i32
    return %c0_i32, %c0_i32_0 : i32, i32
  }
  func.func @transform_6(%arg0: i32) -> (i32, i32, i32, i32, i32) {
    %c0_i32 = arith.constant 0 : i32
    %c0_i32_0 = arith.constant 0 : i32
    %c0_i32_1 = arith.constant 0 : i32
    %c0_i32_2 = arith.constant 0 : i32
    %c0_i32_3 = arith.constant 0 : i32
    return %arg0, %c0_i32, %c0_i32_0, %c0_i32_1, %c0_i32_2 : i32, i32, i32, i32, i32
  }
}

</mosaic_0001>

<llo_original>
// kernel: tpu_custom_call.1
$region0: #{tpu_custom_call.1}
  #allocation0 [shape = 'u32[]', space=smem, size = 0x4, offset = 0x4, fixed_abs, tag = 'smem constant byte address 0x4 - core index']
  #allocation1 [shape = 'u32[144,128]{1,0:T(1,128)}', space=vmem, size = 0x12000, scoped, tag = 'internal scratch']
  %s0 = inlined_call_operand.vmem [shape: bf16[2,18,18,4], index: 0, kind: input, shape index: {}]
  %s1 = inlined_call_operand.vmem [shape: bf16[2,2,16,16], index: 1, kind: input, shape index: {}]
  %s2 = inlined_call_operand.vmem [shape: f32[1,16], index: 2, kind: input, shape index: {}]
  %s3 = inlined_call_operand.vmem [shape: f32[1,16], index: 3, kind: input, shape index: {}]
  %s4 = inlined_call_operand.vmem [shape: f32[1,16], index: 4, kind: input, shape index: {}]
  %s5 = inlined_call_operand.vmem [shape: f32[16,16], index: 5, kind: input, shape index: {}]
  %s6 = inlined_call_operand.hbm [shape: f32[2,16,2,16,32], index: 6, kind: output, shape index: {}]
  %s7 = sld [smem:[#allocation0]]
  $region57: #{tpu_custom_call.1} parent=0
    _
  %s9 = ssub.s32 1, %s7
  %s10 = scalar_select 0, %s9, %s7
  $region1: #{tpu_custom_call.1} parent=0
    #allocation2 [shape = 'u8[524288]{0}', space=vmem, size = 0x80000, scoped, tag = 'output window, operand 0']
    #allocation3 [shape = 's32[2]{0}', space=sflag, size = 0x8, scoped, tag = 'scoped memory for tpu_custom_call.1']
    %11 = vsyncpa [#allocation3], 0
    %s12 = scalar_lea.sflag [#allocation3], 1
    %13 = vsyncpa %s12, 0
    loop: start=0, step=1, limit=4
    $region2: #{tpu_custom_call.1} parent=1 // loop_pre_header
      _
    $region3: #{tpu_custom_call.1} parent=1 // loop_header
      %s15 = sphi 0, %s19
      %p16 = scmp.ge.s32.totalorder %s15, 4
      %s25 = sphi 0, %s27
      %s28 = sphi 0, %s25
      %s29 = sphi 0, %s28
      %s45 = sphi 0, %s29
      %s49 = sphi 0, %s49
      %s51 = sphi 0, %s49
      %s52 = sphi 0, %s51
      %s66 = sphi 0, %s52
      %s70 = sphi 0, %s70
      %s72 = sphi 0, %s70
      %s73 = sphi 0, %s72
      %s87 = sphi 0, %s73
      %s91 = sphi 0, %s91
      %s93 = sphi 0, %s91
      %s94 = sphi 0, %s93
      %s108 = sphi 0, %s94
      %s112 = sphi 0, %s112
      %s114 = sphi 0, %s112
      %s115 = sphi 0, %s114
      %s129 = sphi 0, %s115
      %s133 = sphi 0, %s133
      %s135 = sphi 0, %s133
      %s136 = sphi 0, %s135
      %s150 = sphi 0, %s136
      %s156 = sphi 0, %s158
      %s159 = sphi 0, %s156
      %s160 = sphi 0, %s159
      %s176 = sphi 0, %s160
    $region4: #{tpu_custom_call.1} parent=1 // loop_header_branch
      %18 = sbr.rel (%p16) target = $region8
    $region5: #{tpu_custom_call.1} parent=1 // loop_body
      %s20 = ssub.s32 %s15, 1
      %s21 = ssub.s32 %s15, 2
      %s22 = sadd.s32 %s15, 1
      %s23 = ssub.s32 %s15, %s22
      %p24 = scmp.eq.s32.totalorder %s23, 0
      %s26 = sadd.s32 %s25, 1
      %s27 = scalar_select %p24, %s25, %s26
      %p30 = pneg %p24
      %p31 = scmp.eq.s32.totalorder %s15, 1
      %p32 = por %p30, %p31
      %p33 = scmp.ne.s32.totalorder %s25, %s28
      %p34 = scmp.eq.s32.totalorder %s15, 0
      %p35 = por %p33, %p34
      %p36 = scmp.ne.s32.totalorder %s25, %s28
      %p37 = scmp.eq.s32.totalorder %s20, 1
      %p38 = por %p36, %p37
      %p39 = scmp.ne.s32.totalorder %s28, %s29
      %p40 = scmp.eq.s32.totalorder %s20, 0
      %p41 = por %p39, %p40
      %p42 = scmp.ne.s32.totalorder %s28, %s29
      %p43 = scmp.eq.s32.totalorder %s21, 1
      %p44 = por %p42, %p43
      %p46 = scmp.ne.s32.totalorder %s29, %s45
      %p47 = scmp.eq.s32.totalorder %s21, 0
      %p48 = por %p46, %p47
      %s50 = sadd.s32 %s49, 1
      %p53 = scmp.eq.s32.totalorder %s15, 1
      %p54 = scmp.ne.s32.totalorder %s49, %s51
      %p55 = scmp.eq.s32.totalorder %s15, 0
      %p56 = por %p54, %p55
      %p57 = scmp.ne.s32.totalorder %s49, %s51
      %p58 = scmp.eq.s32.totalorder %s20, 1
      %p59 = por %p57, %p58
      %p60 = scmp.ne.s32.totalorder %s51, %s52
      %p61 = scmp.eq.s32.totalorder %s20, 0
      %p62 = por %p60, %p61
      %p63 = scmp.ne.s32.totalorder %s51, %s52
      %p64 = scmp.eq.s32.totalorder %s21, 1
      %p65 = por %p63, %p64
      %p67 = scmp.ne.s32.totalorder %s52, %s66
      %p68 = scmp.eq.s32.totalorder %s21, 0
      %p69 = por %p67, %p68
      %s71 = sadd.s32 %s70, 1
      %p74 = scmp.eq.s32.totalorder %s15, 1
      %p75 = scmp.ne.s32.totalorder %s70, %s72
      %p76 = scmp.eq.s32.totalorder %s15, 0
      %p77 = por %p75, %p76
      %p78 = scmp.ne.s32.totalorder %s70, %s72
      %p79 = scmp.eq.s32.totalorder %s20, 1
      %p80 = por %p78, %p79
      %p81 = scmp.ne.s32.totalorder %s72, %s73
      %p82 = scmp.eq.s32.totalorder %s20, 0
      %p83 = por %p81, %p82
      %p84 = scmp.ne.s32.totalorder %s72, %s73
      %p85 = scmp.eq.s32.totalorder %s21, 1
      %p86 = por %p84, %p85
      %p88 = scmp.ne.s32.totalorder %s73, %s87
      %p89 = scmp.eq.s32.totalorder %s21, 0
      %p90 = por %p88, %p89
      %s92 = sadd.s32 %s91, 1
      %p95 = scmp.eq.s32.totalorder %s15, 1
      %p96 = scmp.ne.s32.totalorder %s91, %s93
      %p97 = scmp.eq.s32.totalorder %s15, 0
      %p98 = por %p96, %p97
      %p99 = scmp.ne.s32.totalorder %s91, %s93
      %p100 = scmp.eq.s32.totalorder %s20, 1
      %p101 = por %p99, %p100
      %p102 = scmp.ne.s32.totalorder %s93, %s94
      %p103 = scmp.eq.s32.totalorder %s20, 0
      %p104 = por %p102, %p103
      %p105 = scmp.ne.s32.totalorder %s93, %s94
      %p106 = scmp.eq.s32.totalorder %s21, 1
      %p107 = por %p105, %p106
      %p109 = scmp.ne.s32.totalorder %s94, %s108
      %p110 = scmp.eq.s32.totalorder %s21, 0
      %p111 = por %p109, %p110
      %s113 = sadd.s32 %s112, 1
      %p116 = scmp.eq.s32.totalorder %s15, 1
      %p117 = scmp.ne.s32.totalorder %s112, %s114
      %p118 = scmp.eq.s32.totalorder %s15, 0
      %p119 = por %p117, %p118
      %p120 = scmp.ne.s32.totalorder %s112, %s114
      %p121 = scmp.eq.s32.totalorder %s20, 1
      %p122 = por %p120, %p121
      %p123 = scmp.ne.s32.totalorder %s114, %s115
      %p124 = scmp.eq.s32.totalorder %s20, 0
      %p125 = por %p123, %p124
      %p126 = scmp.ne.s32.totalorder %s114, %s115
      %p127 = scmp.eq.s32.totalorder %s21, 1
      %p128 = por %p126, %p127
      %p130 = scmp.ne.s32.totalorder %s115, %s129
      %p131 = scmp.eq.s32.totalorder %s21, 0
      %p132 = por %p130, %p131
      %s134 = sadd.s32 %s133, 1
      %p137 = scmp.eq.s32.totalorder %s15, 1
      %p138 = scmp.ne.s32.totalorder %s133, %s135
      %p139 = scmp.eq.s32.totalorder %s15, 0
      %p140 = por %p138, %p139
      %p141 = scmp.ne.s32.totalorder %s133, %s135
      %p142 = scmp.eq.s32.totalorder %s20, 1
      %p143 = por %p141, %p142
      %p144 = scmp.ne.s32.totalorder %s135, %s136
      %p145 = scmp.eq.s32.totalorder %s20, 0
      %p146 = por %p144, %p145
      %p147 = scmp.ne.s32.totalorder %s135, %s136
      %p148 = scmp.eq.s32.totalorder %s21, 1
      %p149 = por %p147, %p148
      %p151 = scmp.ne.s32.totalorder %s136, %s150
      %p152 = scmp.eq.s32.totalorder %s21, 0
      %p153 = por %p151, %p152
      %s154 = ssub.s32 %s15, %s22
      %p155 = scmp.eq.s32.totalorder %s154, 0
      %s157 = sadd.s32 %s156, 1
      %s158 = scalar_select %p155, %s156, %s157
      %p161 = pneg %p155
      %p162 = scmp.eq.s32.totalorder %s15, 1
      %p163 = por %p161, %p162
      %p164 = scmp.ne.s32.totalorder %s156, %s159
      %p165 = scmp.eq.s32.totalorder %s15, 0
      %p166 = por %p164, %p165
      %p167 = scmp.ne.s32.totalorder %s156, %s159
      %p168 = scmp.eq.s32.totalorder %s20, 1
      %p169 = por %p167, %p168
      %p170 = scmp.ne.s32.totalorder %s159, %s160
      %p171 = scmp.eq.s32.totalorder %s20, 0
      %p172 = por %p170, %p171
      %p173 = scmp.ne.s32.totalorder %s159, %s160
      %p174 = scmp.eq.s32.totalorder %s21, 1
      %p175 = por %p173, %p174
      %p177 = scmp.ne.s32.totalorder %s160, %s176
      %p178 = scmp.eq.s32.totalorder %s21, 0
      %p179 = por %p177, %p178
      %p180 = scmp.le.s32.totalorder 1, %s15
      %p181 = scmp.lt.s32.totalorder %s15, 3
      %p182 = pnand %p180, %p181
      %p183 = pneg %p182
      // Predicated region
      $region9: #{tpu_custom_call.1} parent=5 // pred_check
        _
      $region10: #{tpu_custom_call.1} parent=5 // pred_check_branch
        %185 = sbr.rel (%p182) target = $region12
      $region11: #{tpu_custom_call.1} parent=5 // pred_region
        %s186 = ssub.s32 %s15, 1
        // Predicated region
        $region13: #{tpu_custom_call.1} parent=11 // pred_check
          %p187 = pneg %p62
        $region14: #{tpu_custom_call.1} parent=11 // pred_check_branch
          %189 = sbr.rel (%p187) target = $region16
        $region15: #{tpu_custom_call.1} parent=11 // pred_region
          _
        $region16: #{tpu_custom_call.1} parent=11 // pred_fallthru
          _
        // Predicated region
        $region17: #{tpu_custom_call.1} parent=11 // pred_check
          %p190 = pneg %p83
        $region18: #{tpu_custom_call.1} parent=11 // pred_check_branch
          %192 = sbr.rel (%p190) target = $region20
        $region19: #{tpu_custom_call.1} parent=11 // pred_region
          _
        $region20: #{tpu_custom_call.1} parent=11 // pred_fallthru
          _
        // Predicated region
        $region21: #{tpu_custom_call.1} parent=11 // pred_check
          %p193 = pneg %p104
        $region22: #{tpu_custom_call.1} parent=11 // pred_check_branch
          %195 = sbr.rel (%p193) target = $region24
        $region23: #{tpu_custom_call.1} parent=11 // pred_region
          _
        $region24: #{tpu_custom_call.1} parent=11 // pred_fallthru
          _
        // Predicated region
        $region25: #{tpu_custom_call.1} parent=11 // pred_check
          %p196 = pneg %p125
        $region26: #{tpu_custom_call.1} parent=11 // pred_check_branch
          %198 = sbr.rel (%p196) target = $region28
        $region27: #{tpu_custom_call.1} parent=11 // pred_region
          _
        $region28: #{tpu_custom_call.1} parent=11 // pred_fallthru
          _
        // Predicated region
        $region29: #{tpu_custom_call.1} parent=11 // pred_check
          %p199 = pneg %p146
        $region30: #{tpu_custom_call.1} parent=11 // pred_check_branch
          %201 = sbr.rel (%p199) target = $region32
        $region31: #{tpu_custom_call.1} parent=11 // pred_region
          _
        $region32: #{tpu_custom_call.1} parent=11 // pred_fallthru
          _
      $region12: #{tpu_custom_call.1} parent=5 // pred_fallthru
        _
      %p202 = scmp.lt.s32.totalorder %s15, 2
      // Predicated region
      $region33: #{tpu_custom_call.1} parent=5 // pred_check
        %p203 = pneg %p202
      $region34: #{tpu_custom_call.1} parent=5 // pred_check_branch
        %205 = sbr.rel (%p203) target = $region36
      $region35: #{tpu_custom_call.1} parent=5 // pred_region
        // Predicated region
        $region37: #{tpu_custom_call.1} parent=35 // pred_check
          %p206 = pneg %p35
        $region38: #{tpu_custom_call.1} parent=35 // pred_check_branch
          %208 = sbr.rel (%p206) target = $region40
        $region39: #{tpu_custom_call.1} parent=35 // pred_region
          %p209 = scmp.lt.s32.totalorder %s15, 1
          %s210 = scalar_select %p209, %s15, 1
          %s211 = smul.addr %s210, 54
          %s212 = smul.addr %s211, 4
          %s213 = scalar_lea.vmem %s0, %s212
        $region40: #{tpu_custom_call.1} parent=35 // pred_fallthru
          _
      $region36: #{tpu_custom_call.1} parent=5 // pred_fallthru
        _
      %p214 = scmp.le.s32.totalorder 1, %s15
      %p215 = scmp.lt.s32.totalorder %s15, 3
      %p216 = pnand %p214, %p215
      %p217 = pneg %p216
      // Predicated region
      $region41: #{tpu_custom_call.1} parent=5 // pred_check
        _
      $region42: #{tpu_custom_call.1} parent=5 // pred_check_branch
        %219 = sbr.rel (%p216) target = $region44
      $region43: #{tpu_custom_call.1} parent=5 // pred_region
        %s220 = ssub.s32 %s15, 1
        %p221 = scmp.lt.s32.totalorder %s20, 1
        %s222 = scalar_select %p221, %s20, 1
        %s223 = smul.addr %s222, 54
        %s224 = smul.addr %s223, 4
        %s225 = scalar_lea.vmem %s0, %s224
        %p226 = pneg %p41
        %p227 = pneg %p38
        %p228 = pneg %p62
        %p229 = pneg %p59
        %p230 = pneg %p83
        %p231 = pneg %p80
        %p232 = pneg %p104
        %p233 = pneg %p101
        %p234 = pneg %p125
        %p235 = pneg %p122
        %p236 = pneg %p146
        %p237 = pneg %p143
        %p238 = pneg %p172
        %p239 = pneg %p169
        %s240 = sand.u32 %s159, 1
        %s241 = scalar_lea.sflag [#allocation3], %s240
        %s242 = sand.u32 %s159, 1
        %s243 = smul.addr %s242, 512
        %s244 = scalar_lea.vmem [#allocation2], %s243
        %p245 = scmp.lt.s32.totalorder %s20, 1
        %s246 = scalar_select %p245, %s20, 1
        %s247 = smul.addr %s246, 54
        %s248 = smul.addr %s247, 4
        %s249 = scalar_lea.vmem %s0, %s248
        %v251 = vld [vmem:[%s249] sm:$0xf]
        %v252 = vld [vmem:[%s249 + $0x4] sm:$0xf]
        %v253 = vld [vmem:[%s249 + $0xc] sm:$0xf]
        %v254 = vld [vmem:[%s249 + $0x10] sm:$0xf]
        %v255 = vld [vmem:[%s249 + $0x18] sm:$0xf]
        %v256 = vld [vmem:[%s249 + $0x1c] sm:$0xf]
        %v257 = vld [vmem:[%s249 + $0x24] sm:$0xf]
        %v258 = vld [vmem:[%s249 + $0x28] sm:$0xf]
        %v259 = vld [vmem:[%s249 + $0x30] sm:$0xf]
        %v260 = vld [vmem:[%s249 + $0x34] sm:$0xf]
        %v261 = vld [vmem:[%s249 + $0x3c] sm:$0xf]
        %v262 = vld [vmem:[%s249 + $0x40] sm:$0xf]
        %v263 = vld [vmem:[%s249 + $0x48] sm:$0xf]
        %v264 = vld [vmem:[%s249 + $0x4c] sm:$0xf]
        %v265 = vld [vmem:[%s249 + $0x54] sm:$0xf]
        %v266 = vld [vmem:[%s249 + $0x58] sm:$0xf]
        %v267 = vld [vmem:[%s249 + $0x60] sm:$0xf]
        %v268 = vld [vmem:[%s249 + $0x64] sm:$0xf]
        %v269 = vld [vmem:[%s249 + $0x6c] sm:$0xf]
        %v270 = vld [vmem:[%s249 + $0x70] sm:$0xf]
        %v271 = vld [vmem:[%s249 + $0x78] sm:$0xf]
        %v272 = vld [vmem:[%s249 + $0x7c] sm:$0xf]
        %v273 = vld [vmem:[%s249 + $0x84] sm:$0xf]
        %v274 = vld [vmem:[%s249 + $0x88] sm:$0xf]
        %v275 = vld [vmem:[%s249 + $0x90] sm:$0xf]
        %v276 = vld [vmem:[%s249 + $0x94] sm:$0xf]
        %v277 = vld [vmem:[%s249 + $0x9c] sm:$0xf]
        %v278 = vld [vmem:[%s249 + $0xa0] sm:$0xf]
        %v279 = vld [vmem:[%s249 + $0xa8] sm:$0xf]
        %v280 = vld [vmem:[%s249 + $0xac] sm:$0xf]
        %v281 = vld [vmem:[%s249 + $0xb4] sm:$0xf]
        %v282 = vld [vmem:[%s249 + $0xb8] sm:$0xf]
        %v283 = vld [vmem:[%s249 + $0x8] sm:$0x1]
        %v284 = vld [vmem:[%s249 + $0x14] sm:$0x1]
        %v285 = vld [vmem:[%s249 + $0x20] sm:$0x1]
        %v286 = vld [vmem:[%s249 + $0x2c] sm:$0x1]
        %v287 = vld [vmem:[%s249 + $0x38] sm:$0x1]
        %v288 = vld [vmem:[%s249 + $0x44] sm:$0x1]
        %v289 = vld [vmem:[%s249 + $0x50] sm:$0x1]
        %v290 = vld [vmem:[%s249 + $0x5c] sm:$0x1]
        %v291 = vld [vmem:[%s249 + $0x68] sm:$0x1]
        %v292 = vld [vmem:[%s249 + $0x74] sm:$0x1]
        %v293 = vld [vmem:[%s249 + $0x80] sm:$0x1]
        %v294 = vld [vmem:[%s249 + $0x8c] sm:$0x1]
        %v295 = vld [vmem:[%s249 + $0x98] sm:$0x1]
        %v296 = vld [vmem:[%s249 + $0xa4] sm:$0x1]
        %v297 = vld [vmem:[%s249 + $0xb0] sm:$0x1]
        %v298 = vld [vmem:[%s249 + $0xbc] sm:$0x1]
        %s299 = scalar_lea.vmem %s249, 12
        %v300 = vld [vmem:[%s299] sm:$0xf]
        %v301 = vld [vmem:[%s299 + $0x4] sm:$0xf]
        %v302 = vld [vmem:[%s299 + $0xc] sm:$0xf]
        %v303 = vld [vmem:[%s299 + $0x10] sm:$0xf]
        %v304 = vld [vmem:[%s299 + $0x18] sm:$0xf]
        %v305 = vld [vmem:[%s299 + $0x1c] sm:$0xf]
        %v306 = vld [vmem:[%s299 + $0x24] sm:$0xf]
        %v307 = vld [vmem:[%s299 + $0x28] sm:$0xf]
        %v308 = vld [vmem:[%s299 + $0x30] sm:$0xf]
        %v309 = vld [vmem:[%s299 + $0x34] sm:$0xf]
        %v310 = vld [vmem:[%s299 + $0x3c] sm:$0xf]
        %v311 = vld [vmem:[%s299 + $0x40] sm:$0xf]
        %v312 = vld [vmem:[%s299 + $0x48] sm:$0xf]
        %v313 = vld [vmem:[%s299 + $0x4c] sm:$0xf]
        %v314 = vld [vmem:[%s299 + $0x54] sm:$0xf]
        %v315 = vld [vmem:[%s299 + $0x58] sm:$0xf]
        %v316 = vld [vmem:[%s299 + $0x60] sm:$0xf]
        %v317 = vld [vmem:[%s299 + $0x64] sm:$0xf]
        %v318 = vld [vmem:[%s299 + $0x6c] sm:$0xf]
        %v319 = vld [vmem:[%s299 + $0x70] sm:$0xf]
        %v320 = vld [vmem:[%s299 + $0x78] sm:$0xf]
        %v321 = vld [vmem:[%s299 + $0x7c] sm:$0xf]
        %v322 = vld [vmem:[%s299 + $0x84] sm:$0xf]
        %v323 = vld [vmem:[%s299 + $0x88] sm:$0xf]
        %v324 = vld [vmem:[%s299 + $0x90] sm:$0xf]
        %v325 = vld [vmem:[%s299 + $0x94] sm:$0xf]
        %v326 = vld [vmem:[%s299 + $0x9c] sm:$0xf]
        %v327 = vld [vmem:[%s299 + $0xa0] sm:$0xf]
        %v328 = vld [vmem:[%s299 + $0xa8] sm:$0xf]
        %v329 = vld [vmem:[%s299 + $0xac] sm:$0xf]
        %v330 = vld [vmem:[%s299 + $0xb4] sm:$0xf]
        %v331 = vld [vmem:[%s299 + $0xb8] sm:$0xf]
        %v332 = vld [vmem:[%s299 + $0x8] sm:$0x1]
        %v333 = vld [vmem:[%s299 + $0x14] sm:$0x1]
        %v334 = vld [vmem:[%s299 + $0x20] sm:$0x1]
        %v335 = vld [vmem:[%s299 + $0x2c] sm:$0x1]
        %v336 = vld [vmem:[%s299 + $0x38] sm:$0x1]
        %v337 = vld [vmem:[%s299 + $0x44] sm:$0x1]
        %v338 = vld [vmem:[%s299 + $0x50] sm:$0x1]
        %v339 = vld [vmem:[%s299 + $0x5c] sm:$0x1]
        %v340 = vld [vmem:[%s299 + $0x68] sm:$0x1]
        %v341 = vld [vmem:[%s299 + $0x74] sm:$0x1]
        %v342 = vld [vmem:[%s299 + $0x80] sm:$0x1]
        %v343 = vld [vmem:[%s299 + $0x8c] sm:$0x1]
        %v344 = vld [vmem:[%s299 + $0x98] sm:$0x1]
        %v345 = vld [vmem:[%s299 + $0xa4] sm:$0x1]
        %v346 = vld [vmem:[%s299 + $0xb0] sm:$0x1]
        %v347 = vld [vmem:[%s299 + $0xbc] sm:$0x1]
        %v380 = vunpack.c.l.b16 %v251
        %v381 = vunpack.c.l.b16 %v252
        %v382 = vunpack.c.l.b16 %v253
        %v383 = vunpack.c.l.b16 %v254
        %v384 = vunpack.c.l.b16 %v255
        %v385 = vunpack.c.l.b16 %v256
        %v386 = vunpack.c.l.b16 %v257
        %v387 = vunpack.c.l.b16 %v258
        %v388 = vunpack.c.l.b16 %v259
        %v389 = vunpack.c.l.b16 %v260
        %v390 = vunpack.c.l.b16 %v261
        %v391 = vunpack.c.l.b16 %v262
        %v392 = vunpack.c.l.b16 %v263
        %v393 = vunpack.c.l.b16 %v264
        %v394 = vunpack.c.l.b16 %v265
        %v395 = vunpack.c.l.b16 %v266
        %v396 = vunpack.c.l.b16 %v267
        %v397 = vunpack.c.l.b16 %v268
        %v398 = vunpack.c.l.b16 %v269
        %v399 = vunpack.c.l.b16 %v270
        %v400 = vunpack.c.l.b16 %v271
        %v401 = vunpack.c.l.b16 %v272
        %v402 = vunpack.c.l.b16 %v273
        %v403 = vunpack.c.l.b16 %v274
        %v404 = vunpack.c.l.b16 %v275
        %v405 = vunpack.c.l.b16 %v276
        %v406 = vunpack.c.l.b16 %v277
        %v407 = vunpack.c.l.b16 %v278
        %v408 = vunpack.c.l.b16 %v279
        %v409 = vunpack.c.l.b16 %v280
        %v410 = vunpack.c.l.b16 %v281
        %v411 = vunpack.c.l.b16 %v282
        %v412 = vpack.c.b16 %v381, %v380
        %v413 = vpack.c.b16 %v383, %v382
        %v414 = vpack.c.b16 %v385, %v384
        %v415 = vpack.c.b16 %v387, %v386
        %v416 = vpack.c.b16 %v389, %v388
        %v417 = vpack.c.b16 %v391, %v390
        %v418 = vpack.c.b16 %v393, %v392
        %v419 = vpack.c.b16 %v395, %v394
        %v420 = vpack.c.b16 %v397, %v396
        %v421 = vpack.c.b16 %v399, %v398
        %v422 = vpack.c.b16 %v401, %v400
        %v423 = vpack.c.b16 %v403, %v402
        %v424 = vpack.c.b16 %v405, %v404
        %v425 = vpack.c.b16 %v407, %v406
        %v426 = vpack.c.b16 %v409, %v408
        %v427 = vpack.c.b16 %v411, %v410
        %v444 = vunpack.c.l.b16 %v283
        %v445 = vunpack.c.l.b16 %v284
        %v446 = vunpack.c.l.b16 %v285
        %v447 = vunpack.c.l.b16 %v286
        %v448 = vunpack.c.l.b16 %v287
        %v449 = vunpack.c.l.b16 %v288
        %v450 = vunpack.c.l.b16 %v289
        %v451 = vunpack.c.l.b16 %v290
        %v452 = vunpack.c.l.b16 %v291
        %v453 = vunpack.c.l.b16 %v292
        %v454 = vunpack.c.l.b16 %v293
        %v455 = vunpack.c.l.b16 %v294
        %v456 = vunpack.c.l.b16 %v295
        %v457 = vunpack.c.l.b16 %v296
        %v458 = vunpack.c.l.b16 %v297
        %v459 = vunpack.c.l.b16 %v298
        %v460 = vpack.c.b16 %v444, %v444
        %v461 = vpack.c.b16 %v445, %v445
        %v462 = vpack.c.b16 %v446, %v446
        %v463 = vpack.c.b16 %v447, %v447
        %v464 = vpack.c.b16 %v448, %v448
        %v465 = vpack.c.b16 %v449, %v449
        %v466 = vpack.c.b16 %v450, %v450
        %v467 = vpack.c.b16 %v451, %v451
        %v468 = vpack.c.b16 %v452, %v452
        %v469 = vpack.c.b16 %v453, %v453
        %v470 = vpack.c.b16 %v454, %v454
        %v471 = vpack.c.b16 %v455, %v455
        %v472 = vpack.c.b16 %v456, %v456
        %v473 = vpack.c.b16 %v457, %v457
        %v474 = vpack.c.b16 %v458, %v458
        %v475 = vpack.c.b16 %v459, %v459
        %vm476 = vsmask.f32 7424
        %v478 = vshrl.u32 %v412, 16
        %v480 = vshll.u32 %v412, 16
        %v482 = vrot.slane %v480, 1
        %v483 = vor.u32 %v478, %v482
        %v485 = vshll.u32 %v460, 16
        %v487 = vrot.slane %v485, 1
        %v488 = vsel %vm476, %v483, %v487
        %v490 = vshrl.u32 %v413, 16
        %v492 = vshll.u32 %v413, 16
        %v494 = vrot.slane %v492, 1
        %v495 = vor.u32 %v490, %v494
        %v497 = vshll.u32 %v461, 16
        %v499 = vrot.slane %v497, 1
        %v500 = vsel %vm476, %v495, %v499
        %v502 = vshrl.u32 %v414, 16
        %v504 = vshll.u32 %v414, 16
        %v506 = vrot.slane %v504, 1
        %v507 = vor.u32 %v502, %v506
        %v509 = vshll.u32 %v462, 16
        %v511 = vrot.slane %v509, 1
        %v512 = vsel %vm476, %v507, %v511
        %v514 = vshrl.u32 %v415, 16
        %v516 = vshll.u32 %v415, 16
        %v518 = vrot.slane %v516, 1
        %v519 = vor.u32 %v514, %v518
        %v521 = vshll.u32 %v463, 16
        %v523 = vrot.slane %v521, 1
        %v524 = vsel %vm476, %v519, %v523
        %v526 = vshrl.u32 %v416, 16
        %v528 = vshll.u32 %v416, 16
        %v530 = vrot.slane %v528, 1
        %v531 = vor.u32 %v526, %v530
        %v533 = vshll.u32 %v464, 16
        %v535 = vrot.slane %v533, 1
        %v536 = vsel %vm476, %v531, %v535
        %v538 = vshrl.u32 %v417, 16
        %v540 = vshll.u32 %v417, 16
        %v542 = vrot.slane %v540, 1
        %v543 = vor.u32 %v538, %v542
        %v545 = vshll.u32 %v465, 16
        %v547 = vrot.slane %v545, 1
        %v548 = vsel %vm476, %v543, %v547
        %v550 = vshrl.u32 %v418, 16
        %v552 = vshll.u32 %v418, 16
        %v554 = vrot.slane %v552, 1
        %v555 = vor.u32 %v550, %v554
        %v557 = vshll.u32 %v466, 16
        %v559 = vrot.slane %v557, 1
        %v560 = vsel %vm476, %v555, %v559
        %v562 = vshrl.u32 %v419, 16
        %v564 = vshll.u32 %v419, 16
        %v566 = vrot.slane %v564, 1
        %v567 = vor.u32 %v562, %v566
        %v569 = vshll.u32 %v467, 16
        %v571 = vrot.slane %v569, 1
        %v572 = vsel %vm476, %v567, %v571
        %v574 = vshrl.u32 %v420, 16
        %v576 = vshll.u32 %v420, 16
        %v578 = vrot.slane %v576, 1
        %v579 = vor.u32 %v574, %v578
        %v581 = vshll.u32 %v468, 16
        %v583 = vrot.slane %v581, 1
        %v584 = vsel %vm476, %v579, %v583
        %v586 = vshrl.u32 %v421, 16
        %v588 = vshll.u32 %v421, 16
        %v590 = vrot.slane %v588, 1
        %v591 = vor.u32 %v586, %v590
        %v593 = vshll.u32 %v469, 16
        %v595 = vrot.slane %v593, 1
        %v596 = vsel %vm476, %v591, %v595
        %v598 = vshrl.u32 %v422, 16
        %v600 = vshll.u32 %v422, 16
        %v602 = vrot.slane %v600, 1
        %v603 = vor.u32 %v598, %v602
        %v605 = vshll.u32 %v470, 16
        %v607 = vrot.slane %v605, 1
        %v608 = vsel %vm476, %v603, %v607
        %v610 = vshrl.u32 %v423, 16
        %v612 = vshll.u32 %v423, 16
        %v614 = vrot.slane %v612, 1
        %v615 = vor.u32 %v610, %v614
        %v617 = vshll.u32 %v471, 16
        %v619 = vrot.slane %v617, 1
        %v620 = vsel %vm476, %v615, %v619
        %v622 = vshrl.u32 %v424, 16
        %v624 = vshll.u32 %v424, 16
        %v626 = vrot.slane %v624, 1
        %v627 = vor.u32 %v622, %v626
        %v629 = vshll.u32 %v472, 16
        %v631 = vrot.slane %v629, 1
        %v632 = vsel %vm476, %v627, %v631
        %v634 = vshrl.u32 %v425, 16
        %v636 = vshll.u32 %v425, 16
        %v638 = vrot.slane %v636, 1
        %v639 = vor.u32 %v634, %v638
        %v641 = vshll.u32 %v473, 16
        %v643 = vrot.slane %v641, 1
        %v644 = vsel %vm476, %v639, %v643
        %v646 = vshrl.u32 %v426, 16
        %v648 = vshll.u32 %v426, 16
        %v650 = vrot.slane %v648, 1
        %v651 = vor.u32 %v646, %v650
        %v653 = vshll.u32 %v474, 16
        %v655 = vrot.slane %v653, 1
        %v656 = vsel %vm476, %v651, %v655
        %v658 = vshrl.u32 %v427, 16
        %v660 = vshll.u32 %v427, 16
        %v662 = vrot.slane %v660, 1
        %v663 = vor.u32 %v658, %v662
        %v665 = vshll.u32 %v475, 16
        %v667 = vrot.slane %v665, 1
        %v668 = vsel %vm476, %v663, %v667
        %669 = vrot.lane.b32.xlu0 %v488, 4
        %v670 = vpop.permute.xlu0 %669
        %671 = vrot.lane.b32.xlu0 %v500, 4
        %v672 = vpop.permute.xlu0 %671
        %673 = vrot.lane.b32.xlu0 %v512, 4
        %v674 = vpop.permute.xlu0 %673
        %675 = vrot.lane.b32.xlu0 %v524, 4
        %v676 = vpop.permute.xlu0 %675
        %677 = vrot.lane.b32.xlu0 %v536, 4
        %v678 = vpop.permute.xlu0 %677
        %679 = vrot.lane.b32.xlu0 %v548, 4
        %v680 = vpop.permute.xlu0 %679
        %681 = vrot.lane.b32.xlu0 %v560, 4
        %v682 = vpop.permute.xlu0 %681
        %683 = vrot.lane.b32.xlu0 %v572, 4
        %v684 = vpop.permute.xlu0 %683
        %685 = vrot.lane.b32.xlu0 %v584, 4
        %v686 = vpop.permute.xlu0 %685
        %687 = vrot.lane.b32.xlu0 %v596, 4
        %v688 = vpop.permute.xlu0 %687
        %689 = vrot.lane.b32.xlu0 %v608, 4
        %v690 = vpop.permute.xlu0 %689
        %691 = vrot.lane.b32.xlu0 %v620, 4
        %v692 = vpop.permute.xlu0 %691
        %693 = vrot.lane.b32.xlu0 %v632, 4
        %v694 = vpop.permute.xlu0 %693
        %695 = vrot.lane.b32.xlu0 %v644, 4
        %v696 = vpop.permute.xlu0 %695
        %697 = vrot.lane.b32.xlu0 %v656, 4
        %v698 = vpop.permute.xlu0 %697
        %699 = vrot.lane.b32.xlu0 %v668, 4
        %v700 = vpop.permute.xlu0 %699
        %v733 = vunpack.c.l.b16 %v300
        %v734 = vunpack.c.l.b16 %v301
        %v735 = vunpack.c.l.b16 %v302
        %v736 = vunpack.c.l.b16 %v303
        %v737 = vunpack.c.l.b16 %v304
        %v738 = vunpack.c.l.b16 %v305
        %v739 = vunpack.c.l.b16 %v306
        %v740 = vunpack.c.l.b16 %v307
        %v741 = vunpack.c.l.b16 %v308
        %v742 = vunpack.c.l.b16 %v309
        %v743 = vunpack.c.l.b16 %v310
        %v744 = vunpack.c.l.b16 %v311
        %v745 = vunpack.c.l.b16 %v312
        %v746 = vunpack.c.l.b16 %v313
        %v747 = vunpack.c.l.b16 %v314
        %v748 = vunpack.c.l.b16 %v315
        %v749 = vunpack.c.l.b16 %v316
        %v750 = vunpack.c.l.b16 %v317
        %v751 = vunpack.c.l.b16 %v318
        %v752 = vunpack.c.l.b16 %v319
        %v753 = vunpack.c.l.b16 %v320
        %v754 = vunpack.c.l.b16 %v321
        %v755 = vunpack.c.l.b16 %v322
        %v756 = vunpack.c.l.b16 %v323
        %v757 = vunpack.c.l.b16 %v324
        %v758 = vunpack.c.l.b16 %v325
        %v759 = vunpack.c.l.b16 %v326
        %v760 = vunpack.c.l.b16 %v327
        %v761 = vunpack.c.l.b16 %v328
        %v762 = vunpack.c.l.b16 %v329
        %v763 = vunpack.c.l.b16 %v330
        %v764 = vunpack.c.l.b16 %v331
        %v765 = vpack.c.b16 %v734, %v733
        %v766 = vpack.c.b16 %v736, %v735
        %v767 = vpack.c.b16 %v738, %v737
        %v768 = vpack.c.b16 %v740, %v739
        %v769 = vpack.c.b16 %v742, %v741
        %v770 = vpack.c.b16 %v744, %v743
        %v771 = vpack.c.b16 %v746, %v745
        %v772 = vpack.c.b16 %v748, %v747
        %v773 = vpack.c.b16 %v750, %v749
        %v774 = vpack.c.b16 %v752, %v751
        %v775 = vpack.c.b16 %v754, %v753
        %v776 = vpack.c.b16 %v756, %v755
        %v777 = vpack.c.b16 %v758, %v757
        %v778 = vpack.c.b16 %v760, %v759
        %v779 = vpack.c.b16 %v762, %v761
        %v780 = vpack.c.b16 %v764, %v763
        %781 = vrot.lane.b32.xlu0 %v765, 8
        %v782 = vpop.permute.xlu0 %781
        %783 = vrot.lane.b32.xlu0 %v766, 8
        %v784 = vpop.permute.xlu0 %783
        %785 = vrot.lane.b32.xlu0 %v767, 8
        %v786 = vpop.permute.xlu0 %785
        %787 = vrot.lane.b32.xlu0 %v768, 8
        %v788 = vpop.permute.xlu0 %787
        %789 = vrot.lane.b32.xlu0 %v769, 8
        %v790 = vpop.permute.xlu0 %789
        %791 = vrot.lane.b32.xlu0 %v770, 8
        %v792 = vpop.permute.xlu0 %791
        %793 = vrot.lane.b32.xlu0 %v771, 8
        %v794 = vpop.permute.xlu0 %793
        %795 = vrot.lane.b32.xlu0 %v772, 8
        %v796 = vpop.permute.xlu0 %795
        %797 = vrot.lane.b32.xlu0 %v773, 8
        %v798 = vpop.permute.xlu0 %797
        %799 = vrot.lane.b32.xlu0 %v774, 8
        %v800 = vpop.permute.xlu0 %799
        %801 = vrot.lane.b32.xlu0 %v775, 8
        %v802 = vpop.permute.xlu0 %801
        %803 = vrot.lane.b32.xlu0 %v776, 8
        %v804 = vpop.permute.xlu0 %803
        %805 = vrot.lane.b32.xlu0 %v777, 8
        %v806 = vpop.permute.xlu0 %805
        %807 = vrot.lane.b32.xlu0 %v778, 8
        %v808 = vpop.permute.xlu0 %807
        %809 = vrot.lane.b32.xlu0 %v779, 8
        %v810 = vpop.permute.xlu0 %809
        %811 = vrot.lane.b32.xlu0 %v780, 8
        %v812 = vpop.permute.xlu0 %811
        %v829 = vunpack.c.l.b16 %v332
        %v830 = vunpack.c.l.b16 %v333
        %v831 = vunpack.c.l.b16 %v334
        %v832 = vunpack.c.l.b16 %v335
        %v833 = vunpack.c.l.b16 %v336
        %v834 = vunpack.c.l.b16 %v337
        %v835 = vunpack.c.l.b16 %v338
        %v836 = vunpack.c.l.b16 %v339
        %v837 = vunpack.c.l.b16 %v340
        %v838 = vunpack.c.l.b16 %v341
        %v839 = vunpack.c.l.b16 %v342
        %v840 = vunpack.c.l.b16 %v343
        %v841 = vunpack.c.l.b16 %v344
        %v842 = vunpack.c.l.b16 %v345
        %v843 = vunpack.c.l.b16 %v346
        %v844 = vunpack.c.l.b16 %v347
        %v845 = vpack.c.b16 %v829, %v829
        %v846 = vpack.c.b16 %v830, %v830
        %v847 = vpack.c.b16 %v831, %v831
        %v848 = vpack.c.b16 %v832, %v832
        %v849 = vpack.c.b16 %v833, %v833
        %v850 = vpack.c.b16 %v834, %v834
        %v851 = vpack.c.b16 %v835, %v835
        %v852 = vpack.c.b16 %v836, %v836
        %v853 = vpack.c.b16 %v837, %v837
        %v854 = vpack.c.b16 %v838, %v838
        %v855 = vpack.c.b16 %v839, %v839
        %v856 = vpack.c.b16 %v840, %v840
        %v857 = vpack.c.b16 %v841, %v841
        %v858 = vpack.c.b16 %v842, %v842
        %v859 = vpack.c.b16 %v843, %v843
        %v860 = vpack.c.b16 %v844, %v844
        %v862 = vshrl.u32 %v765, 16
        %v864 = vshll.u32 %v765, 16
        %v866 = vrot.slane %v864, 1
        %v867 = vor.u32 %v862, %v866
        %v869 = vshll.u32 %v845, 16
        %v871 = vrot.slane %v869, 1
        %v872 = vsel %vm476, %v867, %v871
        %v874 = vshrl.u32 %v766, 16
        %v876 = vshll.u32 %v766, 16
        %v878 = vrot.slane %v876, 1
        %v879 = vor.u32 %v874, %v878
        %v881 = vshll.u32 %v846, 16
        %v883 = vrot.slane %v881, 1
        %v884 = vsel %vm476, %v879, %v883
        %v886 = vshrl.u32 %v767, 16
        %v888 = vshll.u32 %v767, 16
        %v890 = vrot.slane %v888, 1
        %v891 = vor.u32 %v886, %v890
        %v893 = vshll.u32 %v847, 16
        %v895 = vrot.slane %v893, 1
        %v896 = vsel %vm476, %v891, %v895
        %v898 = vshrl.u32 %v768, 16
        %v900 = vshll.u32 %v768, 16
        %v902 = vrot.slane %v900, 1
        %v903 = vor.u32 %v898, %v902
        %v905 = vshll.u32 %v848, 16
        %v907 = vrot.slane %v905, 1
        %v908 = vsel %vm476, %v903, %v907
        %v910 = vshrl.u32 %v769, 16
        %v912 = vshll.u32 %v769, 16
        %v914 = vrot.slane %v912, 1
        %v915 = vor.u32 %v910, %v914
        %v917 = vshll.u32 %v849, 16
        %v919 = vrot.slane %v917, 1
        %v920 = vsel %vm476, %v915, %v919
        %v922 = vshrl.u32 %v770, 16
        %v924 = vshll.u32 %v770, 16
        %v926 = vrot.slane %v924, 1
        %v927 = vor.u32 %v922, %v926
        %v929 = vshll.u32 %v850, 16
        %v931 = vrot.slane %v929, 1
        %v932 = vsel %vm476, %v927, %v931
        %v934 = vshrl.u32 %v771, 16
        %v936 = vshll.u32 %v771, 16
        %v938 = vrot.slane %v936, 1
        %v939 = vor.u32 %v934, %v938
        %v941 = vshll.u32 %v851, 16
        %v943 = vrot.slane %v941, 1
        %v944 = vsel %vm476, %v939, %v943
        %v946 = vshrl.u32 %v772, 16
        %v948 = vshll.u32 %v772, 16
        %v950 = vrot.slane %v948, 1
        %v951 = vor.u32 %v946, %v950
        %v953 = vshll.u32 %v852, 16
        %v955 = vrot.slane %v953, 1
        %v956 = vsel %vm476, %v951, %v955
        %v958 = vshrl.u32 %v773, 16
        %v960 = vshll.u32 %v773, 16
        %v962 = vrot.slane %v960, 1
        %v963 = vor.u32 %v958, %v962
        %v965 = vshll.u32 %v853, 16
        %v967 = vrot.slane %v965, 1
        %v968 = vsel %vm476, %v963, %v967
        %v970 = vshrl.u32 %v774, 16
        %v972 = vshll.u32 %v774, 16
        %v974 = vrot.slane %v972, 1
        %v975 = vor.u32 %v970, %v974
        %v977 = vshll.u32 %v854, 16
        %v979 = vrot.slane %v977, 1
        %v980 = vsel %vm476, %v975, %v979
        %v982 = vshrl.u32 %v775, 16
        %v984 = vshll.u32 %v775, 16
        %v986 = vrot.slane %v984, 1
        %v987 = vor.u32 %v982, %v986
        %v989 = vshll.u32 %v855, 16
        %v991 = vrot.slane %v989, 1
        %v992 = vsel %vm476, %v987, %v991
        %v994 = vshrl.u32 %v776, 16
        %v996 = vshll.u32 %v776, 16
        %v998 = vrot.slane %v996, 1
        %v999 = vor.u32 %v994, %v998
        %v1001 = vshll.u32 %v856, 16
        %v1003 = vrot.slane %v1001, 1
        %v1004 = vsel %vm476, %v999, %v1003
        %v1006 = vshrl.u32 %v777, 16
        %v1008 = vshll.u32 %v777, 16
        %v1010 = vrot.slane %v1008, 1
        %v1011 = vor.u32 %v1006, %v1010
        %v1013 = vshll.u32 %v857, 16
        %v1015 = vrot.slane %v1013, 1
        %v1016 = vsel %vm476, %v1011, %v1015
        %v1018 = vshrl.u32 %v778, 16
        %v1020 = vshll.u32 %v778, 16
        %v1022 = vrot.slane %v1020, 1
        %v1023 = vor.u32 %v1018, %v1022
        %v1025 = vshll.u32 %v858, 16
        %v1027 = vrot.slane %v1025, 1
        %v1028 = vsel %vm476, %v1023, %v1027
        %v1030 = vshrl.u32 %v779, 16
        %v1032 = vshll.u32 %v779, 16
        %v1034 = vrot.slane %v1032, 1
        %v1035 = vor.u32 %v1030, %v1034
        %v1037 = vshll.u32 %v859, 16
        %v1039 = vrot.slane %v1037, 1
        %v1040 = vsel %vm476, %v1035, %v1039
        %v1042 = vshrl.u32 %v780, 16
        %v1044 = vshll.u32 %v780, 16
        %v1046 = vrot.slane %v1044, 1
        %v1047 = vor.u32 %v1042, %v1046
        %v1049 = vshll.u32 %v860, 16
        %v1051 = vrot.slane %v1049, 1
        %v1052 = vsel %vm476, %v1047, %v1051
        %1053 = vrot.lane.b32.xlu0 %v872, 12
        %v1054 = vpop.permute.xlu0 %1053
        %1055 = vrot.lane.b32.xlu0 %v884, 12
        %v1056 = vpop.permute.xlu0 %1055
        %1057 = vrot.lane.b32.xlu0 %v896, 12
        %v1058 = vpop.permute.xlu0 %1057
        %1059 = vrot.lane.b32.xlu0 %v908, 12
        %v1060 = vpop.permute.xlu0 %1059
        %1061 = vrot.lane.b32.xlu0 %v920, 12
        %v1062 = vpop.permute.xlu0 %1061
        %1063 = vrot.lane.b32.xlu0 %v932, 12
        %v1064 = vpop.permute.xlu0 %1063
        %1065 = vrot.lane.b32.xlu0 %v944, 12
        %v1066 = vpop.permute.xlu0 %1065
        %1067 = vrot.lane.b32.xlu0 %v956, 12
        %v1068 = vpop.permute.xlu0 %1067
        %1069 = vrot.lane.b32.xlu0 %v968, 12
        %v1070 = vpop.permute.xlu0 %1069
        %1071 = vrot.lane.b32.xlu0 %v980, 12
        %v1072 = vpop.permute.xlu0 %1071
        %1073 = vrot.lane.b32.xlu0 %v992, 12
        %v1074 = vpop.permute.xlu0 %1073
        %1075 = vrot.lane.b32.xlu0 %v1004, 12
        %v1076 = vpop.permute.xlu0 %1075
        %1077 = vrot.lane.b32.xlu0 %v1016, 12
        %v1078 = vpop.permute.xlu0 %1077
        %1079 = vrot.lane.b32.xlu0 %v1028, 12
        %v1080 = vpop.permute.xlu0 %1079
        %1081 = vrot.lane.b32.xlu0 %v1040, 12
        %v1082 = vpop.permute.xlu0 %1081
        %1083 = vrot.lane.b32.xlu0 %v1052, 12
        %v1084 = vpop.permute.xlu0 %1083
        %vm1085 = vcmask 31744
        %v1087 = vsel %vm1085, %v412, %v670
        %v1089 = vsel %vm1085, %v413, %v672
        %v1091 = vsel %vm1085, %v414, %v674
        %v1093 = vsel %vm1085, %v415, %v676
        %v1095 = vsel %vm1085, %v416, %v678
        %v1097 = vsel %vm1085, %v417, %v680
        %v1099 = vsel %vm1085, %v418, %v682
        %v1101 = vsel %vm1085, %v419, %v684
        %v1103 = vsel %vm1085, %v420, %v686
        %v1105 = vsel %vm1085, %v421, %v688
        %v1107 = vsel %vm1085, %v422, %v690
        %v1109 = vsel %vm1085, %v423, %v692
        %v1111 = vsel %vm1085, %v424, %v694
        %v1113 = vsel %vm1085, %v425, %v696
        %v1115 = vsel %vm1085, %v426, %v698
        %v1117 = vsel %vm1085, %v427, %v700
        %vm1118 = vcmask 64512
        %v1120 = vsel %vm1118, %v1087, %v782
        %v1122 = vsel %vm1118, %v1089, %v784
        %v1124 = vsel %vm1118, %v1091, %v786
        %v1126 = vsel %vm1118, %v1093, %v788
        %v1128 = vsel %vm1118, %v1095, %v790
        %v1130 = vsel %vm1118, %v1097, %v792
        %v1132 = vsel %vm1118, %v1099, %v794
        %v1134 = vsel %vm1118, %v1101, %v796
        %v1136 = vsel %vm1118, %v1103, %v798
        %v1138 = vsel %vm1118, %v1105, %v800
        %v1140 = vsel %vm1118, %v1107, %v802
        %v1142 = vsel %vm1118, %v1109, %v804
        %v1144 = vsel %vm1118, %v1111, %v806
        %v1146 = vsel %vm1118, %v1113, %v808
        %v1148 = vsel %vm1118, %v1115, %v810
        %v1150 = vsel %vm1118, %v1117, %v812
        %vm1151 = vcmask 97280
        %v1153 = vsel %vm1151, %v1120, %v1054
        %v1155 = vsel %vm1151, %v1122, %v1056
        %v1157 = vsel %vm1151, %v1124, %v1058
        %v1159 = vsel %vm1151, %v1126, %v1060
        %v1161 = vsel %vm1151, %v1128, %v1062
        %v1163 = vsel %vm1151, %v1130, %v1064
        %v1165 = vsel %vm1151, %v1132, %v1066
        %v1167 = vsel %vm1151, %v1134, %v1068
        %v1169 = vsel %vm1151, %v1136, %v1070
        %v1171 = vsel %vm1151, %v1138, %v1072
        %v1173 = vsel %vm1151, %v1140, %v1074
        %v1175 = vsel %vm1151, %v1142, %v1076
        %v1177 = vsel %vm1151, %v1144, %v1078
        %v1179 = vsel %vm1151, %v1146, %v1080
        %v1181 = vsel %vm1151, %v1148, %v1082
        %v1183 = vsel %vm1151, %v1150, %v1084
        %v1184 = vld [vmem:[%s1] sm:$0xf]
        %v1185 = vld [vmem:[%s1 + $0x4] sm:$0xf]
        %v1188 = vunpack.c.l.b16 %v1184
        %v1189 = vunpack.c.l.b16 %v1185
        %v1190 = vpack.c.b16 %v1189, %v1188
        %vm1192 = vcmask 130048
        %v1193 = vsel %vm1192, %v1153, 0
        %v1195 = vsel %vm1192, %v1155, 0
        %v1197 = vsel %vm1192, %v1157, 0
        %v1199 = vsel %vm1192, %v1159, 0
        %v1201 = vsel %vm1192, %v1161, 0
        %v1203 = vsel %vm1192, %v1163, 0
        %v1205 = vsel %vm1192, %v1165, 0
        %v1207 = vsel %vm1192, %v1167, 0
        %v1209 = vsel %vm1192, %v1169, 0
        %v1211 = vsel %vm1192, %v1171, 0
        %v1213 = vsel %vm1192, %v1173, 0
        %v1215 = vsel %vm1192, %v1175, 0
        %v1217 = vsel %vm1192, %v1177, 0
        %v1219 = vsel %vm1192, %v1179, 0
        %v1221 = vsel %vm1192, %v1181, 0
        %v1223 = vsel %vm1192, %v1183, 0
        %1225 = vmatprep.subr.bf16.mxu0 0
        %1226 = vmatpush1.bf16.msra.mxu0 0
        %1227 = vmatprep.subr.bf16.mxu0 0
        %1228 = vmatpush1.bf16.msra.mxu0 0
        %1229 = vmatprep.subr.bf16.mxu0 0
        %1230 = vmatpush1.bf16.msra.mxu0 0
        %1231 = vmatprep.subr.bf16.mxu0 0
        %1232 = vmatpush1.bf16.msra.mxu0 0
        %1233 = vmatprep.subr.bf16.mxu0 0
        %1234 = vmatpush1.bf16.msra.mxu0 0
        %1235 = vmatprep.subr.bf16.mxu0 0
        %1236 = vmatpush1.bf16.msra.mxu0 0
        %1237 = vmatprep.subr.bf16.mxu0 0
        %1238 = vmatpush1.bf16.msra.mxu0 0
        %1239 = vmatprep.subr.bf16.mxu0 0
        %1240 = vmatpush1.bf16.msra.mxu0 %v1190
        %1241 = vmatprep.subr.bf16.mxu0 0
        %1242 = vmatpush2.bf16.msra.mxu0 0
        %1243 = vmatprep.subr.bf16.mxu0 0
        %1244 = vmatpush2.bf16.msra.mxu0 0
        %1245 = vmatprep.subr.bf16.mxu0 0
        %1246 = vmatpush2.bf16.msra.mxu0 0
        %1247 = vmatprep.subr.bf16.mxu0 0
        %1248 = vmatpush2.bf16.msra.mxu0 0
        %1249 = vmatprep.subr.bf16.mxu0 0
        %1250 = vmatpush2.bf16.msra.mxu0 0
        %1251 = vmatprep.subr.bf16.mxu0 0
        %1252 = vmatpush2.bf16.msra.mxu0 0
        %1253 = vmatprep.subr.bf16.mxu0 0
        %1254 = vmatpush2.bf16.msra.mxu0 0
        %1255 = vmatprep.subr.bf16.mxu0 0
        %1256 = vmatpush2.bf16.msra.mxu0 0
        %1257 = vmatprep.mubr.bf16.mxu0 0
        %1258 = vmatmul.mubr.bf16.gmra.mxu0 %v1193
        %v1259 = vpop.f32.mrf.mxu0
        %v1260 = vadd.f32 0.0, %v1259
        %v1261 = vpop.f32.mrf.mxu0
        %v1262 = vpop.f32.mrf.mxu0
        %v1263 = vadd.f32 0.0, %v1262
        %v1264 = vpop.f32.mrf.mxu0
        %1265 = vmatprep.mubr.bf16.mxu0 0
        %1266 = vmatmul.mubr.bf16.gmra.mxu0 %v1195
        %v1267 = vpop.f32.mrf.mxu0
        %v1268 = vadd.f32 0.0, %v1267
        %v1269 = vpop.f32.mrf.mxu0
        %v1270 = vpop.f32.mrf.mxu0
        %v1271 = vadd.f32 0.0, %v1270
        %v1272 = vpop.f32.mrf.mxu0
        %1273 = vmatprep.mubr.bf16.mxu0 0
        %1274 = vmatmul.mubr.bf16.gmra.mxu0 %v1197
        %v1275 = vpop.f32.mrf.mxu0
        %v1276 = vadd.f32 0.0, %v1275
        %v1277 = vpop.f32.mrf.mxu0
        %v1278 = vpop.f32.mrf.mxu0
        %v1279 = vadd.f32 0.0, %v1278
        %v1280 = vpop.f32.mrf.mxu0
        %1281 = vmatprep.mubr.bf16.mxu0 0
        %1282 = vmatmul.mubr.bf16.gmra.mxu0 %v1199
        %v1283 = vpop.f32.mrf.mxu0
        %v1284 = vadd.f32 0.0, %v1283
        %v1285 = vpop.f32.mrf.mxu0
        %v1286 = vpop.f32.mrf.mxu0
        %v1287 = vadd.f32 0.0, %v1286
        %v1288 = vpop.f32.mrf.mxu0
        %1289 = vmatprep.mubr.bf16.mxu0 0
        %1290 = vmatmul.mubr.bf16.gmra.mxu0 %v1201
        %v1291 = vpop.f32.mrf.mxu0
        %v1292 = vadd.f32 0.0, %v1291
        %v1293 = vpop.f32.mrf.mxu0
        %v1294 = vpop.f32.mrf.mxu0
        %v1295 = vadd.f32 0.0, %v1294
        %v1296 = vpop.f32.mrf.mxu0
        %1297 = vmatprep.mubr.bf16.mxu0 0
        %1298 = vmatmul.mubr.bf16.gmra.mxu0 %v1203
        %v1299 = vpop.f32.mrf.mxu0
        %v1300 = vadd.f32 0.0, %v1299
        %v1301 = vpop.f32.mrf.mxu0
        %v1302 = vpop.f32.mrf.mxu0
        %v1303 = vadd.f32 0.0, %v1302
        %v1304 = vpop.f32.mrf.mxu0
        %1305 = vmatprep.mubr.bf16.mxu0 0
        %1306 = vmatmul.mubr.bf16.gmra.mxu0 %v1205
        %v1307 = vpop.f32.mrf.mxu0
        %v1308 = vadd.f32 0.0, %v1307
        %v1309 = vpop.f32.mrf.mxu0
        %v1310 = vpop.f32.mrf.mxu0
        %v1311 = vadd.f32 0.0, %v1310
        %v1312 = vpop.f32.mrf.mxu0
        %1313 = vmatprep.mubr.bf16.mxu0 0
        %1314 = vmatmul.mubr.bf16.gmra.mxu0 %v1207
        %v1315 = vpop.f32.mrf.mxu0
        %v1316 = vadd.f32 0.0, %v1315
        %v1317 = vpop.f32.mrf.mxu0
        %v1318 = vpop.f32.mrf.mxu0
        %v1319 = vadd.f32 0.0, %v1318
        %v1320 = vpop.f32.mrf.mxu0
        %1321 = vmatprep.mubr.bf16.mxu0 0
        %1322 = vmatmul.mubr.bf16.gmra.mxu0 %v1209
        %v1323 = vpop.f32.mrf.mxu0
        %v1324 = vadd.f32 0.0, %v1323
        %v1325 = vpop.f32.mrf.mxu0
        %v1326 = vpop.f32.mrf.mxu0
        %v1327 = vadd.f32 0.0, %v1326
        %v1328 = vpop.f32.mrf.mxu0
        %1329 = vmatprep.mubr.bf16.mxu0 0
        %1330 = vmatmul.mubr.bf16.gmra.mxu0 %v1211
        %v1331 = vpop.f32.mrf.mxu0
        %v1332 = vadd.f32 0.0, %v1331
        %v1333 = vpop.f32.mrf.mxu0
        %v1334 = vpop.f32.mrf.mxu0
        %v1335 = vadd.f32 0.0, %v1334
        %v1336 = vpop.f32.mrf.mxu0
        %1337 = vmatprep.mubr.bf16.mxu0 0
        %1338 = vmatmul.mubr.bf16.gmra.mxu0 %v1213
        %v1339 = vpop.f32.mrf.mxu0
        %v1340 = vadd.f32 0.0, %v1339
        %v1341 = vpop.f32.mrf.mxu0
        %v1342 = vpop.f32.mrf.mxu0
        %v1343 = vadd.f32 0.0, %v1342
        %v1344 = vpop.f32.mrf.mxu0
        %1345 = vmatprep.mubr.bf16.mxu0 0
        %1346 = vmatmul.mubr.bf16.gmra.mxu0 %v1215
        %v1347 = vpop.f32.mrf.mxu0
        %v1348 = vadd.f32 0.0, %v1347
        %v1349 = vpop.f32.mrf.mxu0
        %v1350 = vpop.f32.mrf.mxu0
        %v1351 = vadd.f32 0.0, %v1350
        %v1352 = vpop.f32.mrf.mxu0
        %1353 = vmatprep.mubr.bf16.mxu0 0
        %1354 = vmatmul.mubr.bf16.gmra.mxu0 %v1217
        %v1355 = vpop.f32.mrf.mxu0
        %v1356 = vadd.f32 0.0, %v1355
        %v1357 = vpop.f32.mrf.mxu0
        %v1358 = vpop.f32.mrf.mxu0
        %v1359 = vadd.f32 0.0, %v1358
        %v1360 = vpop.f32.mrf.mxu0
        %1361 = vmatprep.mubr.bf16.mxu0 0
        %1362 = vmatmul.mubr.bf16.gmra.mxu0 %v1219
        %v1363 = vpop.f32.mrf.mxu0
        %v1364 = vadd.f32 0.0, %v1363
        %v1365 = vpop.f32.mrf.mxu0
        %v1366 = vpop.f32.mrf.mxu0
        %v1367 = vadd.f32 0.0, %v1366
        %v1368 = vpop.f32.mrf.mxu0
        %1369 = vmatprep.mubr.bf16.mxu0 0
        %1370 = vmatmul.mubr.bf16.gmra.mxu0 %v1221
        %v1371 = vpop.f32.mrf.mxu0
        %v1372 = vadd.f32 0.0, %v1371
        %v1373 = vpop.f32.mrf.mxu0
        %v1374 = vpop.f32.mrf.mxu0
        %v1375 = vadd.f32 0.0, %v1374
        %v1376 = vpop.f32.mrf.mxu0
        %1377 = vmatprep.mubr.bf16.mxu0 0
        %1378 = vmatmul.mubr.bf16.gmra.mxu0 %v1223
        %v1379 = vpop.f32.mrf.mxu0
        %v1380 = vadd.f32 0.0, %v1379
        %v1381 = vpop.f32.mrf.mxu0
        %v1382 = vpop.f32.mrf.mxu0
        %v1383 = vadd.f32 0.0, %v1382
        %v1384 = vpop.f32.mrf.mxu0
        %1385 = vdwg.mxu0
        %v1386 = vsel %vm1192, %v1260, 0.0
        %v1387 = vsel %vm1192, %v1263, 0.0
        %v1388 = vadd.f32 %v1386, %v1387
        %v1389 = vsel %vm1192, %v1268, 0.0
        %v1390 = vadd.f32 %v1388, %v1389
        %v1391 = vsel %vm1192, %v1271, 0.0
        %v1392 = vadd.f32 %v1390, %v1391
        %v1393 = vsel %vm1192, %v1276, 0.0
        %v1394 = vadd.f32 %v1392, %v1393
        %v1395 = vsel %vm1192, %v1279, 0.0
        %v1396 = vadd.f32 %v1394, %v1395
        %v1397 = vsel %vm1192, %v1284, 0.0
        %v1398 = vadd.f32 %v1396, %v1397
        %v1399 = vsel %vm1192, %v1287, 0.0
        %v1400 = vadd.f32 %v1398, %v1399
        %v1401 = vsel %vm1192, %v1292, 0.0
        %v1402 = vadd.f32 %v1400, %v1401
        %v1403 = vsel %vm1192, %v1295, 0.0
        %v1404 = vadd.f32 %v1402, %v1403
        %v1405 = vsel %vm1192, %v1300, 0.0
        %v1406 = vadd.f32 %v1404, %v1405
        %v1407 = vsel %vm1192, %v1303, 0.0
        %v1408 = vadd.f32 %v1406, %v1407
        %v1409 = vsel %vm1192, %v1308, 0.0
        %v1410 = vadd.f32 %v1408, %v1409
        %v1411 = vsel %vm1192, %v1311, 0.0
        %v1412 = vadd.f32 %v1410, %v1411
        %v1413 = vsel %vm1192, %v1316, 0.0
        %v1414 = vadd.f32 %v1412, %v1413
        %v1415 = vsel %vm1192, %v1319, 0.0
        %v1416 = vadd.f32 %v1414, %v1415
        %v1417 = vsel %vm1192, %v1324, 0.0
        %v1418 = vadd.f32 %v1416, %v1417
        %v1419 = vsel %vm1192, %v1327, 0.0
        %v1420 = vadd.f32 %v1418, %v1419
        %v1421 = vsel %vm1192, %v1332, 0.0
        %v1422 = vadd.f32 %v1420, %v1421
        %v1423 = vsel %vm1192, %v1335, 0.0
        %v1424 = vadd.f32 %v1422, %v1423
        %v1425 = vsel %vm1192, %v1340, 0.0
        %v1426 = vadd.f32 %v1424, %v1425
        %v1427 = vsel %vm1192, %v1343, 0.0
        %v1428 = vadd.f32 %v1426, %v1427
        %v1429 = vsel %vm1192, %v1348, 0.0
        %v1430 = vadd.f32 %v1428, %v1429
        %v1431 = vsel %vm1192, %v1351, 0.0
        %v1432 = vadd.f32 %v1430, %v1431
        %v1433 = vsel %vm1192, %v1356, 0.0
        %v1434 = vadd.f32 %v1432, %v1433
        %v1435 = vsel %vm1192, %v1359, 0.0
        %v1436 = vadd.f32 %v1434, %v1435
        %v1437 = vsel %vm1192, %v1364, 0.0
        %v1438 = vadd.f32 %v1436, %v1437
        %v1439 = vsel %vm1192, %v1367, 0.0
        %v1440 = vadd.f32 %v1438, %v1439
        %v1441 = vsel %vm1192, %v1372, 0.0
        %v1442 = vadd.f32 %v1440, %v1441
        %v1443 = vsel %vm1192, %v1375, 0.0
        %v1444 = vadd.f32 %v1442, %v1443
        %v1445 = vsel %vm1192, %v1380, 0.0
        %v1446 = vadd.f32 %v1444, %v1445
        %v1447 = vsel %vm1192, %v1383, 0.0
        %v1448 = vadd.f32 %v1446, %v1447
        %v1449 = vrot.slane %v1448, 4
        %v1450 = vadd.f32 %v1448, %v1449
        %v1451 = vrot.slane %v1450, 2
        %v1452 = vadd.f32 %v1450, %v1451
        %v1453 = vrot.slane %v1452, 1
        %v1454 = vadd.f32 %v1452, %v1453
        %v1455 = vadd.f32 %v1454, 0.0
        %v1456 = vmul.f32 %v1260, %v1260
        %v1457 = vmul.f32 %v1263, %v1263
        %v1458 = vmul.f32 %v1268, %v1268
        %v1459 = vmul.f32 %v1271, %v1271
        %v1460 = vmul.f32 %v1276, %v1276
        %v1461 = vmul.f32 %v1279, %v1279
        %v1462 = vmul.f32 %v1284, %v1284
        %v1463 = vmul.f32 %v1287, %v1287
        %v1464 = vmul.f32 %v1292, %v1292
        %v1465 = vmul.f32 %v1295, %v1295
        %v1466 = vmul.f32 %v1300, %v1300
        %v1467 = vmul.f32 %v1303, %v1303
        %v1468 = vmul.f32 %v1308, %v1308
        %v1469 = vmul.f32 %v1311, %v1311
        %v1470 = vmul.f32 %v1316, %v1316
        %v1471 = vmul.f32 %v1319, %v1319
        %v1472 = vmul.f32 %v1324, %v1324
        %v1473 = vmul.f32 %v1327, %v1327
        %v1474 = vmul.f32 %v1332, %v1332
        %v1475 = vmul.f32 %v1335, %v1335
        %v1476 = vmul.f32 %v1340, %v1340
        %v1477 = vmul.f32 %v1343, %v1343
        %v1478 = vmul.f32 %v1348, %v1348
        %v1479 = vmul.f32 %v1351, %v1351
        %v1480 = vmul.f32 %v1356, %v1356
        %v1481 = vmul.f32 %v1359, %v1359
        %v1482 = vmul.f32 %v1364, %v1364
        %v1483 = vmul.f32 %v1367, %v1367
        %v1484 = vmul.f32 %v1372, %v1372
        %v1485 = vmul.f32 %v1375, %v1375
        %v1486 = vmul.f32 %v1380, %v1380
        %v1487 = vmul.f32 %v1383, %v1383
        %v1488 = vsel %vm1192, %v1456, 0.0
        %v1489 = vsel %vm1192, %v1457, 0.0
        %v1490 = vadd.f32 %v1488, %v1489
        %v1491 = vsel %vm1192, %v1458, 0.0
        %v1492 = vadd.f32 %v1490, %v1491
        %v1493 = vsel %vm1192, %v1459, 0.0
        %v1494 = vadd.f32 %v1492, %v1493
        %v1495 = vsel %vm1192, %v1460, 0.0
        %v1496 = vadd.f32 %v1494, %v1495
        %v1497 = vsel %vm1192, %v1461, 0.0
        %v1498 = vadd.f32 %v1496, %v1497
        %v1499 = vsel %vm1192, %v1462, 0.0
        %v1500 = vadd.f32 %v1498, %v1499
        %v1501 = vsel %vm1192, %v1463, 0.0
        %v1502 = vadd.f32 %v1500, %v1501
        %v1503 = vsel %vm1192, %v1464, 0.0
        %v1504 = vadd.f32 %v1502, %v1503
        %v1505 = vsel %vm1192, %v1465, 0.0
        %v1506 = vadd.f32 %v1504, %v1505
        %v1507 = vsel %vm1192, %v1466, 0.0
        %v1508 = vadd.f32 %v1506, %v1507
        %v1509 = vsel %vm1192, %v1467, 0.0
        %v1510 = vadd.f32 %v1508, %v1509
        %v1511 = vsel %vm1192, %v1468, 0.0
        %v1512 = vadd.f32 %v1510, %v1511
        %v1513 = vsel %vm1192, %v1469, 0.0
        %v1514 = vadd.f32 %v1512, %v1513
        %v1515 = vsel %vm1192, %v1470, 0.0
        %v1516 = vadd.f32 %v1514, %v1515
        %v1517 = vsel %vm1192, %v1471, 0.0
        %v1518 = vadd.f32 %v1516, %v1517
        %v1519 = vsel %vm1192, %v1472, 0.0
        %v1520 = vadd.f32 %v1518, %v1519
        %v1521 = vsel %vm1192, %v1473, 0.0
        %v1522 = vadd.f32 %v1520, %v1521
        %v1523 = vsel %vm1192, %v1474, 0.0
        %v1524 = vadd.f32 %v1522, %v1523
        %v1525 = vsel %vm1192, %v1475, 0.0
        %v1526 = vadd.f32 %v1524, %v1525
        %v1527 = vsel %vm1192, %v1476, 0.0
        %v1528 = vadd.f32 %v1526, %v1527
        %v1529 = vsel %vm1192, %v1477, 0.0
        %v1530 = vadd.f32 %v1528, %v1529
        %v1531 = vsel %vm1192, %v1478, 0.0
        %v1532 = vadd.f32 %v1530, %v1531
        %v1533 = vsel %vm1192, %v1479, 0.0
        %v1534 = vadd.f32 %v1532, %v1533
        %v1535 = vsel %vm1192, %v1480, 0.0
        %v1536 = vadd.f32 %v1534, %v1535
        %v1537 = vsel %vm1192, %v1481, 0.0
        %v1538 = vadd.f32 %v1536, %v1537
        %v1539 = vsel %vm1192, %v1482, 0.0
        %v1540 = vadd.f32 %v1538, %v1539
        %v1541 = vsel %vm1192, %v1483, 0.0
        %v1542 = vadd.f32 %v1540, %v1541
        %v1543 = vsel %vm1192, %v1484, 0.0
        %v1544 = vadd.f32 %v1542, %v1543
        %v1545 = vsel %vm1192, %v1485, 0.0
        %v1546 = vadd.f32 %v1544, %v1545
        %v1547 = vsel %vm1192, %v1486, 0.0
        %v1548 = vadd.f32 %v1546, %v1547
        %v1549 = vsel %vm1192, %v1487, 0.0
        %v1550 = vadd.f32 %v1548, %v1549
        %v1551 = vrot.slane %v1550, 4
        %v1552 = vadd.f32 %v1550, %v1551
        %v1553 = vrot.slane %v1552, 2
        %v1554 = vadd.f32 %v1552, %v1553
        %v1555 = vrot.slane %v1554, 1
        %v1556 = vadd.f32 %v1554, %v1555
        %v1557 = vadd.f32 %v1556, 0.0
        %v1558 = vld [vmem:[%s249] sm:$0xe]
        %v1559 = vld [vmem:[%s249 + $0xc] sm:$0xe]
        %v1560 = vld [vmem:[%s249 + $0x18] sm:$0xe]
        %v1561 = vld [vmem:[%s249 + $0x24] sm:$0xe]
        %v1562 = vld [vmem:[%s249 + $0x30] sm:$0xe]
        %v1563 = vld [vmem:[%s249 + $0x3c] sm:$0xe]
        %v1564 = vld [vmem:[%s249 + $0x48] sm:$0xe]
        %v1565 = vld [vmem:[%s249 + $0x54] sm:$0xe]
        %v1566 = vld [vmem:[%s249 + $0x60] sm:$0xe]
        %v1567 = vld [vmem:[%s249 + $0x6c] sm:$0xe]
        %v1568 = vld [vmem:[%s249 + $0x78] sm:$0xe]
        %v1569 = vld [vmem:[%s249 + $0x84] sm:$0xe]
        %v1570 = vld [vmem:[%s249 + $0x90] sm:$0xe]
        %v1571 = vld [vmem:[%s249 + $0x9c] sm:$0xe]
        %v1572 = vld [vmem:[%s249 + $0xa8] sm:$0xe]
        %v1573 = vld [vmem:[%s249 + $0xb4] sm:$0xe]
        %v1574 = vld [vmem:[%s299] sm:$0xe]
        %v1575 = vld [vmem:[%s299 + $0xc] sm:$0xe]
        %v1576 = vld [vmem:[%s299 + $0x18] sm:$0xe]
        %v1577 = vld [vmem:[%s299 + $0x24] sm:$0xe]
        %v1578 = vld [vmem:[%s299 + $0x30] sm:$0xe]
        %v1579 = vld [vmem:[%s299 + $0x3c] sm:$0xe]
        %v1580 = vld [vmem:[%s299 + $0x48] sm:$0xe]
        %v1581 = vld [vmem:[%s299 + $0x54] sm:$0xe]
        %v1582 = vld [vmem:[%s299 + $0x60] sm:$0xe]
        %v1583 = vld [vmem:[%s299 + $0x6c] sm:$0xe]
        %v1584 = vld [vmem:[%s299 + $0x78] sm:$0xe]
        %v1585 = vld [vmem:[%s299 + $0x84] sm:$0xe]
        %v1586 = vld [vmem:[%s299 + $0x90] sm:$0xe]
        %v1587 = vld [vmem:[%s299 + $0x9c] sm:$0xe]
        %v1588 = vld [vmem:[%s299 + $0xa8] sm:$0xe]
        %v1589 = vld [vmem:[%s299 + $0xb4] sm:$0xe]
        %v1606 = vunpack.c.l.b16 %v1558
        %v1607 = vunpack.c.l.b16 %v1559
        %v1608 = vunpack.c.l.b16 %v1560
        %v1609 = vunpack.c.l.b16 %v1561
        %v1610 = vunpack.c.l.b16 %v1562
        %v1611 = vunpack.c.l.b16 %v1563
        %v1612 = vunpack.c.l.b16 %v1564
        %v1613 = vunpack.c.l.b16 %v1565
        %v1614 = vunpack.c.l.b16 %v1566
        %v1615 = vunpack.c.l.b16 %v1567
        %v1616 = vunpack.c.l.b16 %v1568
        %v1617 = vunpack.c.l.b16 %v1569
        %v1618 = vunpack.c.l.b16 %v1570
        %v1619 = vunpack.c.l.b16 %v1571
        %v1620 = vunpack.c.l.b16 %v1572
        %v1621 = vunpack.c.l.b16 %v1573
        %v1622 = vpack.c.b16 %v381, %v1606
        %v1623 = vpack.c.b16 %v383, %v1607
        %v1624 = vpack.c.b16 %v385, %v1608
        %v1625 = vpack.c.b16 %v387, %v1609
        %v1626 = vpack.c.b16 %v389, %v1610
        %v1627 = vpack.c.b16 %v391, %v1611
        %v1628 = vpack.c.b16 %v393, %v1612
        %v1629 = vpack.c.b16 %v395, %v1613
        %v1630 = vpack.c.b16 %v397, %v1614
        %v1631 = vpack.c.b16 %v399, %v1615
        %v1632 = vpack.c.b16 %v401, %v1616
        %v1633 = vpack.c.b16 %v403, %v1617
        %v1634 = vpack.c.b16 %v405, %v1618
        %v1635 = vpack.c.b16 %v407, %v1619
        %v1636 = vpack.c.b16 %v409, %v1620
        %v1637 = vpack.c.b16 %v411, %v1621
        %v1639 = vshrl.u32 %v1622, 16
        %v1641 = vshll.u32 %v1622, 16
        %v1643 = vrot.slane %v1641, 1
        %v1644 = vor.u32 %v1639, %v1643
        %v1645 = vsel %vm476, %v1644, %v487
        %v1646 = vshrl.u32 %v460, 16
        %v1649 = vshrl.u32 %v1623, 16
        %v1651 = vshll.u32 %v1623, 16
        %v1653 = vrot.slane %v1651, 1
        %v1654 = vor.u32 %v1649, %v1653
        %v1655 = vsel %vm476, %v1654, %v499
        %v1656 = vshrl.u32 %v461, 16
        %v1659 = vshrl.u32 %v1624, 16
        %v1661 = vshll.u32 %v1624, 16
        %v1663 = vrot.slane %v1661, 1
        %v1664 = vor.u32 %v1659, %v1663
        %v1665 = vsel %vm476, %v1664, %v511
        %v1666 = vshrl.u32 %v462, 16
        %v1669 = vshrl.u32 %v1625, 16
        %v1671 = vshll.u32 %v1625, 16
        %v1673 = vrot.slane %v1671, 1
        %v1674 = vor.u32 %v1669, %v1673
        %v1675 = vsel %vm476, %v1674, %v523
        %v1676 = vshrl.u32 %v463, 16
        %v1679 = vshrl.u32 %v1626, 16
        %v1681 = vshll.u32 %v1626, 16
        %v1683 = vrot.slane %v1681, 1
        %v1684 = vor.u32 %v1679, %v1683
        %v1685 = vsel %vm476, %v1684, %v535
        %v1686 = vshrl.u32 %v464, 16
        %v1689 = vshrl.u32 %v1627, 16
        %v1691 = vshll.u32 %v1627, 16
        %v1693 = vrot.slane %v1691, 1
        %v1694 = vor.u32 %v1689, %v1693
        %v1695 = vsel %vm476, %v1694, %v547
        %v1696 = vshrl.u32 %v465, 16
        %v1699 = vshrl.u32 %v1628, 16
        %v1701 = vshll.u32 %v1628, 16
        %v1703 = vrot.slane %v1701, 1
        %v1704 = vor.u32 %v1699, %v1703
        %v1705 = vsel %vm476, %v1704, %v559
        %v1706 = vshrl.u32 %v466, 16
        %v1709 = vshrl.u32 %v1629, 16
        %v1711 = vshll.u32 %v1629, 16
        %v1713 = vrot.slane %v1711, 1
        %v1714 = vor.u32 %v1709, %v1713
        %v1715 = vsel %vm476, %v1714, %v571
        %v1716 = vshrl.u32 %v467, 16
        %v1719 = vshrl.u32 %v1630, 16
        %v1721 = vshll.u32 %v1630, 16
        %v1723 = vrot.slane %v1721, 1
        %v1724 = vor.u32 %v1719, %v1723
        %v1725 = vsel %vm476, %v1724, %v583
        %v1726 = vshrl.u32 %v468, 16
        %v1729 = vshrl.u32 %v1631, 16
        %v1731 = vshll.u32 %v1631, 16
        %v1733 = vrot.slane %v1731, 1
        %v1734 = vor.u32 %v1729, %v1733
        %v1735 = vsel %vm476, %v1734, %v595
        %v1736 = vshrl.u32 %v469, 16
        %v1739 = vshrl.u32 %v1632, 16
        %v1741 = vshll.u32 %v1632, 16
        %v1743 = vrot.slane %v1741, 1
        %v1744 = vor.u32 %v1739, %v1743
        %v1745 = vsel %vm476, %v1744, %v607
        %v1746 = vshrl.u32 %v470, 16
        %v1749 = vshrl.u32 %v1633, 16
        %v1751 = vshll.u32 %v1633, 16
        %v1753 = vrot.slane %v1751, 1
        %v1754 = vor.u32 %v1749, %v1753
        %v1755 = vsel %vm476, %v1754, %v619
        %v1756 = vshrl.u32 %v471, 16
        %v1759 = vshrl.u32 %v1634, 16
        %v1761 = vshll.u32 %v1634, 16
        %v1763 = vrot.slane %v1761, 1
        %v1764 = vor.u32 %v1759, %v1763
        %v1765 = vsel %vm476, %v1764, %v631
        %v1766 = vshrl.u32 %v472, 16
        %v1769 = vshrl.u32 %v1635, 16
        %v1771 = vshll.u32 %v1635, 16
        %v1773 = vrot.slane %v1771, 1
        %v1774 = vor.u32 %v1769, %v1773
        %v1775 = vsel %vm476, %v1774, %v643
        %v1776 = vshrl.u32 %v473, 16
        %v1779 = vshrl.u32 %v1636, 16
        %v1781 = vshll.u32 %v1636, 16
        %v1783 = vrot.slane %v1781, 1
        %v1784 = vor.u32 %v1779, %v1783
        %v1785 = vsel %vm476, %v1784, %v655
        %v1786 = vshrl.u32 %v474, 16
        %v1789 = vshrl.u32 %v1637, 16
        %v1791 = vshll.u32 %v1637, 16
        %v1793 = vrot.slane %v1791, 1
        %v1794 = vor.u32 %v1789, %v1793
        %v1795 = vsel %vm476, %v1794, %v667
        %v1796 = vshrl.u32 %v475, 16
        %1798 = vrot.lane.b32.xlu0 %v1645, 4
        %v1799 = vpop.permute.xlu0 %1798
        %1800 = vrot.lane.b32.xlu0 %v1646, 4
        %v1801 = vpop.permute.xlu0 %1800
        %1802 = vrot.lane.b32.xlu0 %v1655, 4
        %v1803 = vpop.permute.xlu0 %1802
        %1804 = vrot.lane.b32.xlu0 %v1656, 4
        %v1805 = vpop.permute.xlu0 %1804
        %1806 = vrot.lane.b32.xlu0 %v1665, 4
        %v1807 = vpop.permute.xlu0 %1806
        %1808 = vrot.lane.b32.xlu0 %v1666, 4
        %v1809 = vpop.permute.xlu0 %1808
        %1810 = vrot.lane.b32.xlu0 %v1675, 4
        %v1811 = vpop.permute.xlu0 %1810
        %1812 = vrot.lane.b32.xlu0 %v1676, 4
        %v1813 = vpop.permute.xlu0 %1812
        %1814 = vrot.lane.b32.xlu0 %v1685, 4
        %v1815 = vpop.permute.xlu0 %1814
        %1816 = vrot.lane.b32.xlu0 %v1686, 4
        %v1817 = vpop.permute.xlu0 %1816
        %1818 = vrot.lane.b32.xlu0 %v1695, 4
        %v1819 = vpop.permute.xlu0 %1818
        %1820 = vrot.lane.b32.xlu0 %v1696, 4
        %v1821 = vpop.permute.xlu0 %1820
        %1822 = vrot.lane.b32.xlu0 %v1705, 4
        %v1823 = vpop.permute.xlu0 %1822
        %1824 = vrot.lane.b32.xlu0 %v1706, 4
        %v1825 = vpop.permute.xlu0 %1824
        %1826 = vrot.lane.b32.xlu0 %v1715, 4
        %v1827 = vpop.permute.xlu0 %1826
        %1828 = vrot.lane.b32.xlu0 %v1716, 4
        %v1829 = vpop.permute.xlu0 %1828
        %1830 = vrot.lane.b32.xlu0 %v1725, 4
        %v1831 = vpop.permute.xlu0 %1830
        %1832 = vrot.lane.b32.xlu0 %v1726, 4
        %v1833 = vpop.permute.xlu0 %1832
        %1834 = vrot.lane.b32.xlu0 %v1735, 4
        %v1835 = vpop.permute.xlu0 %1834
        %1836 = vrot.lane.b32.xlu0 %v1736, 4
        %v1837 = vpop.permute.xlu0 %1836
        %1838 = vrot.lane.b32.xlu0 %v1745, 4
        %v1839 = vpop.permute.xlu0 %1838
        %1840 = vrot.lane.b32.xlu0 %v1746, 4
        %v1841 = vpop.permute.xlu0 %1840
        %1842 = vrot.lane.b32.xlu0 %v1755, 4
        %v1843 = vpop.permute.xlu0 %1842
        %1844 = vrot.lane.b32.xlu0 %v1756, 4
        %v1845 = vpop.permute.xlu0 %1844
        %1846 = vrot.lane.b32.xlu0 %v1765, 4
        %v1847 = vpop.permute.xlu0 %1846
        %1848 = vrot.lane.b32.xlu0 %v1766, 4
        %v1849 = vpop.permute.xlu0 %1848
        %1850 = vrot.lane.b32.xlu0 %v1775, 4
        %v1851 = vpop.permute.xlu0 %1850
        %1852 = vrot.lane.b32.xlu0 %v1776, 4
        %v1853 = vpop.permute.xlu0 %1852
        %1854 = vrot.lane.b32.xlu0 %v1785, 4
        %v1855 = vpop.permute.xlu0 %1854
        %1856 = vrot.lane.b32.xlu0 %v1786, 4
        %v1857 = vpop.permute.xlu0 %1856
        %1858 = vrot.lane.b32.xlu0 %v1795, 4
        %v1859 = vpop.permute.xlu0 %1858
        %1860 = vrot.lane.b32.xlu0 %v1796, 4
        %v1861 = vpop.permute.xlu0 %1860
        %1862 = vrot.lane.b32.xlu0 %v845, 8
        %v1863 = vpop.permute.xlu0 %1862
        %1864 = vrot.lane.b32.xlu0 %v846, 8
        %v1865 = vpop.permute.xlu0 %1864
        %1866 = vrot.lane.b32.xlu0 %v847, 8
        %v1867 = vpop.permute.xlu0 %1866
        %1868 = vrot.lane.b32.xlu0 %v848, 8
        %v1869 = vpop.permute.xlu0 %1868
        %1870 = vrot.lane.b32.xlu0 %v849, 8
        %v1871 = vpop.permute.xlu0 %1870
        %1872 = vrot.lane.b32.xlu0 %v850, 8
        %v1873 = vpop.permute.xlu0 %1872
        %1874 = vrot.lane.b32.xlu0 %v851, 8
        %v1875 = vpop.permute.xlu0 %1874
        %1876 = vrot.lane.b32.xlu0 %v852, 8
        %v1877 = vpop.permute.xlu0 %1876
        %1878 = vrot.lane.b32.xlu0 %v853, 8
        %v1879 = vpop.permute.xlu0 %1878
        %1880 = vrot.lane.b32.xlu0 %v854, 8
        %v1881 = vpop.permute.xlu0 %1880
        %1882 = vrot.lane.b32.xlu0 %v855, 8
        %v1883 = vpop.permute.xlu0 %1882
        %1884 = vrot.lane.b32.xlu0 %v856, 8
        %v1885 = vpop.permute.xlu0 %1884
        %1886 = vrot.lane.b32.xlu0 %v857, 8
        %v1887 = vpop.permute.xlu0 %1886
        %1888 = vrot.lane.b32.xlu0 %v858, 8
        %v1889 = vpop.permute.xlu0 %1888
        %1890 = vrot.lane.b32.xlu0 %v859, 8
        %v1891 = vpop.permute.xlu0 %1890
        %1892 = vrot.lane.b32.xlu0 %v860, 8
        %v1893 = vpop.permute.xlu0 %1892
        %v1910 = vunpack.c.l.b16 %v1574
        %v1911 = vunpack.c.l.b16 %v1575
        %v1912 = vunpack.c.l.b16 %v1576
        %v1913 = vunpack.c.l.b16 %v1577
        %v1914 = vunpack.c.l.b16 %v1578
        %v1915 = vunpack.c.l.b16 %v1579
        %v1916 = vunpack.c.l.b16 %v1580
        %v1917 = vunpack.c.l.b16 %v1581
        %v1918 = vunpack.c.l.b16 %v1582
        %v1919 = vunpack.c.l.b16 %v1583
        %v1920 = vunpack.c.l.b16 %v1584
        %v1921 = vunpack.c.l.b16 %v1585
        %v1922 = vunpack.c.l.b16 %v1586
        %v1923 = vunpack.c.l.b16 %v1587
        %v1924 = vunpack.c.l.b16 %v1588
        %v1925 = vunpack.c.l.b16 %v1589
        %v1926 = vpack.c.b16 %v734, %v1910
        %v1927 = vpack.c.b16 %v736, %v1911
        %v1928 = vpack.c.b16 %v738, %v1912
        %v1929 = vpack.c.b16 %v740, %v1913
        %v1930 = vpack.c.b16 %v742, %v1914
        %v1931 = vpack.c.b16 %v744, %v1915
        %v1932 = vpack.c.b16 %v746, %v1916
        %v1933 = vpack.c.b16 %v748, %v1917
        %v1934 = vpack.c.b16 %v750, %v1918
        %v1935 = vpack.c.b16 %v752, %v1919
        %v1936 = vpack.c.b16 %v754, %v1920
        %v1937 = vpack.c.b16 %v756, %v1921
        %v1938 = vpack.c.b16 %v758, %v1922
        %v1939 = vpack.c.b16 %v760, %v1923
        %v1940 = vpack.c.b16 %v762, %v1924
        %v1941 = vpack.c.b16 %v764, %v1925
        %v1943 = vshrl.u32 %v1926, 16
        %v1945 = vshll.u32 %v1926, 16
        %v1947 = vrot.slane %v1945, 1
        %v1948 = vor.u32 %v1943, %v1947
        %v1949 = vsel %vm476, %v1948, %v871
        %v1950 = vshrl.u32 %v845, 16
        %v1953 = vshrl.u32 %v1927, 16
        %v1955 = vshll.u32 %v1927, 16
        %v1957 = vrot.slane %v1955, 1
        %v1958 = vor.u32 %v1953, %v1957
        %v1959 = vsel %vm476, %v1958, %v883
        %v1960 = vshrl.u32 %v846, 16
        %v1963 = vshrl.u32 %v1928, 16
        %v1965 = vshll.u32 %v1928, 16
        %v1967 = vrot.slane %v1965, 1
        %v1968 = vor.u32 %v1963, %v1967
        %v1969 = vsel %vm476, %v1968, %v895
        %v1970 = vshrl.u32 %v847, 16
        %v1973 = vshrl.u32 %v1929, 16
        %v1975 = vshll.u32 %v1929, 16
        %v1977 = vrot.slane %v1975, 1
        %v1978 = vor.u32 %v1973, %v1977
        %v1979 = vsel %vm476, %v1978, %v907
        %v1980 = vshrl.u32 %v848, 16
        %v1983 = vshrl.u32 %v1930, 16
        %v1985 = vshll.u32 %v1930, 16
        %v1987 = vrot.slane %v1985, 1
        %v1988 = vor.u32 %v1983, %v1987
        %v1989 = vsel %vm476, %v1988, %v919
        %v1990 = vshrl.u32 %v849, 16
        %v1993 = vshrl.u32 %v1931, 16
        %v1995 = vshll.u32 %v1931, 16
        %v1997 = vrot.slane %v1995, 1
        %v1998 = vor.u32 %v1993, %v1997
        %v1999 = vsel %vm476, %v1998, %v931
        %v2000 = vshrl.u32 %v850, 16
        %v2003 = vshrl.u32 %v1932, 16
        %v2005 = vshll.u32 %v1932, 16
        %v2007 = vrot.slane %v2005, 1
        %v2008 = vor.u32 %v2003, %v2007
        %v2009 = vsel %vm476, %v2008, %v943
        %v2010 = vshrl.u32 %v851, 16
        %v2013 = vshrl.u32 %v1933, 16
        %v2015 = vshll.u32 %v1933, 16
        %v2017 = vrot.slane %v2015, 1
        %v2018 = vor.u32 %v2013, %v2017
        %v2019 = vsel %vm476, %v2018, %v955
        %v2020 = vshrl.u32 %v852, 16
        %v2023 = vshrl.u32 %v1934, 16
        %v2025 = vshll.u32 %v1934, 16
        %v2027 = vrot.slane %v2025, 1
        %v2028 = vor.u32 %v2023, %v2027
        %v2029 = vsel %vm476, %v2028, %v967
        %v2030 = vshrl.u32 %v853, 16
        %v2033 = vshrl.u32 %v1935, 16
        %v2035 = vshll.u32 %v1935, 16
        %v2037 = vrot.slane %v2035, 1
        %v2038 = vor.u32 %v2033, %v2037
        %v2039 = vsel %vm476, %v2038, %v979
        %v2040 = vshrl.u32 %v854, 16
        %v2043 = vshrl.u32 %v1936, 16
        %v2045 = vshll.u32 %v1936, 16
        %v2047 = vrot.slane %v2045, 1
        %v2048 = vor.u32 %v2043, %v2047
        %v2049 = vsel %vm476, %v2048, %v991
        %v2050 = vshrl.u32 %v855, 16
        %v2053 = vshrl.u32 %v1937, 16
        %v2055 = vshll.u32 %v1937, 16
        %v2057 = vrot.slane %v2055, 1
        %v2058 = vor.u32 %v2053, %v2057
        %v2059 = vsel %vm476, %v2058, %v1003
        %v2060 = vshrl.u32 %v856, 16
        %v2063 = vshrl.u32 %v1938, 16
        %v2065 = vshll.u32 %v1938, 16
        %v2067 = vrot.slane %v2065, 1
        %v2068 = vor.u32 %v2063, %v2067
        %v2069 = vsel %vm476, %v2068, %v1015
        %v2070 = vshrl.u32 %v857, 16
        %v2073 = vshrl.u32 %v1939, 16
        %v2075 = vshll.u32 %v1939, 16
        %v2077 = vrot.slane %v2075, 1
        %v2078 = vor.u32 %v2073, %v2077
        %v2079 = vsel %vm476, %v2078, %v1027
        %v2080 = vshrl.u32 %v858, 16
        %v2083 = vshrl.u32 %v1940, 16
        %v2085 = vshll.u32 %v1940, 16
        %v2087 = vrot.slane %v2085, 1
        %v2088 = vor.u32 %v2083, %v2087
        %v2089 = vsel %vm476, %v2088, %v1039
        %v2090 = vshrl.u32 %v859, 16
        %v2093 = vshrl.u32 %v1941, 16
        %v2095 = vshll.u32 %v1941, 16
        %v2097 = vrot.slane %v2095, 1
        %v2098 = vor.u32 %v2093, %v2097
        %v2099 = vsel %vm476, %v2098, %v1051
        %v2100 = vshrl.u32 %v860, 16
        %2102 = vrot.lane.b32.xlu0 %v1949, 12
        %v2103 = vpop.permute.xlu0 %2102
        %2104 = vrot.lane.b32.xlu0 %v1950, 12
        %v2105 = vpop.permute.xlu0 %2104
        %2106 = vrot.lane.b32.xlu0 %v1959, 12
        %v2107 = vpop.permute.xlu0 %2106
        %2108 = vrot.lane.b32.xlu0 %v1960, 12
        %v2109 = vpop.permute.xlu0 %2108
        %2110 = vrot.lane.b32.xlu0 %v1969, 12
        %v2111 = vpop.permute.xlu0 %2110
        %2112 = vrot.lane.b32.xlu0 %v1970, 12
        %v2113 = vpop.permute.xlu0 %2112
        %2114 = vrot.lane.b32.xlu0 %v1979, 12
        %v2115 = vpop.permute.xlu0 %2114
        %2116 = vrot.lane.b32.xlu0 %v1980, 12
        %v2117 = vpop.permute.xlu0 %2116
        %2118 = vrot.lane.b32.xlu0 %v1989, 12
        %v2119 = vpop.permute.xlu0 %2118
        %2120 = vrot.lane.b32.xlu0 %v1990, 12
        %v2121 = vpop.permute.xlu0 %2120
        %2122 = vrot.lane.b32.xlu0 %v1999, 12
        %v2123 = vpop.permute.xlu0 %2122
        %2124 = vrot.lane.b32.xlu0 %v2000, 12
        %v2125 = vpop.permute.xlu0 %2124
        %2126 = vrot.lane.b32.xlu0 %v2009, 12
        %v2127 = vpop.permute.xlu0 %2126
        %2128 = vrot.lane.b32.xlu0 %v2010, 12
        %v2129 = vpop.permute.xlu0 %2128
        %2130 = vrot.lane.b32.xlu0 %v2019, 12
        %v2131 = vpop.permute.xlu0 %2130
        %2132 = vrot.lane.b32.xlu0 %v2020, 12
        %v2133 = vpop.permute.xlu0 %2132
        %2134 = vrot.lane.b32.xlu0 %v2029, 12
        %v2135 = vpop.permute.xlu0 %2134
        %2136 = vrot.lane.b32.xlu0 %v2030, 12
        %v2137 = vpop.permute.xlu0 %2136
        %2138 = vrot.lane.b32.xlu0 %v2039, 12
        %v2139 = vpop.permute.xlu0 %2138
        %2140 = vrot.lane.b32.xlu0 %v2040, 12
        %v2141 = vpop.permute.xlu0 %2140
        %2142 = vrot.lane.b32.xlu0 %v2049, 12
        %v2143 = vpop.permute.xlu0 %2142
        %2144 = vrot.lane.b32.xlu0 %v2050, 12
        %v2145 = vpop.permute.xlu0 %2144
        %2146 = vrot.lane.b32.xlu0 %v2059, 12
        %v2147 = vpop.permute.xlu0 %2146
        %2148 = vrot.lane.b32.xlu0 %v2060, 12
        %v2149 = vpop.permute.xlu0 %2148
        %2150 = vrot.lane.b32.xlu0 %v2069, 12
        %v2151 = vpop.permute.xlu0 %2150
        %2152 = vrot.lane.b32.xlu0 %v2070, 12
        %v2153 = vpop.permute.xlu0 %2152
        %2154 = vrot.lane.b32.xlu0 %v2079, 12
        %v2155 = vpop.permute.xlu0 %2154
        %2156 = vrot.lane.b32.xlu0 %v2080, 12
        %v2157 = vpop.permute.xlu0 %2156
        %2158 = vrot.lane.b32.xlu0 %v2089, 12
        %v2159 = vpop.permute.xlu0 %2158
        %2160 = vrot.lane.b32.xlu0 %v2090, 12
        %v2161 = vpop.permute.xlu0 %2160
        %2162 = vrot.lane.b32.xlu0 %v2099, 12
        %v2163 = vpop.permute.xlu0 %2162
        %2164 = vrot.lane.b32.xlu0 %v2100, 12
        %v2165 = vpop.permute.xlu0 %2164
        %v2167 = vsel %vm1085, %v412, %v1799
        %v2169 = vsel %vm1085, %v460, %v1801
        %v2171 = vsel %vm1085, %v413, %v1803
        %v2173 = vsel %vm1085, %v461, %v1805
        %v2175 = vsel %vm1085, %v414, %v1807
        %v2177 = vsel %vm1085, %v462, %v1809
        %v2179 = vsel %vm1085, %v415, %v1811
        %v2181 = vsel %vm1085, %v463, %v1813
        %v2183 = vsel %vm1085, %v416, %v1815
        %v2185 = vsel %vm1085, %v464, %v1817
        %v2187 = vsel %vm1085, %v417, %v1819
        %v2189 = vsel %vm1085, %v465, %v1821
        %v2191 = vsel %vm1085, %v418, %v1823
        %v2193 = vsel %vm1085, %v466, %v1825
        %v2195 = vsel %vm1085, %v419, %v1827
        %v2197 = vsel %vm1085, %v467, %v1829
        %v2199 = vsel %vm1085, %v420, %v1831
        %v2201 = vsel %vm1085, %v468, %v1833
        %v2203 = vsel %vm1085, %v421, %v1835
        %v2205 = vsel %vm1085, %v469, %v1837
        %v2207 = vsel %vm1085, %v422, %v1839
        %v2209 = vsel %vm1085, %v470, %v1841
        %v2211 = vsel %vm1085, %v423, %v1843
        %v2213 = vsel %vm1085, %v471, %v1845
        %v2215 = vsel %vm1085, %v424, %v1847
        %v2217 = vsel %vm1085, %v472, %v1849
        %v2219 = vsel %vm1085, %v425, %v1851
        %v2221 = vsel %vm1085, %v473, %v1853
        %v2223 = vsel %vm1085, %v426, %v1855
        %v2225 = vsel %vm1085, %v474, %v1857
        %v2227 = vsel %vm1085, %v427, %v1859
        %v2229 = vsel %vm1085, %v475, %v1861
        %v2230 = vsel %vm1118, %v2167, %v782
        %v2232 = vsel %vm1118, %v2169, %v1863
        %v2233 = vsel %vm1118, %v2171, %v784
        %v2235 = vsel %vm1118, %v2173, %v1865
        %v2236 = vsel %vm1118, %v2175, %v786
        %v2238 = vsel %vm1118, %v2177, %v1867
        %v2239 = vsel %vm1118, %v2179, %v788
        %v2241 = vsel %vm1118, %v2181, %v1869
        %v2242 = vsel %vm1118, %v2183, %v790
        %v2244 = vsel %vm1118, %v2185, %v1871
        %v2245 = vsel %vm1118, %v2187, %v792
        %v2247 = vsel %vm1118, %v2189, %v1873
        %v2248 = vsel %vm1118, %v2191, %v794
        %v2250 = vsel %vm1118, %v2193, %v1875
        %v2251 = vsel %vm1118, %v2195, %v796
        %v2253 = vsel %vm1118, %v2197, %v1877
        %v2254 = vsel %vm1118, %v2199, %v798
        %v2256 = vsel %vm1118, %v2201, %v1879
        %v2257 = vsel %vm1118, %v2203, %v800
        %v2259 = vsel %vm1118, %v2205, %v1881
        %v2260 = vsel %vm1118, %v2207, %v802
        %v2262 = vsel %vm1118, %v2209, %v1883
        %v2263 = vsel %vm1118, %v2211, %v804
        %v2265 = vsel %vm1118, %v2213, %v1885
        %v2266 = vsel %vm1118, %v2215, %v806
        %v2268 = vsel %vm1118, %v2217, %v1887
        %v2269 = vsel %vm1118, %v2219, %v808
        %v2271 = vsel %vm1118, %v2221, %v1889
        %v2272 = vsel %vm1118, %v2223, %v810
        %v2274 = vsel %vm1118, %v2225, %v1891
        %v2275 = vsel %vm1118, %v2227, %v812
        %v2277 = vsel %vm1118, %v2229, %v1893
        %v2279 = vsel %vm1151, %v2230, %v2103
        %v2281 = vsel %vm1151, %v2232, %v2105
        %v2283 = vsel %vm1151, %v2233, %v2107
        %v2285 = vsel %vm1151, %v2235, %v2109
        %v2287 = vsel %vm1151, %v2236, %v2111
        %v2289 = vsel %vm1151, %v2238, %v2113
        %v2291 = vsel %vm1151, %v2239, %v2115
        %v2293 = vsel %vm1151, %v2241, %v2117
        %v2295 = vsel %vm1151, %v2242, %v2119
        %v2297 = vsel %vm1151, %v2244, %v2121
        %v2299 = vsel %vm1151, %v2245, %v2123
        %v2301 = vsel %vm1151, %v2247, %v2125
        %v2303 = vsel %vm1151, %v2248, %v2127
        %v2305 = vsel %vm1151, %v2250, %v2129
        %v2307 = vsel %vm1151, %v2251, %v2131
        %v2309 = vsel %vm1151, %v2253, %v2133
        %v2311 = vsel %vm1151, %v2254, %v2135
        %v2313 = vsel %vm1151, %v2256, %v2137
        %v2315 = vsel %vm1151, %v2257, %v2139
        %v2317 = vsel %vm1151, %v2259, %v2141
        %v2319 = vsel %vm1151, %v2260, %v2143
        %v2321 = vsel %vm1151, %v2262, %v2145
        %v2323 = vsel %vm1151, %v2263, %v2147
        %v2325 = vsel %vm1151, %v2265, %v2149
        %v2327 = vsel %vm1151, %v2266, %v2151
        %v2329 = vsel %vm1151, %v2268, %v2153
        %v2331 = vsel %vm1151, %v2269, %v2155
        %v2333 = vsel %vm1151, %v2271, %v2157
        %v2335 = vsel %vm1151, %v2272, %v2159
        %v2337 = vsel %vm1151, %v2274, %v2161
        %v2339 = vsel %vm1151, %v2275, %v2163
        %v2341 = vsel %vm1151, %v2277, %v2165
        %v2342 = vshrl.u32 %v2279, 16
        %v2344 = vshll.u32 %v2279, 16
        %v2346 = vrot.slane %v2344, 1
        %v2347 = vor.u32 %v2342, %v2346
        %v2348 = vshll.u32 %v2281, 16
        %v2350 = vrot.slane %v2348, 1
        %v2351 = vsel %vm476, %v2347, %v2350
        %v2352 = vshrl.u32 %v2283, 16
        %v2354 = vshll.u32 %v2283, 16
        %v2356 = vrot.slane %v2354, 1
        %v2357 = vor.u32 %v2352, %v2356
        %v2358 = vshll.u32 %v2285, 16
        %v2360 = vrot.slane %v2358, 1
        %v2361 = vsel %vm476, %v2357, %v2360
        %v2362 = vshrl.u32 %v2287, 16
        %v2364 = vshll.u32 %v2287, 16
        %v2366 = vrot.slane %v2364, 1
        %v2367 = vor.u32 %v2362, %v2366
        %v2368 = vshll.u32 %v2289, 16
        %v2370 = vrot.slane %v2368, 1
        %v2371 = vsel %vm476, %v2367, %v2370
        %v2372 = vshrl.u32 %v2291, 16
        %v2374 = vshll.u32 %v2291, 16
        %v2376 = vrot.slane %v2374, 1
        %v2377 = vor.u32 %v2372, %v2376
        %v2378 = vshll.u32 %v2293, 16
        %v2380 = vrot.slane %v2378, 1
        %v2381 = vsel %vm476, %v2377, %v2380
        %v2382 = vshrl.u32 %v2295, 16
        %v2384 = vshll.u32 %v2295, 16
        %v2386 = vrot.slane %v2384, 1
        %v2387 = vor.u32 %v2382, %v2386
        %v2388 = vshll.u32 %v2297, 16
        %v2390 = vrot.slane %v2388, 1
        %v2391 = vsel %vm476, %v2387, %v2390
        %v2392 = vshrl.u32 %v2299, 16
        %v2394 = vshll.u32 %v2299, 16
        %v2396 = vrot.slane %v2394, 1
        %v2397 = vor.u32 %v2392, %v2396
        %v2398 = vshll.u32 %v2301, 16
        %v2400 = vrot.slane %v2398, 1
        %v2401 = vsel %vm476, %v2397, %v2400
        %v2402 = vshrl.u32 %v2303, 16
        %v2404 = vshll.u32 %v2303, 16
        %v2406 = vrot.slane %v2404, 1
        %v2407 = vor.u32 %v2402, %v2406
        %v2408 = vshll.u32 %v2305, 16
        %v2410 = vrot.slane %v2408, 1
        %v2411 = vsel %vm476, %v2407, %v2410
        %v2412 = vshrl.u32 %v2307, 16
        %v2414 = vshll.u32 %v2307, 16
        %v2416 = vrot.slane %v2414, 1
        %v2417 = vor.u32 %v2412, %v2416
        %v2418 = vshll.u32 %v2309, 16
        %v2420 = vrot.slane %v2418, 1
        %v2421 = vsel %vm476, %v2417, %v2420
        %v2422 = vshrl.u32 %v2311, 16
        %v2424 = vshll.u32 %v2311, 16
        %v2426 = vrot.slane %v2424, 1
        %v2427 = vor.u32 %v2422, %v2426
        %v2428 = vshll.u32 %v2313, 16
        %v2430 = vrot.slane %v2428, 1
        %v2431 = vsel %vm476, %v2427, %v2430
        %v2432 = vshrl.u32 %v2315, 16
        %v2434 = vshll.u32 %v2315, 16
        %v2436 = vrot.slane %v2434, 1
        %v2437 = vor.u32 %v2432, %v2436
        %v2438 = vshll.u32 %v2317, 16
        %v2440 = vrot.slane %v2438, 1
        %v2441 = vsel %vm476, %v2437, %v2440
        %v2442 = vshrl.u32 %v2319, 16
        %v2444 = vshll.u32 %v2319, 16
        %v2446 = vrot.slane %v2444, 1
        %v2447 = vor.u32 %v2442, %v2446
        %v2448 = vshll.u32 %v2321, 16
        %v2450 = vrot.slane %v2448, 1
        %v2451 = vsel %vm476, %v2447, %v2450
        %v2452 = vshrl.u32 %v2323, 16
        %v2454 = vshll.u32 %v2323, 16
        %v2456 = vrot.slane %v2454, 1
        %v2457 = vor.u32 %v2452, %v2456
        %v2458 = vshll.u32 %v2325, 16
        %v2460 = vrot.slane %v2458, 1
        %v2461 = vsel %vm476, %v2457, %v2460
        %v2462 = vshrl.u32 %v2327, 16
        %v2464 = vshll.u32 %v2327, 16
        %v2466 = vrot.slane %v2464, 1
        %v2467 = vor.u32 %v2462, %v2466
        %v2468 = vshll.u32 %v2329, 16
        %v2470 = vrot.slane %v2468, 1
        %v2471 = vsel %vm476, %v2467, %v2470
        %v2472 = vshrl.u32 %v2331, 16
        %v2474 = vshll.u32 %v2331, 16
        %v2476 = vrot.slane %v2474, 1
        %v2477 = vor.u32 %v2472, %v2476
        %v2478 = vshll.u32 %v2333, 16
        %v2480 = vrot.slane %v2478, 1
        %v2481 = vsel %vm476, %v2477, %v2480
        %v2482 = vshrl.u32 %v2335, 16
        %v2484 = vshll.u32 %v2335, 16
        %v2486 = vrot.slane %v2484, 1
        %v2487 = vor.u32 %v2482, %v2486
        %v2488 = vshll.u32 %v2337, 16
        %v2490 = vrot.slane %v2488, 1
        %v2491 = vsel %vm476, %v2487, %v2490
        %v2492 = vshrl.u32 %v2339, 16
        %v2494 = vshll.u32 %v2339, 16
        %v2496 = vrot.slane %v2494, 1
        %v2497 = vor.u32 %v2492, %v2496
        %v2498 = vshll.u32 %v2341, 16
        %v2500 = vrot.slane %v2498, 1
        %v2501 = vsel %vm476, %v2497, %v2500
        %s2502 = scalar_lea.vmem %s1, 8
        %v2503 = vld [vmem:[%s2502] sm:$0xf]
        %v2504 = vld [vmem:[%s2502 + $0x4] sm:$0xf]
        %v2507 = vunpack.c.l.b16 %v2503
        %v2508 = vunpack.c.l.b16 %v2504
        %v2509 = vpack.c.b16 %v2508, %v2507
        %v2512 = vsel %vm1192, %v2351, 0
        %v2515 = vsel %vm1192, %v2361, 0
        %v2518 = vsel %vm1192, %v2371, 0
        %v2521 = vsel %vm1192, %v2381, 0
        %v2524 = vsel %vm1192, %v2391, 0
        %v2527 = vsel %vm1192, %v2401, 0
        %v2530 = vsel %vm1192, %v2411, 0
        %v2533 = vsel %vm1192, %v2421, 0
        %v2536 = vsel %vm1192, %v2431, 0
        %v2539 = vsel %vm1192, %v2441, 0
        %v2542 = vsel %vm1192, %v2451, 0
        %v2545 = vsel %vm1192, %v2461, 0
        %v2548 = vsel %vm1192, %v2471, 0
        %v2551 = vsel %vm1192, %v2481, 0
        %v2554 = vsel %vm1192, %v2491, 0
        %v2557 = vsel %vm1192, %v2501, 0
        %2559 = vmatprep.subr.bf16.mxu0 0
        %2560 = vmatpush1.bf16.msra.mxu0 0
        %2561 = vmatprep.subr.bf16.mxu0 0
        %2562 = vmatpush1.bf16.msra.mxu0 0
        %2563 = vmatprep.subr.bf16.mxu0 0
        %2564 = vmatpush1.bf16.msra.mxu0 0
        %2565 = vmatprep.subr.bf16.mxu0 0
        %2566 = vmatpush1.bf16.msra.mxu0 0
        %2567 = vmatprep.subr.bf16.mxu0 0
        %2568 = vmatpush1.bf16.msra.mxu0 0
        %2569 = vmatprep.subr.bf16.mxu0 0
        %2570 = vmatpush1.bf16.msra.mxu0 0
        %2571 = vmatprep.subr.bf16.mxu0 0
        %2572 = vmatpush1.bf16.msra.mxu0 0
        %2573 = vmatprep.subr.bf16.mxu0 0
        %2574 = vmatpush1.bf16.msra.mxu0 %v2509
        %2575 = vmatprep.subr.bf16.mxu0 0
        %2576 = vmatpush2.bf16.msra.mxu0 0
        %2577 = vmatprep.subr.bf16.mxu0 0
        %2578 = vmatpush2.bf16.msra.mxu0 0
        %2579 = vmatprep.subr.bf16.mxu0 0
        %2580 = vmatpush2.bf16.msra.mxu0 0
        %2581 = vmatprep.subr.bf16.mxu0 0
        %2582 = vmatpush2.bf16.msra.mxu0 0
        %2583 = vmatprep.subr.bf16.mxu0 0
        %2584 = vmatpush2.bf16.msra.mxu0 0
        %2585 = vmatprep.subr.bf16.mxu0 0
        %2586 = vmatpush2.bf16.msra.mxu0 0
        %2587 = vmatprep.subr.bf16.mxu0 0
        %2588 = vmatpush2.bf16.msra.mxu0 0
        %2589 = vmatprep.subr.bf16.mxu0 0
        %2590 = vmatpush2.bf16.msra.mxu0 0
        %2591 = vmatprep.mubr.bf16.mxu0 0
        %2592 = vmatmul.mubr.bf16.gmra.mxu0 %v2512
        %v2593 = vpop.f32.mrf.mxu0
        %v2594 = vadd.f32 0.0, %v2593
        %v2595 = vpop.f32.mrf.mxu0
        %v2596 = vpop.f32.mrf.mxu0
        %v2597 = vadd.f32 0.0, %v2596
        %v2598 = vpop.f32.mrf.mxu0
        %2599 = vmatprep.mubr.bf16.mxu0 0
        %2600 = vmatmul.mubr.bf16.gmra.mxu0 %v2515
        %v2601 = vpop.f32.mrf.mxu0
        %v2602 = vadd.f32 0.0, %v2601
        %v2603 = vpop.f32.mrf.mxu0
        %v2604 = vpop.f32.mrf.mxu0
        %v2605 = vadd.f32 0.0, %v2604
        %v2606 = vpop.f32.mrf.mxu0
        %2607 = vmatprep.mubr.bf16.mxu0 0
        %2608 = vmatmul.mubr.bf16.gmra.mxu0 %v2518
        %v2609 = vpop.f32.mrf.mxu0
        %v2610 = vadd.f32 0.0, %v2609
        %v2611 = vpop.f32.mrf.mxu0
        %v2612 = vpop.f32.mrf.mxu0
        %v2613 = vadd.f32 0.0, %v2612
        %v2614 = vpop.f32.mrf.mxu0
        %2615 = vmatprep.mubr.bf16.mxu0 0
        %2616 = vmatmul.mubr.bf16.gmra.mxu0 %v2521
        %v2617 = vpop.f32.mrf.mxu0
        %v2618 = vadd.f32 0.0, %v2617
        %v2619 = vpop.f32.mrf.mxu0
        %v2620 = vpop.f32.mrf.mxu0
        %v2621 = vadd.f32 0.0, %v2620
        %v2622 = vpop.f32.mrf.mxu0
        %2623 = vmatprep.mubr.bf16.mxu0 0
        %2624 = vmatmul.mubr.bf16.gmra.mxu0 %v2524
        %v2625 = vpop.f32.mrf.mxu0
        %v2626 = vadd.f32 0.0, %v2625
        %v2627 = vpop.f32.mrf.mxu0
        %v2628 = vpop.f32.mrf.mxu0
        %v2629 = vadd.f32 0.0, %v2628
        %v2630 = vpop.f32.mrf.mxu0
        %2631 = vmatprep.mubr.bf16.mxu0 0
        %2632 = vmatmul.mubr.bf16.gmra.mxu0 %v2527
        %v2633 = vpop.f32.mrf.mxu0
        %v2634 = vadd.f32 0.0, %v2633
        %v2635 = vpop.f32.mrf.mxu0
        %v2636 = vpop.f32.mrf.mxu0
        %v2637 = vadd.f32 0.0, %v2636
        %v2638 = vpop.f32.mrf.mxu0
        %2639 = vmatprep.mubr.bf16.mxu0 0
        %2640 = vmatmul.mubr.bf16.gmra.mxu0 %v2530
        %v2641 = vpop.f32.mrf.mxu0
        %v2642 = vadd.f32 0.0, %v2641
        %v2643 = vpop.f32.mrf.mxu0
        %v2644 = vpop.f32.mrf.mxu0
        %v2645 = vadd.f32 0.0, %v2644
        %v2646 = vpop.f32.mrf.mxu0
        %2647 = vmatprep.mubr.bf16.mxu0 0
        %2648 = vmatmul.mubr.bf16.gmra.mxu0 %v2533
        %v2649 = vpop.f32.mrf.mxu0
        %v2650 = vadd.f32 0.0, %v2649
        %v2651 = vpop.f32.mrf.mxu0
        %v2652 = vpop.f32.mrf.mxu0
        %v2653 = vadd.f32 0.0, %v2652
        %v2654 = vpop.f32.mrf.mxu0
        %2655 = vmatprep.mubr.bf16.mxu0 0
        %2656 = vmatmul.mubr.bf16.gmra.mxu0 %v2536
        %v2657 = vpop.f32.mrf.mxu0
        %v2658 = vadd.f32 0.0, %v2657
        %v2659 = vpop.f32.mrf.mxu0
        %v2660 = vpop.f32.mrf.mxu0
        %v2661 = vadd.f32 0.0, %v2660
        %v2662 = vpop.f32.mrf.mxu0
        %2663 = vmatprep.mubr.bf16.mxu0 0
        %2664 = vmatmul.mubr.bf16.gmra.mxu0 %v2539
        %v2665 = vpop.f32.mrf.mxu0
        %v2666 = vadd.f32 0.0, %v2665
        %v2667 = vpop.f32.mrf.mxu0
        %v2668 = vpop.f32.mrf.mxu0
        %v2669 = vadd.f32 0.0, %v2668
        %v2670 = vpop.f32.mrf.mxu0
        %2671 = vmatprep.mubr.bf16.mxu0 0
        %2672 = vmatmul.mubr.bf16.gmra.mxu0 %v2542
        %v2673 = vpop.f32.mrf.mxu0
        %v2674 = vadd.f32 0.0, %v2673
        %v2675 = vpop.f32.mrf.mxu0
        %v2676 = vpop.f32.mrf.mxu0
        %v2677 = vadd.f32 0.0, %v2676
        %v2678 = vpop.f32.mrf.mxu0
        %2679 = vmatprep.mubr.bf16.mxu0 0
        %2680 = vmatmul.mubr.bf16.gmra.mxu0 %v2545
        %v2681 = vpop.f32.mrf.mxu0
        %v2682 = vadd.f32 0.0, %v2681
        %v2683 = vpop.f32.mrf.mxu0
        %v2684 = vpop.f32.mrf.mxu0
        %v2685 = vadd.f32 0.0, %v2684
        %v2686 = vpop.f32.mrf.mxu0
        %2687 = vmatprep.mubr.bf16.mxu0 0
        %2688 = vmatmul.mubr.bf16.gmra.mxu0 %v2548
        %v2689 = vpop.f32.mrf.mxu0
        %v2690 = vadd.f32 0.0, %v2689
        %v2691 = vpop.f32.mrf.mxu0
        %v2692 = vpop.f32.mrf.mxu0
        %v2693 = vadd.f32 0.0, %v2692
        %v2694 = vpop.f32.mrf.mxu0
        %2695 = vmatprep.mubr.bf16.mxu0 0
        %2696 = vmatmul.mubr.bf16.gmra.mxu0 %v2551
        %v2697 = vpop.f32.mrf.mxu0
        %v2698 = vadd.f32 0.0, %v2697
        %v2699 = vpop.f32.mrf.mxu0
        %v2700 = vpop.f32.mrf.mxu0
        %v2701 = vadd.f32 0.0, %v2700
        %v2702 = vpop.f32.mrf.mxu0
        %2703 = vmatprep.mubr.bf16.mxu0 0
        %2704 = vmatmul.mubr.bf16.gmra.mxu0 %v2554
        %v2705 = vpop.f32.mrf.mxu0
        %v2706 = vadd.f32 0.0, %v2705
        %v2707 = vpop.f32.mrf.mxu0
        %v2708 = vpop.f32.mrf.mxu0
        %v2709 = vadd.f32 0.0, %v2708
        %v2710 = vpop.f32.mrf.mxu0
        %2711 = vmatprep.mubr.bf16.mxu0 0
        %2712 = vmatmul.mubr.bf16.gmra.mxu0 %v2557
        %v2713 = vpop.f32.mrf.mxu0
        %v2714 = vadd.f32 0.0, %v2713
        %v2715 = vpop.f32.mrf.mxu0
        %v2716 = vpop.f32.mrf.mxu0
        %v2717 = vadd.f32 0.0, %v2716
        %v2718 = vpop.f32.mrf.mxu0
        %2719 = vdwg.mxu0
        %v2720 = vsel %vm1192, %v2594, 0.0
        %v2721 = vsel %vm1192, %v2597, 0.0
        %v2722 = vadd.f32 %v2720, %v2721
        %v2723 = vsel %vm1192, %v2602, 0.0
        %v2724 = vadd.f32 %v2722, %v2723
        %v2725 = vsel %vm1192, %v2605, 0.0
        %v2726 = vadd.f32 %v2724, %v2725
        %v2727 = vsel %vm1192, %v2610, 0.0
        %v2728 = vadd.f32 %v2726, %v2727
        %v2729 = vsel %vm1192, %v2613, 0.0
        %v2730 = vadd.f32 %v2728, %v2729
        %v2731 = vsel %vm1192, %v2618, 0.0
        %v2732 = vadd.f32 %v2730, %v2731
        %v2733 = vsel %vm1192, %v2621, 0.0
        %v2734 = vadd.f32 %v2732, %v2733
        %v2735 = vsel %vm1192, %v2626, 0.0
        %v2736 = vadd.f32 %v2734, %v2735
        %v2737 = vsel %vm1192, %v2629, 0.0
        %v2738 = vadd.f32 %v2736, %v2737
        %v2739 = vsel %vm1192, %v2634, 0.0
        %v2740 = vadd.f32 %v2738, %v2739
        %v2741 = vsel %vm1192, %v2637, 0.0
        %v2742 = vadd.f32 %v2740, %v2741
        %v2743 = vsel %vm1192, %v2642, 0.0
        %v2744 = vadd.f32 %v2742, %v2743
        %v2745 = vsel %vm1192, %v2645, 0.0
        %v2746 = vadd.f32 %v2744, %v2745
        %v2747 = vsel %vm1192, %v2650, 0.0
        %v2748 = vadd.f32 %v2746, %v2747
        %v2749 = vsel %vm1192, %v2653, 0.0
        %v2750 = vadd.f32 %v2748, %v2749
        %v2751 = vsel %vm1192, %v2658, 0.0
        %v2752 = vadd.f32 %v2750, %v2751
        %v2753 = vsel %vm1192, %v2661, 0.0
        %v2754 = vadd.f32 %v2752, %v2753
        %v2755 = vsel %vm1192, %v2666, 0.0
        %v2756 = vadd.f32 %v2754, %v2755
        %v2757 = vsel %vm1192, %v2669, 0.0
        %v2758 = vadd.f32 %v2756, %v2757
        %v2759 = vsel %vm1192, %v2674, 0.0
        %v2760 = vadd.f32 %v2758, %v2759
        %v2761 = vsel %vm1192, %v2677, 0.0
        %v2762 = vadd.f32 %v2760, %v2761
        %v2763 = vsel %vm1192, %v2682, 0.0
        %v2764 = vadd.f32 %v2762, %v2763
        %v2765 = vsel %vm1192, %v2685, 0.0
        %v2766 = vadd.f32 %v2764, %v2765
        %v2767 = vsel %vm1192, %v2690, 0.0
        %v2768 = vadd.f32 %v2766, %v2767
        %v2769 = vsel %vm1192, %v2693, 0.0
        %v2770 = vadd.f32 %v2768, %v2769
        %v2771 = vsel %vm1192, %v2698, 0.0
        %v2772 = vadd.f32 %v2770, %v2771
        %v2773 = vsel %vm1192, %v2701, 0.0
        %v2774 = vadd.f32 %v2772, %v2773
        %v2775 = vsel %vm1192, %v2706, 0.0
        %v2776 = vadd.f32 %v2774, %v2775
        %v2777 = vsel %vm1192, %v2709, 0.0
        %v2778 = vadd.f32 %v2776, %v2777
        %v2779 = vsel %vm1192, %v2714, 0.0
        %v2780 = vadd.f32 %v2778, %v2779
        %v2781 = vsel %vm1192, %v2717, 0.0
        %v2782 = vadd.f32 %v2780, %v2781
        %v2783 = vrot.slane %v2782, 4
        %v2784 = vadd.f32 %v2782, %v2783
        %v2785 = vrot.slane %v2784, 2
        %v2786 = vadd.f32 %v2784, %v2785
        %v2787 = vrot.slane %v2786, 1
        %v2788 = vadd.f32 %v2786, %v2787
        %v2789 = vadd.f32 %v1455, %v2788
        %v2790 = vmul.f32 %v2594, %v2594
        %v2791 = vmul.f32 %v2597, %v2597
        %v2792 = vmul.f32 %v2602, %v2602
        %v2793 = vmul.f32 %v2605, %v2605
        %v2794 = vmul.f32 %v2610, %v2610
        %v2795 = vmul.f32 %v2613, %v2613
        %v2796 = vmul.f32 %v2618, %v2618
        %v2797 = vmul.f32 %v2621, %v2621
        %v2798 = vmul.f32 %v2626, %v2626
        %v2799 = vmul.f32 %v2629, %v2629
        %v2800 = vmul.f32 %v2634, %v2634
        %v2801 = vmul.f32 %v2637, %v2637
        %v2802 = vmul.f32 %v2642, %v2642
        %v2803 = vmul.f32 %v2645, %v2645
        %v2804 = vmul.f32 %v2650, %v2650
        %v2805 = vmul.f32 %v2653, %v2653
        %v2806 = vmul.f32 %v2658, %v2658
        %v2807 = vmul.f32 %v2661, %v2661
        %v2808 = vmul.f32 %v2666, %v2666
        %v2809 = vmul.f32 %v2669, %v2669
        %v2810 = vmul.f32 %v2674, %v2674
        %v2811 = vmul.f32 %v2677, %v2677
        %v2812 = vmul.f32 %v2682, %v2682
        %v2813 = vmul.f32 %v2685, %v2685
        %v2814 = vmul.f32 %v2690, %v2690
        %v2815 = vmul.f32 %v2693, %v2693
        %v2816 = vmul.f32 %v2698, %v2698
        %v2817 = vmul.f32 %v2701, %v2701
        %v2818 = vmul.f32 %v2706, %v2706
        %v2819 = vmul.f32 %v2709, %v2709
        %v2820 = vmul.f32 %v2714, %v2714
        %v2821 = vmul.f32 %v2717, %v2717
        %v2822 = vsel %vm1192, %v2790, 0.0
        %v2823 = vsel %vm1192, %v2791, 0.0
        %v2824 = vadd.f32 %v2822, %v2823
        %v2825 = vsel %vm1192, %v2792, 0.0
        %v2826 = vadd.f32 %v2824, %v2825
        %v2827 = vsel %vm1192, %v2793, 0.0
        %v2828 = vadd.f32 %v2826, %v2827
        %v2829 = vsel %vm1192, %v2794, 0.0
        %v2830 = vadd.f32 %v2828, %v2829
        %v2831 = vsel %vm1192, %v2795, 0.0
        %v2832 = vadd.f32 %v2830, %v2831
        %v2833 = vsel %vm1192, %v2796, 0.0
        %v2834 = vadd.f32 %v2832, %v2833
        %v2835 = vsel %vm1192, %v2797, 0.0
        %v2836 = vadd.f32 %v2834, %v2835
        %v2837 = vsel %vm1192, %v2798, 0.0
        %v2838 = vadd.f32 %v2836, %v2837
        %v2839 = vsel %vm1192, %v2799, 0.0
        %v2840 = vadd.f32 %v2838, %v2839
        %v2841 = vsel %vm1192, %v2800, 0.0
        %v2842 = vadd.f32 %v2840, %v2841
        %v2843 = vsel %vm1192, %v2801, 0.0
        %v2844 = vadd.f32 %v2842, %v2843
        %v2845 = vsel %vm1192, %v2802, 0.0
        %v2846 = vadd.f32 %v2844, %v2845
        %v2847 = vsel %vm1192, %v2803, 0.0
        %v2848 = vadd.f32 %v2846, %v2847
        %v2849 = vsel %vm1192, %v2804, 0.0
        %v2850 = vadd.f32 %v2848, %v2849
        %v2851 = vsel %vm1192, %v2805, 0.0
        %v2852 = vadd.f32 %v2850, %v2851
        %v2853 = vsel %vm1192, %v2806, 0.0
        %v2854 = vadd.f32 %v2852, %v2853
        %v2855 = vsel %vm1192, %v2807, 0.0
        %v2856 = vadd.f32 %v2854, %v2855
        %v2857 = vsel %vm1192, %v2808, 0.0
        %v2858 = vadd.f32 %v2856, %v2857
        %v2859 = vsel %vm1192, %v2809, 0.0
        %v2860 = vadd.f32 %v2858, %v2859
        %v2861 = vsel %vm1192, %v2810, 0.0
        %v2862 = vadd.f32 %v2860, %v2861
        %v2863 = vsel %vm1192, %v2811, 0.0
        %v2864 = vadd.f32 %v2862, %v2863
        %v2865 = vsel %vm1192, %v2812, 0.0
        %v2866 = vadd.f32 %v2864, %v2865
        %v2867 = vsel %vm1192, %v2813, 0.0
        %v2868 = vadd.f32 %v2866, %v2867
        %v2869 = vsel %vm1192, %v2814, 0.0
        %v2870 = vadd.f32 %v2868, %v2869
        %v2871 = vsel %vm1192, %v2815, 0.0
        %v2872 = vadd.f32 %v2870, %v2871
        %v2873 = vsel %vm1192, %v2816, 0.0
        %v2874 = vadd.f32 %v2872, %v2873
        %v2875 = vsel %vm1192, %v2817, 0.0
        %v2876 = vadd.f32 %v2874, %v2875
        %v2877 = vsel %vm1192, %v2818, 0.0
        %v2878 = vadd.f32 %v2876, %v2877
        %v2879 = vsel %vm1192, %v2819, 0.0
        %v2880 = vadd.f32 %v2878, %v2879
        %v2881 = vsel %vm1192, %v2820, 0.0
        %v2882 = vadd.f32 %v2880, %v2881
        %v2883 = vsel %vm1192, %v2821, 0.0
        %v2884 = vadd.f32 %v2882, %v2883
        %v2885 = vrot.slane %v2884, 4
        %v2886 = vadd.f32 %v2884, %v2885
        %v2887 = vrot.slane %v2886, 2
        %v2888 = vadd.f32 %v2886, %v2887
        %v2889 = vrot.slane %v2888, 1
        %v2890 = vadd.f32 %v2888, %v2889
        %v2891 = vadd.f32 %v1557, %v2890
        %2924 = vrot.lane.b32.xlu0 %v2594, 16
        %v2925 = vpop.permute.xlu0 %2924
        %2926 = vrot.lane.b32.xlu0 %v2597, 16
        %v2927 = vpop.permute.xlu0 %2926
        %2928 = vrot.lane.b32.xlu0 %v2602, 16
        %v2929 = vpop.permute.xlu0 %2928
        %2930 = vrot.lane.b32.xlu0 %v2605, 16
        %v2931 = vpop.permute.xlu0 %2930
        %2932 = vrot.lane.b32.xlu0 %v2610, 16
        %v2933 = vpop.permute.xlu0 %2932
        %2934 = vrot.lane.b32.xlu0 %v2613, 16
        %v2935 = vpop.permute.xlu0 %2934
        %2936 = vrot.lane.b32.xlu0 %v2618, 16
        %v2937 = vpop.permute.xlu0 %2936
        %2938 = vrot.lane.b32.xlu0 %v2621, 16
        %v2939 = vpop.permute.xlu0 %2938
        %2940 = vrot.lane.b32.xlu0 %v2626, 16
        %v2941 = vpop.permute.xlu0 %2940
        %2942 = vrot.lane.b32.xlu0 %v2629, 16
        %v2943 = vpop.permute.xlu0 %2942
        %2944 = vrot.lane.b32.xlu0 %v2634, 16
        %v2945 = vpop.permute.xlu0 %2944
        %2946 = vrot.lane.b32.xlu0 %v2637, 16
        %v2947 = vpop.permute.xlu0 %2946
        %2948 = vrot.lane.b32.xlu0 %v2642, 16
        %v2949 = vpop.permute.xlu0 %2948
        %2950 = vrot.lane.b32.xlu0 %v2645, 16
        %v2951 = vpop.permute.xlu0 %2950
        %2952 = vrot.lane.b32.xlu0 %v2650, 16
        %v2953 = vpop.permute.xlu0 %2952
        %2954 = vrot.lane.b32.xlu0 %v2653, 16
        %v2955 = vpop.permute.xlu0 %2954
        %2956 = vrot.lane.b32.xlu0 %v2658, 16
        %v2957 = vpop.permute.xlu0 %2956
        %2958 = vrot.lane.b32.xlu0 %v2661, 16
        %v2959 = vpop.permute.xlu0 %2958
        %2960 = vrot.lane.b32.xlu0 %v2666, 16
        %v2961 = vpop.permute.xlu0 %2960
        %2962 = vrot.lane.b32.xlu0 %v2669, 16
        %v2963 = vpop.permute.xlu0 %2962
        %2964 = vrot.lane.b32.xlu0 %v2674, 16
        %v2965 = vpop.permute.xlu0 %2964
        %2966 = vrot.lane.b32.xlu0 %v2677, 16
        %v2967 = vpop.permute.xlu0 %2966
        %2968 = vrot.lane.b32.xlu0 %v2682, 16
        %v2969 = vpop.permute.xlu0 %2968
        %2970 = vrot.lane.b32.xlu0 %v2685, 16
        %v2971 = vpop.permute.xlu0 %2970
        %2972 = vrot.lane.b32.xlu0 %v2690, 16
        %v2973 = vpop.permute.xlu0 %2972
        %2974 = vrot.lane.b32.xlu0 %v2693, 16
        %v2975 = vpop.permute.xlu0 %2974
        %2976 = vrot.lane.b32.xlu0 %v2698, 16
        %v2977 = vpop.permute.xlu0 %2976
        %2978 = vrot.lane.b32.xlu0 %v2701, 16
        %v2979 = vpop.permute.xlu0 %2978
        %2980 = vrot.lane.b32.xlu0 %v2706, 16
        %v2981 = vpop.permute.xlu0 %2980
        %2982 = vrot.lane.b32.xlu0 %v2709, 16
        %v2983 = vpop.permute.xlu0 %2982
        %2984 = vrot.lane.b32.xlu0 %v2714, 16
        %v2985 = vpop.permute.xlu0 %2984
        %2986 = vrot.lane.b32.xlu0 %v2717, 16
        %v2987 = vpop.permute.xlu0 %2986
        %v3020 = vsel %vm1192, %v1260, %v2925
        %v3021 = vsel %vm1192, %v1263, %v2927
        %v3022 = vsel %vm1192, %v1268, %v2929
        %v3023 = vsel %vm1192, %v1271, %v2931
        %v3024 = vsel %vm1192, %v1276, %v2933
        %v3025 = vsel %vm1192, %v1279, %v2935
        %v3026 = vsel %vm1192, %v1284, %v2937
        %v3027 = vsel %vm1192, %v1287, %v2939
        %v3028 = vsel %vm1192, %v1292, %v2941
        %v3029 = vsel %vm1192, %v1295, %v2943
        %v3030 = vsel %vm1192, %v1300, %v2945
        %v3031 = vsel %vm1192, %v1303, %v2947
        %v3032 = vsel %vm1192, %v1308, %v2949
        %v3033 = vsel %vm1192, %v1311, %v2951
        %v3034 = vsel %vm1192, %v1316, %v2953
        %v3035 = vsel %vm1192, %v1319, %v2955
        %v3036 = vsel %vm1192, %v1324, %v2957
        %v3037 = vsel %vm1192, %v1327, %v2959
        %v3038 = vsel %vm1192, %v1332, %v2961
        %v3039 = vsel %vm1192, %v1335, %v2963
        %v3040 = vsel %vm1192, %v1340, %v2965
        %v3041 = vsel %vm1192, %v1343, %v2967
        %v3042 = vsel %vm1192, %v1348, %v2969
        %v3043 = vsel %vm1192, %v1351, %v2971
        %v3044 = vsel %vm1192, %v1356, %v2973
        %v3045 = vsel %vm1192, %v1359, %v2975
        %v3046 = vsel %vm1192, %v1364, %v2977
        %v3047 = vsel %vm1192, %v1367, %v2979
        %v3048 = vsel %vm1192, %v1372, %v2981
        %v3049 = vsel %vm1192, %v1375, %v2983
        %v3050 = vsel %vm1192, %v1380, %v2985
        %v3051 = vsel %vm1192, %v1383, %v2987
        %vm3052 = vcmask 261120
        %3053 = vst.msk [vmem:[%s244] sm:$0xff] %vm3052, %v3020
        %3054 = vst.msk [vmem:[%s244 + $0x8] sm:$0xff] %vm3052, %v3021
        %3055 = vst.msk [vmem:[%s244 + $0x20] sm:$0xff] %vm3052, %v3022
        %3056 = vst.msk [vmem:[%s244 + $0x28] sm:$0xff] %vm3052, %v3023
        %3057 = vst.msk [vmem:[%s244 + $0x40] sm:$0xff] %vm3052, %v3024
        %3058 = vst.msk [vmem:[%s244 + $0x48] sm:$0xff] %vm3052, %v3025
        %3059 = vst.msk [vmem:[%s244 + $0x60] sm:$0xff] %vm3052, %v3026
        %3060 = vst.msk [vmem:[%s244 + $0x68] sm:$0xff] %vm3052, %v3027
        %3061 = vst.msk [vmem:[%s244 + $0x80] sm:$0xff] %vm3052, %v3028
        %3062 = vst.msk [vmem:[%s244 + $0x88] sm:$0xff] %vm3052, %v3029
        %3063 = vst.msk [vmem:[%s244 + $0xa0] sm:$0xff] %vm3052, %v3030
        %3064 = vst.msk [vmem:[%s244 + $0xa8] sm:$0xff] %vm3052, %v3031
        %3065 = vst.msk [vmem:[%s244 + $0xc0] sm:$0xff] %vm3052, %v3032
        %3066 = vst.msk [vmem:[%s244 + $0xc8] sm:$0xff] %vm3052, %v3033
        %3067 = vst.msk [vmem:[%s244 + $0xe0] sm:$0xff] %vm3052, %v3034
        %3068 = vst.msk [vmem:[%s244 + $0xe8] sm:$0xff] %vm3052, %v3035
        %3069 = vst.msk [vmem:[%s244 + $0x100] sm:$0xff] %vm3052, %v3036
        %3070 = vst.msk [vmem:[%s244 + $0x108] sm:$0xff] %vm3052, %v3037
        %3071 = vst.msk [vmem:[%s244 + $0x120] sm:$0xff] %vm3052, %v3038
        %3072 = vst.msk [vmem:[%s244 + $0x128] sm:$0xff] %vm3052, %v3039
        %3073 = vst.msk [vmem:[%s244 + $0x140] sm:$0xff] %vm3052, %v3040
        %3074 = vst.msk [vmem:[%s244 + $0x148] sm:$0xff] %vm3052, %v3041
        %3075 = vst.msk [vmem:[%s244 + $0x160] sm:$0xff] %vm3052, %v3042
        %3076 = vst.msk [vmem:[%s244 + $0x168] sm:$0xff] %vm3052, %v3043
        %3077 = vst.msk [vmem:[%s244 + $0x180] sm:$0xff] %vm3052, %v3044
        %3078 = vst.msk [vmem:[%s244 + $0x188] sm:$0xff] %vm3052, %v3045
        %3079 = vst.msk [vmem:[%s244 + $0x1a0] sm:$0xff] %vm3052, %v3046
        %3080 = vst.msk [vmem:[%s244 + $0x1a8] sm:$0xff] %vm3052, %v3047
        %3081 = vst.msk [vmem:[%s244 + $0x1c0] sm:$0xff] %vm3052, %v3048
        %3082 = vst.msk [vmem:[%s244 + $0x1c8] sm:$0xff] %vm3052, %v3049
        %3083 = vst.msk [vmem:[%s244 + $0x1e0] sm:$0xff] %vm3052, %v3050
        %3084 = vst.msk [vmem:[%s244 + $0x1e8] sm:$0xff] %vm3052, %v3051
        %s3085 = scalar_lea.vmem %s249, 24
        %v3086 = vld [vmem:[%s3085] sm:$0xf]
        %v3087 = vld [vmem:[%s3085 + $0x4] sm:$0xf]
        %v3088 = vld [vmem:[%s3085 + $0xc] sm:$0xf]
        %v3089 = vld [vmem:[%s3085 + $0x10] sm:$0xf]
        %v3090 = vld [vmem:[%s3085 + $0x18] sm:$0xf]
        %v3091 = vld [vmem:[%s3085 + $0x1c] sm:$0xf]
        %v3092 = vld [vmem:[%s3085 + $0x24] sm:$0xf]
        %v3093 = vld [vmem:[%s3085 + $0x28] sm:$0xf]
        %v3094 = vld [vmem:[%s3085 + $0x30] sm:$0xf]
        %v3095 = vld [vmem:[%s3085 + $0x34] sm:$0xf]
        %v3096 = vld [vmem:[%s3085 + $0x3c] sm:$0xf]
        %v3097 = vld [vmem:[%s3085 + $0x40] sm:$0xf]
        %v3098 = vld [vmem:[%s3085 + $0x48] sm:$0xf]
        %v3099 = vld [vmem:[%s3085 + $0x4c] sm:$0xf]
        %v3100 = vld [vmem:[%s3085 + $0x54] sm:$0xf]
        %v3101 = vld [vmem:[%s3085 + $0x58] sm:$0xf]
        %v3102 = vld [vmem:[%s3085 + $0x60] sm:$0xf]
        %v3103 = vld [vmem:[%s3085 + $0x64] sm:$0xf]
        %v3104 = vld [vmem:[%s3085 + $0x6c] sm:$0xf]
        %v3105 = vld [vmem:[%s3085 + $0x70] sm:$0xf]
        %v3106 = vld [vmem:[%s3085 + $0x78] sm:$0xf]
        %v3107 = vld [vmem:[%s3085 + $0x7c] sm:$0xf]
        %v3108 = vld [vmem:[%s3085 + $0x84] sm:$0xf]
        %v3109 = vld [vmem:[%s3085 + $0x88] sm:$0xf]
        %v3110 = vld [vmem:[%s3085 + $0x90] sm:$0xf]
        %v3111 = vld [vmem:[%s3085 + $0x94] sm:$0xf]
        %v3112 = vld [vmem:[%s3085 + $0x9c] sm:$0xf]
        %v3113 = vld [vmem:[%s3085 + $0xa0] sm:$0xf]
        %v3114 = vld [vmem:[%s3085 + $0xa8] sm:$0xf]
        %v3115 = vld [vmem:[%s3085 + $0xac] sm:$0xf]
        %v3116 = vld [vmem:[%s3085 + $0xb4] sm:$0xf]
        %v3117 = vld [vmem:[%s3085 + $0xb8] sm:$0xf]
        %v3118 = vld [vmem:[%s3085 + $0x8] sm:$0x1]
        %v3119 = vld [vmem:[%s3085 + $0x14] sm:$0x1]
        %v3120 = vld [vmem:[%s3085 + $0x20] sm:$0x1]
        %v3121 = vld [vmem:[%s3085 + $0x2c] sm:$0x1]
        %v3122 = vld [vmem:[%s3085 + $0x38] sm:$0x1]
        %v3123 = vld [vmem:[%s3085 + $0x44] sm:$0x1]
        %v3124 = vld [vmem:[%s3085 + $0x50] sm:$0x1]
        %v3125 = vld [vmem:[%s3085 + $0x5c] sm:$0x1]
        %v3126 = vld [vmem:[%s3085 + $0x68] sm:$0x1]
        %v3127 = vld [vmem:[%s3085 + $0x74] sm:$0x1]
        %v3128 = vld [vmem:[%s3085 + $0x80] sm:$0x1]
        %v3129 = vld [vmem:[%s3085 + $0x8c] sm:$0x1]
        %v3130 = vld [vmem:[%s3085 + $0x98] sm:$0x1]
        %v3131 = vld [vmem:[%s3085 + $0xa4] sm:$0x1]
        %v3132 = vld [vmem:[%s3085 + $0xb0] sm:$0x1]
        %v3133 = vld [vmem:[%s3085 + $0xbc] sm:$0x1]
        %3134 = vrot.lane.b32.xlu0 %v872, 4
        %v3135 = vpop.permute.xlu0 %3134
        %3136 = vrot.lane.b32.xlu0 %v884, 4
        %v3137 = vpop.permute.xlu0 %3136
        %3138 = vrot.lane.b32.xlu0 %v896, 4
        %v3139 = vpop.permute.xlu0 %3138
        %3140 = vrot.lane.b32.xlu0 %v908, 4
        %v3141 = vpop.permute.xlu0 %3140
        %3142 = vrot.lane.b32.xlu0 %v920, 4
        %v3143 = vpop.permute.xlu0 %3142
        %3144 = vrot.lane.b32.xlu0 %v932, 4
        %v3145 = vpop.permute.xlu0 %3144
        %3146 = vrot.lane.b32.xlu0 %v944, 4
        %v3147 = vpop.permute.xlu0 %3146
        %3148 = vrot.lane.b32.xlu0 %v956, 4
        %v3149 = vpop.permute.xlu0 %3148
        %3150 = vrot.lane.b32.xlu0 %v968, 4
        %v3151 = vpop.permute.xlu0 %3150
        %3152 = vrot.lane.b32.xlu0 %v980, 4
        %v3153 = vpop.permute.xlu0 %3152
        %3154 = vrot.lane.b32.xlu0 %v992, 4
        %v3155 = vpop.permute.xlu0 %3154
        %3156 = vrot.lane.b32.xlu0 %v1004, 4
        %v3157 = vpop.permute.xlu0 %3156
        %3158 = vrot.lane.b32.xlu0 %v1016, 4
        %v3159 = vpop.permute.xlu0 %3158
        %3160 = vrot.lane.b32.xlu0 %v1028, 4
        %v3161 = vpop.permute.xlu0 %3160
        %3162 = vrot.lane.b32.xlu0 %v1040, 4
        %v3163 = vpop.permute.xlu0 %3162
        %3164 = vrot.lane.b32.xlu0 %v1052, 4
        %v3165 = vpop.permute.xlu0 %3164
        %v3198 = vunpack.c.l.b16 %v3086
        %v3199 = vunpack.c.l.b16 %v3087
        %v3200 = vunpack.c.l.b16 %v3088
        %v3201 = vunpack.c.l.b16 %v3089
        %v3202 = vunpack.c.l.b16 %v3090
        %v3203 = vunpack.c.l.b16 %v3091
        %v3204 = vunpack.c.l.b16 %v3092
        %v3205 = vunpack.c.l.b16 %v3093
        %v3206 = vunpack.c.l.b16 %v3094
        %v3207 = vunpack.c.l.b16 %v3095
        %v3208 = vunpack.c.l.b16 %v3096
        %v3209 = vunpack.c.l.b16 %v3097
        %v3210 = vunpack.c.l.b16 %v3098
        %v3211 = vunpack.c.l.b16 %v3099
        %v3212 = vunpack.c.l.b16 %v3100
        %v3213 = vunpack.c.l.b16 %v3101
        %v3214 = vunpack.c.l.b16 %v3102
        %v3215 = vunpack.c.l.b16 %v3103
        %v3216 = vunpack.c.l.b16 %v3104
        %v3217 = vunpack.c.l.b16 %v3105
        %v3218 = vunpack.c.l.b16 %v3106
        %v3219 = vunpack.c.l.b16 %v3107
        %v3220 = vunpack.c.l.b16 %v3108
        %v3221 = vunpack.c.l.b16 %v3109
        %v3222 = vunpack.c.l.b16 %v3110
        %v3223 = vunpack.c.l.b16 %v3111
        %v3224 = vunpack.c.l.b16 %v3112
        %v3225 = vunpack.c.l.b16 %v3113
        %v3226 = vunpack.c.l.b16 %v3114
        %v3227 = vunpack.c.l.b16 %v3115
        %v3228 = vunpack.c.l.b16 %v3116
        %v3229 = vunpack.c.l.b16 %v3117
        %v3230 = vpack.c.b16 %v3199, %v3198
        %v3231 = vpack.c.b16 %v3201, %v3200
        %v3232 = vpack.c.b16 %v3203, %v3202
        %v3233 = vpack.c.b16 %v3205, %v3204
        %v3234 = vpack.c.b16 %v3207, %v3206
        %v3235 = vpack.c.b16 %v3209, %v3208
        %v3236 = vpack.c.b16 %v3211, %v3210
        %v3237 = vpack.c.b16 %v3213, %v3212
        %v3238 = vpack.c.b16 %v3215, %v3214
        %v3239 = vpack.c.b16 %v3217, %v3216
        %v3240 = vpack.c.b16 %v3219, %v3218
        %v3241 = vpack.c.b16 %v3221, %v3220
        %v3242 = vpack.c.b16 %v3223, %v3222
        %v3243 = vpack.c.b16 %v3225, %v3224
        %v3244 = vpack.c.b16 %v3227, %v3226
        %v3245 = vpack.c.b16 %v3229, %v3228
        %3246 = vrot.lane.b32.xlu0 %v3230, 8
        %v3247 = vpop.permute.xlu0 %3246
        %3248 = vrot.lane.b32.xlu0 %v3231, 8
        %v3249 = vpop.permute.xlu0 %3248
        %3250 = vrot.lane.b32.xlu0 %v3232, 8
        %v3251 = vpop.permute.xlu0 %3250
        %3252 = vrot.lane.b32.xlu0 %v3233, 8
        %v3253 = vpop.permute.xlu0 %3252
        %3254 = vrot.lane.b32.xlu0 %v3234, 8
        %v3255 = vpop.permute.xlu0 %3254
        %3256 = vrot.lane.b32.xlu0 %v3235, 8
        %v3257 = vpop.permute.xlu0 %3256
        %3258 = vrot.lane.b32.xlu0 %v3236, 8
        %v3259 = vpop.permute.xlu0 %3258
        %3260 = vrot.lane.b32.xlu0 %v3237, 8
        %v3261 = vpop.permute.xlu0 %3260
        %3262 = vrot.lane.b32.xlu0 %v3238, 8
        %v3263 = vpop.permute.xlu0 %3262
        %3264 = vrot.lane.b32.xlu0 %v3239, 8
        %v3265 = vpop.permute.xlu0 %3264
        %3266 = vrot.lane.b32.xlu0 %v3240, 8
        %v3267 = vpop.permute.xlu0 %3266
        %3268 = vrot.lane.b32.xlu0 %v3241, 8
        %v3269 = vpop.permute.xlu0 %3268
        %3270 = vrot.lane.b32.xlu0 %v3242, 8
        %v3271 = vpop.permute.xlu0 %3270
        %3272 = vrot.lane.b32.xlu0 %v3243, 8
        %v3273 = vpop.permute.xlu0 %3272
        %3274 = vrot.lane.b32.xlu0 %v3244, 8
        %v3275 = vpop.permute.xlu0 %3274
        %3276 = vrot.lane.b32.xlu0 %v3245, 8
        %v3277 = vpop.permute.xlu0 %3276
        %v3294 = vunpack.c.l.b16 %v3118
        %v3295 = vunpack.c.l.b16 %v3119
        %v3296 = vunpack.c.l.b16 %v3120
        %v3297 = vunpack.c.l.b16 %v3121
        %v3298 = vunpack.c.l.b16 %v3122
        %v3299 = vunpack.c.l.b16 %v3123
        %v3300 = vunpack.c.l.b16 %v3124
        %v3301 = vunpack.c.l.b16 %v3125
        %v3302 = vunpack.c.l.b16 %v3126
        %v3303 = vunpack.c.l.b16 %v3127
        %v3304 = vunpack.c.l.b16 %v3128
        %v3305 = vunpack.c.l.b16 %v3129
        %v3306 = vunpack.c.l.b16 %v3130
        %v3307 = vunpack.c.l.b16 %v3131
        %v3308 = vunpack.c.l.b16 %v3132
        %v3309 = vunpack.c.l.b16 %v3133
        %v3310 = vpack.c.b16 %v3294, %v3294
        %v3311 = vpack.c.b16 %v3295, %v3295
        %v3312 = vpack.c.b16 %v3296, %v3296
        %v3313 = vpack.c.b16 %v3297, %v3297
        %v3314 = vpack.c.b16 %v3298, %v3298
        %v3315 = vpack.c.b16 %v3299, %v3299
        %v3316 = vpack.c.b16 %v3300, %v3300
        %v3317 = vpack.c.b16 %v3301, %v3301
        %v3318 = vpack.c.b16 %v3302, %v3302
        %v3319 = vpack.c.b16 %v3303, %v3303
        %v3320 = vpack.c.b16 %v3304, %v3304
        %v3321 = vpack.c.b16 %v3305, %v3305
        %v3322 = vpack.c.b16 %v3306, %v3306
        %v3323 = vpack.c.b16 %v3307, %v3307
        %v3324 = vpack.c.b16 %v3308, %v3308
        %v3325 = vpack.c.b16 %v3309, %v3309
        %v3327 = vshrl.u32 %v3230, 16
        %v3329 = vshll.u32 %v3230, 16
        %v3331 = vrot.slane %v3329, 1
        %v3332 = vor.u32 %v3327, %v3331
        %v3334 = vshll.u32 %v3310, 16
        %v3336 = vrot.slane %v3334, 1
        %v3337 = vsel %vm476, %v3332, %v3336
        %v3339 = vshrl.u32 %v3231, 16
        %v3341 = vshll.u32 %v3231, 16
        %v3343 = vrot.slane %v3341, 1
        %v3344 = vor.u32 %v3339, %v3343
        %v3346 = vshll.u32 %v3311, 16
        %v3348 = vrot.slane %v3346, 1
        %v3349 = vsel %vm476, %v3344, %v3348
        %v3351 = vshrl.u32 %v3232, 16
        %v3353 = vshll.u32 %v3232, 16
        %v3355 = vrot.slane %v3353, 1
        %v3356 = vor.u32 %v3351, %v3355
        %v3358 = vshll.u32 %v3312, 16
        %v3360 = vrot.slane %v3358, 1
        %v3361 = vsel %vm476, %v3356, %v3360
        %v3363 = vshrl.u32 %v3233, 16
        %v3365 = vshll.u32 %v3233, 16
        %v3367 = vrot.slane %v3365, 1
        %v3368 = vor.u32 %v3363, %v3367
        %v3370 = vshll.u32 %v3313, 16
        %v3372 = vrot.slane %v3370, 1
        %v3373 = vsel %vm476, %v3368, %v3372
        %v3375 = vshrl.u32 %v3234, 16
        %v3377 = vshll.u32 %v3234, 16
        %v3379 = vrot.slane %v3377, 1
        %v3380 = vor.u32 %v3375, %v3379
        %v3382 = vshll.u32 %v3314, 16
        %v3384 = vrot.slane %v3382, 1
        %v3385 = vsel %vm476, %v3380, %v3384
        %v3387 = vshrl.u32 %v3235, 16
        %v3389 = vshll.u32 %v3235, 16
        %v3391 = vrot.slane %v3389, 1
        %v3392 = vor.u32 %v3387, %v3391
        %v3394 = vshll.u32 %v3315, 16
        %v3396 = vrot.slane %v3394, 1
        %v3397 = vsel %vm476, %v3392, %v3396
        %v3399 = vshrl.u32 %v3236, 16
        %v3401 = vshll.u32 %v3236, 16
        %v3403 = vrot.slane %v3401, 1
        %v3404 = vor.u32 %v3399, %v3403
        %v3406 = vshll.u32 %v3316, 16
        %v3408 = vrot.slane %v3406, 1
        %v3409 = vsel %vm476, %v3404, %v3408
        %v3411 = vshrl.u32 %v3237, 16
        %v3413 = vshll.u32 %v3237, 16
        %v3415 = vrot.slane %v3413, 1
        %v3416 = vor.u32 %v3411, %v3415
        %v3418 = vshll.u32 %v3317, 16
        %v3420 = vrot.slane %v3418, 1
        %v3421 = vsel %vm476, %v3416, %v3420
        %v3423 = vshrl.u32 %v3238, 16
        %v3425 = vshll.u32 %v3238, 16
        %v3427 = vrot.slane %v3425, 1
        %v3428 = vor.u32 %v3423, %v3427
        %v3430 = vshll.u32 %v3318, 16
        %v3432 = vrot.slane %v3430, 1
        %v3433 = vsel %vm476, %v3428, %v3432
        %v3435 = vshrl.u32 %v3239, 16
        %v3437 = vshll.u32 %v3239, 16
        %v3439 = vrot.slane %v3437, 1
        %v3440 = vor.u32 %v3435, %v3439
        %v3442 = vshll.u32 %v3319, 16
        %v3444 = vrot.slane %v3442, 1
        %v3445 = vsel %vm476, %v3440, %v3444
        %v3447 = vshrl.u32 %v3240, 16
        %v3449 = vshll.u32 %v3240, 16
        %v3451 = vrot.slane %v3449, 1
        %v3452 = vor.u32 %v3447, %v3451
        %v3454 = vshll.u32 %v3320, 16
        %v3456 = vrot.slane %v3454, 1
        %v3457 = vsel %vm476, %v3452, %v3456
        %v3459 = vshrl.u32 %v3241, 16
        %v3461 = vshll.u32 %v3241, 16
        %v3463 = vrot.slane %v3461, 1
        %v3464 = vor.u32 %v3459, %v3463
        %v3466 = vshll.u32 %v3321, 16
        %v3468 = vrot.slane %v3466, 1
        %v3469 = vsel %vm476, %v3464, %v3468
        %v3471 = vshrl.u32 %v3242, 16
        %v3473 = vshll.u32 %v3242, 16
        %v3475 = vrot.slane %v3473, 1
        %v3476 = vor.u32 %v3471, %v3475
        %v3478 = vshll.u32 %v3322, 16
        %v3480 = vrot.slane %v3478, 1
        %v3481 = vsel %vm476, %v3476, %v3480
        %v3483 = vshrl.u32 %v3243, 16
        %v3485 = vshll.u32 %v3243, 16
        %v3487 = vrot.slane %v3485, 1
        %v3488 = vor.u32 %v3483, %v3487
        %v3490 = vshll.u32 %v3323, 16
        %v3492 = vrot.slane %v3490, 1
        %v3493 = vsel %vm476, %v3488, %v3492
        %v3495 = vshrl.u32 %v3244, 16
        %v3497 = vshll.u32 %v3244, 16
        %v3499 = vrot.slane %v3497, 1
        %v3500 = vor.u32 %v3495, %v3499
        %v3502 = vshll.u32 %v3324, 16
        %v3504 = vrot.slane %v3502, 1
        %v3505 = vsel %vm476, %v3500, %v3504
        %v3507 = vshrl.u32 %v3245, 16
        %v3509 = vshll.u32 %v3245, 16
        %v3511 = vrot.slane %v3509, 1
        %v3512 = vor.u32 %v3507, %v3511
        %v3514 = vshll.u32 %v3325, 16
        %v3516 = vrot.slane %v3514, 1
        %v3517 = vsel %vm476, %v3512, %v3516
        %3518 = vrot.lane.b32.xlu0 %v3337, 12
        %v3519 = vpop.permute.xlu0 %3518
        %3520 = vrot.lane.b32.xlu0 %v3349, 12
        %v3521 = vpop.permute.xlu0 %3520
        %3522 = vrot.lane.b32.xlu0 %v3361, 12
        %v3523 = vpop.permute.xlu0 %3522
        %3524 = vrot.lane.b32.xlu0 %v3373, 12
        %v3525 = vpop.permute.xlu0 %3524
        %3526 = vrot.lane.b32.xlu0 %v3385, 12
        %v3527 = vpop.permute.xlu0 %3526
        %3528 = vrot.lane.b32.xlu0 %v3397, 12
        %v3529 = vpop.permute.xlu0 %3528
        %3530 = vrot.lane.b32.xlu0 %v3409, 12
        %v3531 = vpop.permute.xlu0 %3530
        %3532 = vrot.lane.b32.xlu0 %v3421, 12
        %v3533 = vpop.permute.xlu0 %3532
        %3534 = vrot.lane.b32.xlu0 %v3433, 12
        %v3535 = vpop.permute.xlu0 %3534
        %3536 = vrot.lane.b32.xlu0 %v3445, 12
        %v3537 = vpop.permute.xlu0 %3536
        %3538 = vrot.lane.b32.xlu0 %v3457, 12
        %v3539 = vpop.permute.xlu0 %3538
        %3540 = vrot.lane.b32.xlu0 %v3469, 12
        %v3541 = vpop.permute.xlu0 %3540
        %3542 = vrot.lane.b32.xlu0 %v3481, 12
        %v3543 = vpop.permute.xlu0 %3542
        %3544 = vrot.lane.b32.xlu0 %v3493, 12
        %v3545 = vpop.permute.xlu0 %3544
        %3546 = vrot.lane.b32.xlu0 %v3505, 12
        %v3547 = vpop.permute.xlu0 %3546
        %3548 = vrot.lane.b32.xlu0 %v3517, 12
        %v3549 = vpop.permute.xlu0 %3548
        %v3551 = vsel %vm1085, %v765, %v3135
        %v3553 = vsel %vm1085, %v766, %v3137
        %v3555 = vsel %vm1085, %v767, %v3139
        %v3557 = vsel %vm1085, %v768, %v3141
        %v3559 = vsel %vm1085, %v769, %v3143
        %v3561 = vsel %vm1085, %v770, %v3145
        %v3563 = vsel %vm1085, %v771, %v3147
        %v3565 = vsel %vm1085, %v772, %v3149
        %v3567 = vsel %vm1085, %v773, %v3151
        %v3569 = vsel %vm1085, %v774, %v3153
        %v3571 = vsel %vm1085, %v775, %v3155
        %v3573 = vsel %vm1085, %v776, %v3157
        %v3575 = vsel %vm1085, %v777, %v3159
        %v3577 = vsel %vm1085, %v778, %v3161
        %v3579 = vsel %vm1085, %v779, %v3163
        %v3581 = vsel %vm1085, %v780, %v3165
        %v3583 = vsel %vm1118, %v3551, %v3247
        %v3585 = vsel %vm1118, %v3553, %v3249
        %v3587 = vsel %vm1118, %v3555, %v3251
        %v3589 = vsel %vm1118, %v3557, %v3253
        %v3591 = vsel %vm1118, %v3559, %v3255
        %v3593 = vsel %vm1118, %v3561, %v3257
        %v3595 = vsel %vm1118, %v3563, %v3259
        %v3597 = vsel %vm1118, %v3565, %v3261
        %v3599 = vsel %vm1118, %v3567, %v3263
        %v3601 = vsel %vm1118, %v3569, %v3265
        %v3603 = vsel %vm1118, %v3571, %v3267
        %v3605 = vsel %vm1118, %v3573, %v3269
        %v3607 = vsel %vm1118, %v3575, %v3271
        %v3609 = vsel %vm1118, %v3577, %v3273
        %v3611 = vsel %vm1118, %v3579, %v3275
        %v3613 = vsel %vm1118, %v3581, %v3277
        %v3615 = vsel %vm1151, %v3583, %v3519
        %v3617 = vsel %vm1151, %v3585, %v3521
        %v3619 = vsel %vm1151, %v3587, %v3523
        %v3621 = vsel %vm1151, %v3589, %v3525
        %v3623 = vsel %vm1151, %v3591, %v3527
        %v3625 = vsel %vm1151, %v3593, %v3529
        %v3627 = vsel %vm1151, %v3595, %v3531
        %v3629 = vsel %vm1151, %v3597, %v3533
        %v3631 = vsel %vm1151, %v3599, %v3535
        %v3633 = vsel %vm1151, %v3601, %v3537
        %v3635 = vsel %vm1151, %v3603, %v3539
        %v3637 = vsel %vm1151, %v3605, %v3541
        %v3639 = vsel %vm1151, %v3607, %v3543
        %v3641 = vsel %vm1151, %v3609, %v3545
        %v3643 = vsel %vm1151, %v3611, %v3547
        %v3645 = vsel %vm1151, %v3613, %v3549
        %s3646 = scalar_lea.vmem %s1, 16
        %v3647 = vld [vmem:[%s3646] sm:$0xf]
        %v3648 = vld [vmem:[%s3646 + $0x4] sm:$0xf]
        %v3651 = vunpack.c.l.b16 %v3647
        %v3652 = vunpack.c.l.b16 %v3648
        %v3653 = vpack.c.b16 %v3652, %v3651
        %v3655 = vsel %vm1192, %v3615, 0
        %v3657 = vsel %vm1192, %v3617, 0
        %v3659 = vsel %vm1192, %v3619, 0
        %v3661 = vsel %vm1192, %v3621, 0
        %v3663 = vsel %vm1192, %v3623, 0
        %v3665 = vsel %vm1192, %v3625, 0
        %v3667 = vsel %vm1192, %v3627, 0
        %v3669 = vsel %vm1192, %v3629, 0
        %v3671 = vsel %vm1192, %v3631, 0
        %v3673 = vsel %vm1192, %v3633, 0
        %v3675 = vsel %vm1192, %v3635, 0
        %v3677 = vsel %vm1192, %v3637, 0
        %v3679 = vsel %vm1192, %v3639, 0
        %v3681 = vsel %vm1192, %v3641, 0
        %v3683 = vsel %vm1192, %v3643, 0
        %v3685 = vsel %vm1192, %v3645, 0
        %3687 = vmatprep.subr.bf16.mxu0 0
        %3688 = vmatpush1.bf16.msra.mxu0 0
        %3689 = vmatprep.subr.bf16.mxu0 0
        %3690 = vmatpush1.bf16.msra.mxu0 0
        %3691 = vmatprep.subr.bf16.mxu0 0
        %3692 = vmatpush1.bf16.msra.mxu0 0
        %3693 = vmatprep.subr.bf16.mxu0 0
        %3694 = vmatpush1.bf16.msra.mxu0 0
        %3695 = vmatprep.subr.bf16.mxu0 0
        %3696 = vmatpush1.bf16.msra.mxu0 0
        %3697 = vmatprep.subr.bf16.mxu0 0
        %3698 = vmatpush1.bf16.msra.mxu0 0
        %3699 = vmatprep.subr.bf16.mxu0 0
        %3700 = vmatpush1.bf16.msra.mxu0 0
        %3701 = vmatprep.subr.bf16.mxu0 0
        %3702 = vmatpush1.bf16.msra.mxu0 %v3653
        %3703 = vmatprep.subr.bf16.mxu0 0
        %3704 = vmatpush2.bf16.msra.mxu0 0
        %3705 = vmatprep.subr.bf16.mxu0 0
        %3706 = vmatpush2.bf16.msra.mxu0 0
        %3707 = vmatprep.subr.bf16.mxu0 0
        %3708 = vmatpush2.bf16.msra.mxu0 0
        %3709 = vmatprep.subr.bf16.mxu0 0
        %3710 = vmatpush2.bf16.msra.mxu0 0
        %3711 = vmatprep.subr.bf16.mxu0 0
        %3712 = vmatpush2.bf16.msra.mxu0 0
        %3713 = vmatprep.subr.bf16.mxu0 0
        %3714 = vmatpush2.bf16.msra.mxu0 0
        %3715 = vmatprep.subr.bf16.mxu0 0
        %3716 = vmatpush2.bf16.msra.mxu0 0
        %3717 = vmatprep.subr.bf16.mxu0 0
        %3718 = vmatpush2.bf16.msra.mxu0 0
        %3719 = vmatprep.mubr.bf16.mxu0 0
        %3720 = vmatmul.mubr.bf16.gmra.mxu0 %v3655
        %v3721 = vpop.f32.mrf.mxu0
        %v3722 = vadd.f32 0.0, %v3721
        %v3723 = vpop.f32.mrf.mxu0
        %v3724 = vpop.f32.mrf.mxu0
        %v3725 = vadd.f32 0.0, %v3724
        %v3726 = vpop.f32.mrf.mxu0
        %3727 = vmatprep.mubr.bf16.mxu0 0
        %3728 = vmatmul.mubr.bf16.gmra.mxu0 %v3657
        %v3729 = vpop.f32.mrf.mxu0
        %v3730 = vadd.f32 0.0, %v3729
        %v3731 = vpop.f32.mrf.mxu0
        %v3732 = vpop.f32.mrf.mxu0
        %v3733 = vadd.f32 0.0, %v3732
        %v3734 = vpop.f32.mrf.mxu0
        %3735 = vmatprep.mubr.bf16.mxu0 0
        %3736 = vmatmul.mubr.bf16.gmra.mxu0 %v3659
        %v3737 = vpop.f32.mrf.mxu0
        %v3738 = vadd.f32 0.0, %v3737
        %v3739 = vpop.f32.mrf.mxu0
        %v3740 = vpop.f32.mrf.mxu0
        %v3741 = vadd.f32 0.0, %v3740
        %v3742 = vpop.f32.mrf.mxu0
        %3743 = vmatprep.mubr.bf16.mxu0 0
        %3744 = vmatmul.mubr.bf16.gmra.mxu0 %v3661
        %v3745 = vpop.f32.mrf.mxu0
        %v3746 = vadd.f32 0.0, %v3745
        %v3747 = vpop.f32.mrf.mxu0
        %v3748 = vpop.f32.mrf.mxu0
        %v3749 = vadd.f32 0.0, %v3748
        %v3750 = vpop.f32.mrf.mxu0
        %3751 = vmatprep.mubr.bf16.mxu0 0
        %3752 = vmatmul.mubr.bf16.gmra.mxu0 %v3663
        %v3753 = vpop.f32.mrf.mxu0
        %v3754 = vadd.f32 0.0, %v3753
        %v3755 = vpop.f32.mrf.mxu0
        %v3756 = vpop.f32.mrf.mxu0
        %v3757 = vadd.f32 0.0, %v3756
        %v3758 = vpop.f32.mrf.mxu0
        %3759 = vmatprep.mubr.bf16.mxu0 0
        %3760 = vmatmul.mubr.bf16.gmra.mxu0 %v3665
        %v3761 = vpop.f32.mrf.mxu0
        %v3762 = vadd.f32 0.0, %v3761
        %v3763 = vpop.f32.mrf.mxu0
        %v3764 = vpop.f32.mrf.mxu0
        %v3765 = vadd.f32 0.0, %v3764
        %v3766 = vpop.f32.mrf.mxu0
        %3767 = vmatprep.mubr.bf16.mxu0 0
        %3768 = vmatmul.mubr.bf16.gmra.mxu0 %v3667
        %v3769 = vpop.f32.mrf.mxu0
        %v3770 = vadd.f32 0.0, %v3769
        %v3771 = vpop.f32.mrf.mxu0
        %v3772 = vpop.f32.mrf.mxu0
        %v3773 = vadd.f32 0.0, %v3772
        %v3774 = vpop.f32.mrf.mxu0
        %3775 = vmatprep.mubr.bf16.mxu0 0
        %3776 = vmatmul.mubr.bf16.gmra.mxu0 %v3669
        %v3777 = vpop.f32.mrf.mxu0
        %v3778 = vadd.f32 0.0, %v3777
        %v3779 = vpop.f32.mrf.mxu0
        %v3780 = vpop.f32.mrf.mxu0
        %v3781 = vadd.f32 0.0, %v3780
        %v3782 = vpop.f32.mrf.mxu0
        %3783 = vmatprep.mubr.bf16.mxu0 0
        %3784 = vmatmul.mubr.bf16.gmra.mxu0 %v3671
        %v3785 = vpop.f32.mrf.mxu0
        %v3786 = vadd.f32 0.0, %v3785
        %v3787 = vpop.f32.mrf.mxu0
        %v3788 = vpop.f32.mrf.mxu0
        %v3789 = vadd.f32 0.0, %v3788
        %v3790 = vpop.f32.mrf.mxu0
        %3791 = vmatprep.mubr.bf16.mxu0 0
        %3792 = vmatmul.mubr.bf16.gmra.mxu0 %v3673
        %v3793 = vpop.f32.mrf.mxu0
        %v3794 = vadd.f32 0.0, %v3793
        %v3795 = vpop.f32.mrf.mxu0
        %v3796 = vpop.f32.mrf.mxu0
        %v3797 = vadd.f32 0.0, %v3796
        %v3798 = vpop.f32.mrf.mxu0
        %3799 = vmatprep.mubr.bf16.mxu0 0
        %3800 = vmatmul.mubr.bf16.gmra.mxu0 %v3675
        %v3801 = vpop.f32.mrf.mxu0
        %v3802 = vadd.f32 0.0, %v3801
        %v3803 = vpop.f32.mrf.mxu0
        %v3804 = vpop.f32.mrf.mxu0
        %v3805 = vadd.f32 0.0, %v3804
        %v3806 = vpop.f32.mrf.mxu0
        %3807 = vmatprep.mubr.bf16.mxu0 0
        %3808 = vmatmul.mubr.bf16.gmra.mxu0 %v3677
        %v3809 = vpop.f32.mrf.mxu0
        %v3810 = vadd.f32 0.0, %v3809
        %v3811 = vpop.f32.mrf.mxu0
        %v3812 = vpop.f32.mrf.mxu0
        %v3813 = vadd.f32 0.0, %v3812
        %v3814 = vpop.f32.mrf.mxu0
        %3815 = vmatprep.mubr.bf16.mxu0 0
        %3816 = vmatmul.mubr.bf16.gmra.mxu0 %v3679
        %v3817 = vpop.f32.mrf.mxu0
        %v3818 = vadd.f32 0.0, %v3817
        %v3819 = vpop.f32.mrf.mxu0
        %v3820 = vpop.f32.mrf.mxu0
        %v3821 = vadd.f32 0.0, %v3820
        %v3822 = vpop.f32.mrf.mxu0
        %3823 = vmatprep.mubr.bf16.mxu0 0
        %3824 = vmatmul.mubr.bf16.gmra.mxu0 %v3681
        %v3825 = vpop.f32.mrf.mxu0
        %v3826 = vadd.f32 0.0, %v3825
        %v3827 = vpop.f32.mrf.mxu0
        %v3828 = vpop.f32.mrf.mxu0
        %v3829 = vadd.f32 0.0, %v3828
        %v3830 = vpop.f32.mrf.mxu0
        %3831 = vmatprep.mubr.bf16.mxu0 0
        %3832 = vmatmul.mubr.bf16.gmra.mxu0 %v3683
        %v3833 = vpop.f32.mrf.mxu0
        %v3834 = vadd.f32 0.0, %v3833
        %v3835 = vpop.f32.mrf.mxu0
        %v3836 = vpop.f32.mrf.mxu0
        %v3837 = vadd.f32 0.0, %v3836
        %v3838 = vpop.f32.mrf.mxu0
        %3839 = vmatprep.mubr.bf16.mxu0 0
        %3840 = vmatmul.mubr.bf16.gmra.mxu0 %v3685
        %v3841 = vpop.f32.mrf.mxu0
        %v3842 = vadd.f32 0.0, %v3841
        %v3843 = vpop.f32.mrf.mxu0
        %v3844 = vpop.f32.mrf.mxu0
        %v3845 = vadd.f32 0.0, %v3844
        %v3846 = vpop.f32.mrf.mxu0
        %3847 = vdwg.mxu0
        %v3848 = vsel %vm1192, %v3722, 0.0
        %v3849 = vsel %vm1192, %v3725, 0.0
        %v3850 = vadd.f32 %v3848, %v3849
        %v3851 = vsel %vm1192, %v3730, 0.0
        %v3852 = vadd.f32 %v3850, %v3851
        %v3853 = vsel %vm1192, %v3733, 0.0
        %v3854 = vadd.f32 %v3852, %v3853
        %v3855 = vsel %vm1192, %v3738, 0.0
        %v3856 = vadd.f32 %v3854, %v3855
        %v3857 = vsel %vm1192, %v3741, 0.0
        %v3858 = vadd.f32 %v3856, %v3857
        %v3859 = vsel %vm1192, %v3746, 0.0
        %v3860 = vadd.f32 %v3858, %v3859
        %v3861 = vsel %vm1192, %v3749, 0.0
        %v3862 = vadd.f32 %v3860, %v3861
        %v3863 = vsel %vm1192, %v3754, 0.0
        %v3864 = vadd.f32 %v3862, %v3863
        %v3865 = vsel %vm1192, %v3757, 0.0
        %v3866 = vadd.f32 %v3864, %v3865
        %v3867 = vsel %vm1192, %v3762, 0.0
        %v3868 = vadd.f32 %v3866, %v3867
        %v3869 = vsel %vm1192, %v3765, 0.0
        %v3870 = vadd.f32 %v3868, %v3869
        %v3871 = vsel %vm1192, %v3770, 0.0
        %v3872 = vadd.f32 %v3870, %v3871
        %v3873 = vsel %vm1192, %v3773, 0.0
        %v3874 = vadd.f32 %v3872, %v3873
        %v3875 = vsel %vm1192, %v3778, 0.0
        %v3876 = vadd.f32 %v3874, %v3875
        %v3877 = vsel %vm1192, %v3781, 0.0
        %v3878 = vadd.f32 %v3876, %v3877
        %v3879 = vsel %vm1192, %v3786, 0.0
        %v3880 = vadd.f32 %v3878, %v3879
        %v3881 = vsel %vm1192, %v3789, 0.0
        %v3882 = vadd.f32 %v3880, %v3881
        %v3883 = vsel %vm1192, %v3794, 0.0
        %v3884 = vadd.f32 %v3882, %v3883
        %v3885 = vsel %vm1192, %v3797, 0.0
        %v3886 = vadd.f32 %v3884, %v3885
        %v3887 = vsel %vm1192, %v3802, 0.0
        %v3888 = vadd.f32 %v3886, %v3887
        %v3889 = vsel %vm1192, %v3805, 0.0
        %v3890 = vadd.f32 %v3888, %v3889
        %v3891 = vsel %vm1192, %v3810, 0.0
        %v3892 = vadd.f32 %v3890, %v3891
        %v3893 = vsel %vm1192, %v3813, 0.0
        %v3894 = vadd.f32 %v3892, %v3893
        %v3895 = vsel %vm1192, %v3818, 0.0
        %v3896 = vadd.f32 %v3894, %v3895
        %v3897 = vsel %vm1192, %v3821, 0.0
        %v3898 = vadd.f32 %v3896, %v3897
        %v3899 = vsel %vm1192, %v3826, 0.0
        %v3900 = vadd.f32 %v3898, %v3899
        %v3901 = vsel %vm1192, %v3829, 0.0
        %v3902 = vadd.f32 %v3900, %v3901
        %v3903 = vsel %vm1192, %v3834, 0.0
        %v3904 = vadd.f32 %v3902, %v3903
        %v3905 = vsel %vm1192, %v3837, 0.0
        %v3906 = vadd.f32 %v3904, %v3905
        %v3907 = vsel %vm1192, %v3842, 0.0
        %v3908 = vadd.f32 %v3906, %v3907
        %v3909 = vsel %vm1192, %v3845, 0.0
        %v3910 = vadd.f32 %v3908, %v3909
        %v3911 = vrot.slane %v3910, 4
        %v3912 = vadd.f32 %v3910, %v3911
        %v3913 = vrot.slane %v3912, 2
        %v3914 = vadd.f32 %v3912, %v3913
        %v3915 = vrot.slane %v3914, 1
        %v3916 = vadd.f32 %v3914, %v3915
        %v3917 = vadd.f32 %v2789, %v3916
        %v3918 = vmul.f32 %v3722, %v3722
        %v3919 = vmul.f32 %v3725, %v3725
        %v3920 = vmul.f32 %v3730, %v3730
        %v3921 = vmul.f32 %v3733, %v3733
        %v3922 = vmul.f32 %v3738, %v3738
        %v3923 = vmul.f32 %v3741, %v3741
        %v3924 = vmul.f32 %v3746, %v3746
        %v3925 = vmul.f32 %v3749, %v3749
        %v3926 = vmul.f32 %v3754, %v3754
        %v3927 = vmul.f32 %v3757, %v3757
        %v3928 = vmul.f32 %v3762, %v3762
        %v3929 = vmul.f32 %v3765, %v3765
        %v3930 = vmul.f32 %v3770, %v3770
        %v3931 = vmul.f32 %v3773, %v3773
        %v3932 = vmul.f32 %v3778, %v3778
        %v3933 = vmul.f32 %v3781, %v3781
        %v3934 = vmul.f32 %v3786, %v3786
        %v3935 = vmul.f32 %v3789, %v3789
        %v3936 = vmul.f32 %v3794, %v3794
        %v3937 = vmul.f32 %v3797, %v3797
        %v3938 = vmul.f32 %v3802, %v3802
        %v3939 = vmul.f32 %v3805, %v3805
        %v3940 = vmul.f32 %v3810, %v3810
        %v3941 = vmul.f32 %v3813, %v3813
        %v3942 = vmul.f32 %v3818, %v3818
        %v3943 = vmul.f32 %v3821, %v3821
        %v3944 = vmul.f32 %v3826, %v3826
        %v3945 = vmul.f32 %v3829, %v3829
        %v3946 = vmul.f32 %v3834, %v3834
        %v3947 = vmul.f32 %v3837, %v3837
        %v3948 = vmul.f32 %v3842, %v3842
        %v3949 = vmul.f32 %v3845, %v3845
        %v3950 = vsel %vm1192, %v3918, 0.0
        %v3951 = vsel %vm1192, %v3919, 0.0
        %v3952 = vadd.f32 %v3950, %v3951
        %v3953 = vsel %vm1192, %v3920, 0.0
        %v3954 = vadd.f32 %v3952, %v3953
        %v3955 = vsel %vm1192, %v3921, 0.0
        %v3956 = vadd.f32 %v3954, %v3955
        %v3957 = vsel %vm1192, %v3922, 0.0
        %v3958 = vadd.f32 %v3956, %v3957
        %v3959 = vsel %vm1192, %v3923, 0.0
        %v3960 = vadd.f32 %v3958, %v3959
        %v3961 = vsel %vm1192, %v3924, 0.0
        %v3962 = vadd.f32 %v3960, %v3961
        %v3963 = vsel %vm1192, %v3925, 0.0
        %v3964 = vadd.f32 %v3962, %v3963
        %v3965 = vsel %vm1192, %v3926, 0.0
        %v3966 = vadd.f32 %v3964, %v3965
        %v3967 = vsel %vm1192, %v3927, 0.0
        %v3968 = vadd.f32 %v3966, %v3967
        %v3969 = vsel %vm1192, %v3928, 0.0
        %v3970 = vadd.f32 %v3968, %v3969
        %v3971 = vsel %vm1192, %v3929, 0.0
        %v3972 = vadd.f32 %v3970, %v3971
        %v3973 = vsel %vm1192, %v3930, 0.0
        %v3974 = vadd.f32 %v3972, %v3973
        %v3975 = vsel %vm1192, %v3931, 0.0
        %v3976 = vadd.f32 %v3974, %v3975
        %v3977 = vsel %vm1192, %v3932, 0.0
        %v3978 = vadd.f32 %v3976, %v3977
        %v3979 = vsel %vm1192, %v3933, 0.0
        %v3980 = vadd.f32 %v3978, %v3979
        %v3981 = vsel %vm1192, %v3934, 0.0
        %v3982 = vadd.f32 %v3980, %v3981
        %v3983 = vsel %vm1192, %v3935, 0.0
        %v3984 = vadd.f32 %v3982, %v3983
        %v3985 = vsel %vm1192, %v3936, 0.0
        %v3986 = vadd.f32 %v3984, %v3985
        %v3987 = vsel %vm1192, %v3937, 0.0
        %v3988 = vadd.f32 %v3986, %v3987
        %v3989 = vsel %vm1192, %v3938, 0.0
        %v3990 = vadd.f32 %v3988, %v3989
        %v3991 = vsel %vm1192, %v3939, 0.0
        %v3992 = vadd.f32 %v3990, %v3991
        %v3993 = vsel %vm1192, %v3940, 0.0
        %v3994 = vadd.f32 %v3992, %v3993
        %v3995 = vsel %vm1192, %v3941, 0.0
        %v3996 = vadd.f32 %v3994, %v3995
        %v3997 = vsel %vm1192, %v3942, 0.0
        %v3998 = vadd.f32 %v3996, %v3997
        %v3999 = vsel %vm1192, %v3943, 0.0
        %v4000 = vadd.f32 %v3998, %v3999
        %v4001 = vsel %vm1192, %v3944, 0.0
        %v4002 = vadd.f32 %v4000, %v4001
        %v4003 = vsel %vm1192, %v3945, 0.0
        %v4004 = vadd.f32 %v4002, %v4003
        %v4005 = vsel %vm1192, %v3946, 0.0
        %v4006 = vadd.f32 %v4004, %v4005
        %v4007 = vsel %vm1192, %v3947, 0.0
        %v4008 = vadd.f32 %v4006, %v4007
        %v4009 = vsel %vm1192, %v3948, 0.0
        %v4010 = vadd.f32 %v4008, %v4009
        %v4011 = vsel %vm1192, %v3949, 0.0
        %v4012 = vadd.f32 %v4010, %v4011
        %v4013 = vrot.slane %v4012, 4
        %v4014 = vadd.f32 %v4012, %v4013
        %v4015 = vrot.slane %v4014, 2
        %v4016 = vadd.f32 %v4014, %v4015
        %v4017 = vrot.slane %v4016, 1
        %v4018 = vadd.f32 %v4016, %v4017
        %v4019 = vadd.f32 %v2891, %v4018
        %v4020 = vld [vmem:[%s3085] sm:$0xe]
        %v4021 = vld [vmem:[%s3085 + $0xc] sm:$0xe]
        %v4022 = vld [vmem:[%s3085 + $0x18] sm:$0xe]
        %v4023 = vld [vmem:[%s3085 + $0x24] sm:$0xe]
        %v4024 = vld [vmem:[%s3085 + $0x30] sm:$0xe]
        %v4025 = vld [vmem:[%s3085 + $0x3c] sm:$0xe]
        %v4026 = vld [vmem:[%s3085 + $0x48] sm:$0xe]
        %v4027 = vld [vmem:[%s3085 + $0x54] sm:$0xe]
        %v4028 = vld [vmem:[%s3085 + $0x60] sm:$0xe]
        %v4029 = vld [vmem:[%s3085 + $0x6c] sm:$0xe]
        %v4030 = vld [vmem:[%s3085 + $0x78] sm:$0xe]
        %v4031 = vld [vmem:[%s3085 + $0x84] sm:$0xe]
        %v4032 = vld [vmem:[%s3085 + $0x90] sm:$0xe]
        %v4033 = vld [vmem:[%s3085 + $0x9c] sm:$0xe]
        %v4034 = vld [vmem:[%s3085 + $0xa8] sm:$0xe]
        %v4035 = vld [vmem:[%s3085 + $0xb4] sm:$0xe]
        %4036 = vrot.lane.b32.xlu0 %v1949, 4
        %v4037 = vpop.permute.xlu0 %4036
        %4038 = vrot.lane.b32.xlu0 %v1950, 4
        %v4039 = vpop.permute.xlu0 %4038
        %4040 = vrot.lane.b32.xlu0 %v1959, 4
        %v4041 = vpop.permute.xlu0 %4040
        %4042 = vrot.lane.b32.xlu0 %v1960, 4
        %v4043 = vpop.permute.xlu0 %4042
        %4044 = vrot.lane.b32.xlu0 %v1969, 4
        %v4045 = vpop.permute.xlu0 %4044
        %4046 = vrot.lane.b32.xlu0 %v1970, 4
        %v4047 = vpop.permute.xlu0 %4046
        %4048 = vrot.lane.b32.xlu0 %v1979, 4
        %v4049 = vpop.permute.xlu0 %4048
        %4050 = vrot.lane.b32.xlu0 %v1980, 4
        %v4051 = vpop.permute.xlu0 %4050
        %4052 = vrot.lane.b32.xlu0 %v1989, 4
        %v4053 = vpop.permute.xlu0 %4052
        %4054 = vrot.lane.b32.xlu0 %v1990, 4
        %v4055 = vpop.permute.xlu0 %4054
        %4056 = vrot.lane.b32.xlu0 %v1999, 4
        %v4057 = vpop.permute.xlu0 %4056
        %4058 = vrot.lane.b32.xlu0 %v2000, 4
        %v4059 = vpop.permute.xlu0 %4058
        %4060 = vrot.lane.b32.xlu0 %v2009, 4
        %v4061 = vpop.permute.xlu0 %4060
        %4062 = vrot.lane.b32.xlu0 %v2010, 4
        %v4063 = vpop.permute.xlu0 %4062
        %4064 = vrot.lane.b32.xlu0 %v2019, 4
        %v4065 = vpop.permute.xlu0 %4064
        %4066 = vrot.lane.b32.xlu0 %v2020, 4
        %v4067 = vpop.permute.xlu0 %4066
        %4068 = vrot.lane.b32.xlu0 %v2029, 4
        %v4069 = vpop.permute.xlu0 %4068
        %4070 = vrot.lane.b32.xlu0 %v2030, 4
        %v4071 = vpop.permute.xlu0 %4070
        %4072 = vrot.lane.b32.xlu0 %v2039, 4
        %v4073 = vpop.permute.xlu0 %4072
        %4074 = vrot.lane.b32.xlu0 %v2040, 4
        %v4075 = vpop.permute.xlu0 %4074
        %4076 = vrot.lane.b32.xlu0 %v2049, 4
        %v4077 = vpop.permute.xlu0 %4076
        %4078 = vrot.lane.b32.xlu0 %v2050, 4
        %v4079 = vpop.permute.xlu0 %4078
        %4080 = vrot.lane.b32.xlu0 %v2059, 4
        %v4081 = vpop.permute.xlu0 %4080
        %4082 = vrot.lane.b32.xlu0 %v2060, 4
        %v4083 = vpop.permute.xlu0 %4082
        %4084 = vrot.lane.b32.xlu0 %v2069, 4
        %v4085 = vpop.permute.xlu0 %4084
        %4086 = vrot.lane.b32.xlu0 %v2070, 4
        %v4087 = vpop.permute.xlu0 %4086
        %4088 = vrot.lane.b32.xlu0 %v2079, 4
        %v4089 = vpop.permute.xlu0 %4088
        %4090 = vrot.lane.b32.xlu0 %v2080, 4
        %v4091 = vpop.permute.xlu0 %4090
        %4092 = vrot.lane.b32.xlu0 %v2089, 4
        %v4093 = vpop.permute.xlu0 %4092
        %4094 = vrot.lane.b32.xlu0 %v2090, 4
        %v4095 = vpop.permute.xlu0 %4094
        %4096 = vrot.lane.b32.xlu0 %v2099, 4
        %v4097 = vpop.permute.xlu0 %4096
        %4098 = vrot.lane.b32.xlu0 %v2100, 4
        %v4099 = vpop.permute.xlu0 %4098
        %4100 = vrot.lane.b32.xlu0 %v3310, 8
        %v4101 = vpop.permute.xlu0 %4100
        %4102 = vrot.lane.b32.xlu0 %v3311, 8
        %v4103 = vpop.permute.xlu0 %4102
        %4104 = vrot.lane.b32.xlu0 %v3312, 8
        %v4105 = vpop.permute.xlu0 %4104
        %4106 = vrot.lane.b32.xlu0 %v3313, 8
        %v4107 = vpop.permute.xlu0 %4106
        %4108 = vrot.lane.b32.xlu0 %v3314, 8
        %v4109 = vpop.permute.xlu0 %4108
        %4110 = vrot.lane.b32.xlu0 %v3315, 8
        %v4111 = vpop.permute.xlu0 %4110
        %4112 = vrot.lane.b32.xlu0 %v3316, 8
        %v4113 = vpop.permute.xlu0 %4112
        %4114 = vrot.lane.b32.xlu0 %v3317, 8
        %v4115 = vpop.permute.xlu0 %4114
        %4116 = vrot.lane.b32.xlu0 %v3318, 8
        %v4117 = vpop.permute.xlu0 %4116
        %4118 = vrot.lane.b32.xlu0 %v3319, 8
        %v4119 = vpop.permute.xlu0 %4118
        %4120 = vrot.lane.b32.xlu0 %v3320, 8
        %v4121 = vpop.permute.xlu0 %4120
        %4122 = vrot.lane.b32.xlu0 %v3321, 8
        %v4123 = vpop.permute.xlu0 %4122
        %4124 = vrot.lane.b32.xlu0 %v3322, 8
        %v4125 = vpop.permute.xlu0 %4124
        %4126 = vrot.lane.b32.xlu0 %v3323, 8
        %v4127 = vpop.permute.xlu0 %4126
        %4128 = vrot.lane.b32.xlu0 %v3324, 8
        %v4129 = vpop.permute.xlu0 %4128
        %4130 = vrot.lane.b32.xlu0 %v3325, 8
        %v4131 = vpop.permute.xlu0 %4130
        %v4148 = vunpack.c.l.b16 %v4020
        %v4149 = vunpack.c.l.b16 %v4021
        %v4150 = vunpack.c.l.b16 %v4022
        %v4151 = vunpack.c.l.b16 %v4023
        %v4152 = vunpack.c.l.b16 %v4024
        %v4153 = vunpack.c.l.b16 %v4025
        %v4154 = vunpack.c.l.b16 %v4026
        %v4155 = vunpack.c.l.b16 %v4027
        %v4156 = vunpack.c.l.b16 %v4028
        %v4157 = vunpack.c.l.b16 %v4029
        %v4158 = vunpack.c.l.b16 %v4030
        %v4159 = vunpack.c.l.b16 %v4031
        %v4160 = vunpack.c.l.b16 %v4032
        %v4161 = vunpack.c.l.b16 %v4033
        %v4162 = vunpack.c.l.b16 %v4034
        %v4163 = vunpack.c.l.b16 %v4035
        %v4164 = vpack.c.b16 %v3199, %v4148
        %v4165 = vpack.c.b16 %v3201, %v4149
        %v4166 = vpack.c.b16 %v3203, %v4150
        %v4167 = vpack.c.b16 %v3205, %v4151
        %v4168 = vpack.c.b16 %v3207, %v4152
        %v4169 = vpack.c.b16 %v3209, %v4153
        %v4170 = vpack.c.b16 %v3211, %v4154
        %v4171 = vpack.c.b16 %v3213, %v4155
        %v4172 = vpack.c.b16 %v3215, %v4156
        %v4173 = vpack.c.b16 %v3217, %v4157
        %v4174 = vpack.c.b16 %v3219, %v4158
        %v4175 = vpack.c.b16 %v3221, %v4159
        %v4176 = vpack.c.b16 %v3223, %v4160
        %v4177 = vpack.c.b16 %v3225, %v4161
        %v4178 = vpack.c.b16 %v3227, %v4162
        %v4179 = vpack.c.b16 %v3229, %v4163
        %v4181 = vshrl.u32 %v4164, 16
        %v4183 = vshll.u32 %v4164, 16
        %v4185 = vrot.slane %v4183, 1
        %v4186 = vor.u32 %v4181, %v4185
        %v4187 = vsel %vm476, %v4186, %v3336
        %v4188 = vshrl.u32 %v3310, 16
        %v4191 = vshrl.u32 %v4165, 16
        %v4193 = vshll.u32 %v4165, 16
        %v4195 = vrot.slane %v4193, 1
        %v4196 = vor.u32 %v4191, %v4195
        %v4197 = vsel %vm476, %v4196, %v3348
        %v4198 = vshrl.u32 %v3311, 16
        %v4201 = vshrl.u32 %v4166, 16
        %v4203 = vshll.u32 %v4166, 16
        %v4205 = vrot.slane %v4203, 1
        %v4206 = vor.u32 %v4201, %v4205
        %v4207 = vsel %vm476, %v4206, %v3360
        %v4208 = vshrl.u32 %v3312, 16
        %v4211 = vshrl.u32 %v4167, 16
        %v4213 = vshll.u32 %v4167, 16
        %v4215 = vrot.slane %v4213, 1
        %v4216 = vor.u32 %v4211, %v4215
        %v4217 = vsel %vm476, %v4216, %v3372
        %v4218 = vshrl.u32 %v3313, 16
        %v4221 = vshrl.u32 %v4168, 16
        %v4223 = vshll.u32 %v4168, 16
        %v4225 = vrot.slane %v4223, 1
        %v4226 = vor.u32 %v4221, %v4225
        %v4227 = vsel %vm476, %v4226, %v3384
        %v4228 = vshrl.u32 %v3314, 16
        %v4231 = vshrl.u32 %v4169, 16
        %v4233 = vshll.u32 %v4169, 16
        %v4235 = vrot.slane %v4233, 1
        %v4236 = vor.u32 %v4231, %v4235
        %v4237 = vsel %vm476, %v4236, %v3396
        %v4238 = vshrl.u32 %v3315, 16
        %v4241 = vshrl.u32 %v4170, 16
        %v4243 = vshll.u32 %v4170, 16
        %v4245 = vrot.slane %v4243, 1
        %v4246 = vor.u32 %v4241, %v4245
        %v4247 = vsel %vm476, %v4246, %v3408
        %v4248 = vshrl.u32 %v3316, 16
        %v4251 = vshrl.u32 %v4171, 16
        %v4253 = vshll.u32 %v4171, 16
        %v4255 = vrot.slane %v4253, 1
        %v4256 = vor.u32 %v4251, %v4255
        %v4257 = vsel %vm476, %v4256, %v3420
        %v4258 = vshrl.u32 %v3317, 16
        %v4261 = vshrl.u32 %v4172, 16
        %v4263 = vshll.u32 %v4172, 16
        %v4265 = vrot.slane %v4263, 1
        %v4266 = vor.u32 %v4261, %v4265
        %v4267 = vsel %vm476, %v4266, %v3432
        %v4268 = vshrl.u32 %v3318, 16
        %v4271 = vshrl.u32 %v4173, 16
        %v4273 = vshll.u32 %v4173, 16
        %v4275 = vrot.slane %v4273, 1
        %v4276 = vor.u32 %v4271, %v4275
        %v4277 = vsel %vm476, %v4276, %v3444
        %v4278 = vshrl.u32 %v3319, 16
        %v4281 = vshrl.u32 %v4174, 16
        %v4283 = vshll.u32 %v4174, 16
        %v4285 = vrot.slane %v4283, 1
        %v4286 = vor.u32 %v4281, %v4285
        %v4287 = vsel %vm476, %v4286, %v3456
        %v4288 = vshrl.u32 %v3320, 16
        %v4291 = vshrl.u32 %v4175, 16
        %v4293 = vshll.u32 %v4175, 16
        %v4295 = vrot.slane %v4293, 1
        %v4296 = vor.u32 %v4291, %v4295
        %v4297 = vsel %vm476, %v4296, %v3468
        %v4298 = vshrl.u32 %v3321, 16
        %v4301 = vshrl.u32 %v4176, 16
        %v4303 = vshll.u32 %v4176, 16
        %v4305 = vrot.slane %v4303, 1
        %v4306 = vor.u32 %v4301, %v4305
        %v4307 = vsel %vm476, %v4306, %v3480
        %v4308 = vshrl.u32 %v3322, 16
        %v4311 = vshrl.u32 %v4177, 16
        %v4313 = vshll.u32 %v4177, 16
        %v4315 = vrot.slane %v4313, 1
        %v4316 = vor.u32 %v4311, %v4315
        %v4317 = vsel %vm476, %v4316, %v3492
        %v4318 = vshrl.u32 %v3323, 16
        %v4321 = vshrl.u32 %v4178, 16
        %v4323 = vshll.u32 %v4178, 16
        %v4325 = vrot.slane %v4323, 1
        %v4326 = vor.u32 %v4321, %v4325
        %v4327 = vsel %vm476, %v4326, %v3504
        %v4328 = vshrl.u32 %v3324, 16
        %v4331 = vshrl.u32 %v4179, 16
        %v4333 = vshll.u32 %v4179, 16
        %v4335 = vrot.slane %v4333, 1
        %v4336 = vor.u32 %v4331, %v4335
        %v4337 = vsel %vm476, %v4336, %v3516
        %v4338 = vshrl.u32 %v3325, 16
        %4340 = vrot.lane.b32.xlu0 %v4187, 12
        %v4341 = vpop.permute.xlu0 %4340
        %4342 = vrot.lane.b32.xlu0 %v4188, 12
        %v4343 = vpop.permute.xlu0 %4342
        %4344 = vrot.lane.b32.xlu0 %v4197, 12
        %v4345 = vpop.permute.xlu0 %4344
        %4346 = vrot.lane.b32.xlu0 %v4198, 12
        %v4347 = vpop.permute.xlu0 %4346
        %4348 = vrot.lane.b32.xlu0 %v4207, 12
        %v4349 = vpop.permute.xlu0 %4348
        %4350 = vrot.lane.b32.xlu0 %v4208, 12
        %v4351 = vpop.permute.xlu0 %4350
        %4352 = vrot.lane.b32.xlu0 %v4217, 12
        %v4353 = vpop.permute.xlu0 %4352
        %4354 = vrot.lane.b32.xlu0 %v4218, 12
        %v4355 = vpop.permute.xlu0 %4354
        %4356 = vrot.lane.b32.xlu0 %v4227, 12
        %v4357 = vpop.permute.xlu0 %4356
        %4358 = vrot.lane.b32.xlu0 %v4228, 12
        %v4359 = vpop.permute.xlu0 %4358
        %4360 = vrot.lane.b32.xlu0 %v4237, 12
        %v4361 = vpop.permute.xlu0 %4360
        %4362 = vrot.lane.b32.xlu0 %v4238, 12
        %v4363 = vpop.permute.xlu0 %4362
        %4364 = vrot.lane.b32.xlu0 %v4247, 12
        %v4365 = vpop.permute.xlu0 %4364
        %4366 = vrot.lane.b32.xlu0 %v4248, 12
        %v4367 = vpop.permute.xlu0 %4366
        %4368 = vrot.lane.b32.xlu0 %v4257, 12
        %v4369 = vpop.permute.xlu0 %4368
        %4370 = vrot.lane.b32.xlu0 %v4258, 12
        %v4371 = vpop.permute.xlu0 %4370
        %4372 = vrot.lane.b32.xlu0 %v4267, 12
        %v4373 = vpop.permute.xlu0 %4372
        %4374 = vrot.lane.b32.xlu0 %v4268, 12
        %v4375 = vpop.permute.xlu0 %4374
        %4376 = vrot.lane.b32.xlu0 %v4277, 12
        %v4377 = vpop.permute.xlu0 %4376
        %4378 = vrot.lane.b32.xlu0 %v4278, 12
        %v4379 = vpop.permute.xlu0 %4378
        %4380 = vrot.lane.b32.xlu0 %v4287, 12
        %v4381 = vpop.permute.xlu0 %4380
        %4382 = vrot.lane.b32.xlu0 %v4288, 12
        %v4383 = vpop.permute.xlu0 %4382
        %4384 = vrot.lane.b32.xlu0 %v4297, 12
        %v4385 = vpop.permute.xlu0 %4384
        %4386 = vrot.lane.b32.xlu0 %v4298, 12
        %v4387 = vpop.permute.xlu0 %4386
        %4388 = vrot.lane.b32.xlu0 %v4307, 12
        %v4389 = vpop.permute.xlu0 %4388
        %4390 = vrot.lane.b32.xlu0 %v4308, 12
        %v4391 = vpop.permute.xlu0 %4390
        %4392 = vrot.lane.b32.xlu0 %v4317, 12
        %v4393 = vpop.permute.xlu0 %4392
        %4394 = vrot.lane.b32.xlu0 %v4318, 12
        %v4395 = vpop.permute.xlu0 %4394
        %4396 = vrot.lane.b32.xlu0 %v4327, 12
        %v4397 = vpop.permute.xlu0 %4396
        %4398 = vrot.lane.b32.xlu0 %v4328, 12
        %v4399 = vpop.permute.xlu0 %4398
        %4400 = vrot.lane.b32.xlu0 %v4337, 12
        %v4401 = vpop.permute.xlu0 %4400
        %4402 = vrot.lane.b32.xlu0 %v4338, 12
        %v4403 = vpop.permute.xlu0 %4402
        %v4405 = vsel %vm1085, %v765, %v4037
        %v4407 = vsel %vm1085, %v845, %v4039
        %v4409 = vsel %vm1085, %v766, %v4041
        %v4411 = vsel %vm1085, %v846, %v4043
        %v4413 = vsel %vm1085, %v767, %v4045
        %v4415 = vsel %vm1085, %v847, %v4047
        %v4417 = vsel %vm1085, %v768, %v4049
        %v4419 = vsel %vm1085, %v848, %v4051
        %v4421 = vsel %vm1085, %v769, %v4053
        %v4423 = vsel %vm1085, %v849, %v4055
        %v4425 = vsel %vm1085, %v770, %v4057
        %v4427 = vsel %vm1085, %v850, %v4059
        %v4429 = vsel %vm1085, %v771, %v4061
        %v4431 = vsel %vm1085, %v851, %v4063
        %v4433 = vsel %vm1085, %v772, %v4065
        %v4435 = vsel %vm1085, %v852, %v4067
        %v4437 = vsel %vm1085, %v773, %v4069
        %v4439 = vsel %vm1085, %v853, %v4071
        %v4441 = vsel %vm1085, %v774, %v4073
        %v4443 = vsel %vm1085, %v854, %v4075
        %v4445 = vsel %vm1085, %v775, %v4077
        %v4447 = vsel %vm1085, %v855, %v4079
        %v4449 = vsel %vm1085, %v776, %v4081
        %v4451 = vsel %vm1085, %v856, %v4083
        %v4453 = vsel %vm1085, %v777, %v4085
        %v4455 = vsel %vm1085, %v857, %v4087
        %v4457 = vsel %vm1085, %v778, %v4089
        %v4459 = vsel %vm1085, %v858, %v4091
        %v4461 = vsel %vm1085, %v779, %v4093
        %v4463 = vsel %vm1085, %v859, %v4095
        %v4465 = vsel %vm1085, %v780, %v4097
        %v4467 = vsel %vm1085, %v860, %v4099
        %v4468 = vsel %vm1118, %v4405, %v3247
        %v4470 = vsel %vm1118, %v4407, %v4101
        %v4471 = vsel %vm1118, %v4409, %v3249
        %v4473 = vsel %vm1118, %v4411, %v4103
        %v4474 = vsel %vm1118, %v4413, %v3251
        %v4476 = vsel %vm1118, %v4415, %v4105
        %v4477 = vsel %vm1118, %v4417, %v3253
        %v4479 = vsel %vm1118, %v4419, %v4107
        %v4480 = vsel %vm1118, %v4421, %v3255
        %v4482 = vsel %vm1118, %v4423, %v4109
        %v4483 = vsel %vm1118, %v4425, %v3257
        %v4485 = vsel %vm1118, %v4427, %v4111
        %v4486 = vsel %vm1118, %v4429, %v3259
        %v4488 = vsel %vm1118, %v4431, %v4113
        %v4489 = vsel %vm1118, %v4433, %v3261
        %v4491 = vsel %vm1118, %v4435, %v4115
        %v4492 = vsel %vm1118, %v4437, %v3263
        %v4494 = vsel %vm1118, %v4439, %v4117
        %v4495 = vsel %vm1118, %v4441, %v3265
        %v4497 = vsel %vm1118, %v4443, %v4119
        %v4498 = vsel %vm1118, %v4445, %v3267
        %v4500 = vsel %vm1118, %v4447, %v4121
        %v4501 = vsel %vm1118, %v4449, %v3269
        %v4503 = vsel %vm1118, %v4451, %v4123
        %v4504 = vsel %vm1118, %v4453, %v3271
        %v4506 = vsel %vm1118, %v4455, %v4125
        %v4507 = vsel %vm1118, %v4457, %v3273
        %v4509 = vsel %vm1118, %v4459, %v4127
        %v4510 = vsel %vm1118, %v4461, %v3275
        %v4512 = vsel %vm1118, %v4463, %v4129
        %v4513 = vsel %vm1118, %v4465, %v3277
        %v4515 = vsel %vm1118, %v4467, %v4131
        %v4517 = vsel %vm1151, %v4468, %v4341
        %v4519 = vsel %vm1151, %v4470, %v4343
        %v4521 = vsel %vm1151, %v4471, %v4345
        %v4523 = vsel %vm1151, %v4473, %v4347
        %v4525 = vsel %vm1151, %v4474, %v4349
        %v4527 = vsel %vm1151, %v4476, %v4351
        %v4529 = vsel %vm1151, %v4477, %v4353
        %v4531 = vsel %vm1151, %v4479, %v4355
        %v4533 = vsel %vm1151, %v4480, %v4357
        %v4535 = vsel %vm1151, %v4482, %v4359
        %v4537 = vsel %vm1151, %v4483, %v4361
        %v4539 = vsel %vm1151, %v4485, %v4363
        %v4541 = vsel %vm1151, %v4486, %v4365
        %v4543 = vsel %vm1151, %v4488, %v4367
        %v4545 = vsel %vm1151, %v4489, %v4369
        %v4547 = vsel %vm1151, %v4491, %v4371
        %v4549 = vsel %vm1151, %v4492, %v4373
        %v4551 = vsel %vm1151, %v4494, %v4375
        %v4553 = vsel %vm1151, %v4495, %v4377
        %v4555 = vsel %vm1151, %v4497, %v4379
        %v4557 = vsel %vm1151, %v4498, %v4381
        %v4559 = vsel %vm1151, %v4500, %v4383
        %v4561 = vsel %vm1151, %v4501, %v4385
        %v4563 = vsel %vm1151, %v4503, %v4387
        %v4565 = vsel %vm1151, %v4504, %v4389
        %v4567 = vsel %vm1151, %v4506, %v4391
        %v4569 = vsel %vm1151, %v4507, %v4393
        %v4571 = vsel %vm1151, %v4509, %v4395
        %v4573 = vsel %vm1151, %v4510, %v4397
        %v4575 = vsel %vm1151, %v4512, %v4399
        %v4577 = vsel %vm1151, %v4513, %v4401
        %v4579 = vsel %vm1151, %v4515, %v4403
        %v4580 = vshrl.u32 %v4517, 16
        %v4582 = vshll.u32 %v4517, 16
        %v4584 = vrot.slane %v4582, 1
        %v4585 = vor.u32 %v4580, %v4584
        %v4586 = vshll.u32 %v4519, 16
        %v4588 = vrot.slane %v4586, 1
        %v4589 = vsel %vm476, %v4585, %v4588
        %v4590 = vshrl.u32 %v4521, 16
        %v4592 = vshll.u32 %v4521, 16
        %v4594 = vrot.slane %v4592, 1
        %v4595 = vor.u32 %v4590, %v4594
        %v4596 = vshll.u32 %v4523, 16
        %v4598 = vrot.slane %v4596, 1
        %v4599 = vsel %vm476, %v4595, %v4598
        %v4600 = vshrl.u32 %v4525, 16
        %v4602 = vshll.u32 %v4525, 16
        %v4604 = vrot.slane %v4602, 1
        %v4605 = vor.u32 %v4600, %v4604
        %v4606 = vshll.u32 %v4527, 16
        %v4608 = vrot.slane %v4606, 1
        %v4609 = vsel %vm476, %v4605, %v4608
        %v4610 = vshrl.u32 %v4529, 16
        %v4612 = vshll.u32 %v4529, 16
        %v4614 = vrot.slane %v4612, 1
        %v4615 = vor.u32 %v4610, %v4614
        %v4616 = vshll.u32 %v4531, 16
        %v4618 = vrot.slane %v4616, 1
        %v4619 = vsel %vm476, %v4615, %v4618
        %v4620 = vshrl.u32 %v4533, 16
        %v4622 = vshll.u32 %v4533, 16
        %v4624 = vrot.slane %v4622, 1
        %v4625 = vor.u32 %v4620, %v4624
        %v4626 = vshll.u32 %v4535, 16
        %v4628 = vrot.slane %v4626, 1
        %v4629 = vsel %vm476, %v4625, %v4628
        %v4630 = vshrl.u32 %v4537, 16
        %v4632 = vshll.u32 %v4537, 16
        %v4634 = vrot.slane %v4632, 1
        %v4635 = vor.u32 %v4630, %v4634
        %v4636 = vshll.u32 %v4539, 16
        %v4638 = vrot.slane %v4636, 1
        %v4639 = vsel %vm476, %v4635, %v4638
        %v4640 = vshrl.u32 %v4541, 16
        %v4642 = vshll.u32 %v4541, 16
        %v4644 = vrot.slane %v4642, 1
        %v4645 = vor.u32 %v4640, %v4644
        %v4646 = vshll.u32 %v4543, 16
        %v4648 = vrot.slane %v4646, 1
        %v4649 = vsel %vm476, %v4645, %v4648
        %v4650 = vshrl.u32 %v4545, 16
        %v4652 = vshll.u32 %v4545, 16
        %v4654 = vrot.slane %v4652, 1
        %v4655 = vor.u32 %v4650, %v4654
        %v4656 = vshll.u32 %v4547, 16
        %v4658 = vrot.slane %v4656, 1
        %v4659 = vsel %vm476, %v4655, %v4658
        %v4660 = vshrl.u32 %v4549, 16
        %v4662 = vshll.u32 %v4549, 16
        %v4664 = vrot.slane %v4662, 1
        %v4665 = vor.u32 %v4660, %v4664
        %v4666 = vshll.u32 %v4551, 16
        %v4668 = vrot.slane %v4666, 1
        %v4669 = vsel %vm476, %v4665, %v4668
        %v4670 = vshrl.u32 %v4553, 16
        %v4672 = vshll.u32 %v4553, 16
        %v4674 = vrot.slane %v4672, 1
        %v4675 = vor.u32 %v4670, %v4674
        %v4676 = vshll.u32 %v4555, 16
        %v4678 = vrot.slane %v4676, 1
        %v4679 = vsel %vm476, %v4675, %v4678
        %v4680 = vshrl.u32 %v4557, 16
        %v4682 = vshll.u32 %v4557, 16
        %v4684 = vrot.slane %v4682, 1
        %v4685 = vor.u32 %v4680, %v4684
        %v4686 = vshll.u32 %v4559, 16
        %v4688 = vrot.slane %v4686, 1
        %v4689 = vsel %vm476, %v4685, %v4688
        %v4690 = vshrl.u32 %v4561, 16
        %v4692 = vshll.u32 %v4561, 16
        %v4694 = vrot.slane %v4692, 1
        %v4695 = vor.u32 %v4690, %v4694
        %v4696 = vshll.u32 %v4563, 16
        %v4698 = vrot.slane %v4696, 1
        %v4699 = vsel %vm476, %v4695, %v4698
        %v4700 = vshrl.u32 %v4565, 16
        %v4702 = vshll.u32 %v4565, 16
        %v4704 = vrot.slane %v4702, 1
        %v4705 = vor.u32 %v4700, %v4704
        %v4706 = vshll.u32 %v4567, 16
        %v4708 = vrot.slane %v4706, 1
        %v4709 = vsel %vm476, %v4705, %v4708
        %v4710 = vshrl.u32 %v4569, 16
        %v4712 = vshll.u32 %v4569, 16
        %v4714 = vrot.slane %v4712, 1
        %v4715 = vor.u32 %v4710, %v4714
        %v4716 = vshll.u32 %v4571, 16
        %v4718 = vrot.slane %v4716, 1
        %v4719 = vsel %vm476, %v4715, %v4718
        %v4720 = vshrl.u32 %v4573, 16
        %v4722 = vshll.u32 %v4573, 16
        %v4724 = vrot.slane %v4722, 1
        %v4725 = vor.u32 %v4720, %v4724
        %v4726 = vshll.u32 %v4575, 16
        %v4728 = vrot.slane %v4726, 1
        %v4729 = vsel %vm476, %v4725, %v4728
        %v4730 = vshrl.u32 %v4577, 16
        %v4732 = vshll.u32 %v4577, 16
        %v4734 = vrot.slane %v4732, 1
        %v4735 = vor.u32 %v4730, %v4734
        %v4736 = vshll.u32 %v4579, 16
        %v4738 = vrot.slane %v4736, 1
        %v4739 = vsel %vm476, %v4735, %v4738
        %s4740 = scalar_lea.vmem %s1, 24
        %v4741 = vld [vmem:[%s4740] sm:$0xf]
        %v4742 = vld [vmem:[%s4740 + $0x4] sm:$0xf]
        %v4745 = vunpack.c.l.b16 %v4741
        %v4746 = vunpack.c.l.b16 %v4742
        %v4747 = vpack.c.b16 %v4746, %v4745
        %v4750 = vsel %vm1192, %v4589, 0
        %v4753 = vsel %vm1192, %v4599, 0
        %v4756 = vsel %vm1192, %v4609, 0
        %v4759 = vsel %vm1192, %v4619, 0
        %v4762 = vsel %vm1192, %v4629, 0
        %v4765 = vsel %vm1192, %v4639, 0
        %v4768 = vsel %vm1192, %v4649, 0
        %v4771 = vsel %vm1192, %v4659, 0
        %v4774 = vsel %vm1192, %v4669, 0
        %v4777 = vsel %vm1192, %v4679, 0
        %v4780 = vsel %vm1192, %v4689, 0
        %v4783 = vsel %vm1192, %v4699, 0
        %v4786 = vsel %vm1192, %v4709, 0
        %v4789 = vsel %vm1192, %v4719, 0
        %v4792 = vsel %vm1192, %v4729, 0
        %v4795 = vsel %vm1192, %v4739, 0
        %4797 = vmatprep.subr.bf16.mxu0 0
        %4798 = vmatpush1.bf16.msra.mxu0 0
        %4799 = vmatprep.subr.bf16.mxu0 0
        %4800 = vmatpush1.bf16.msra.mxu0 0
        %4801 = vmatprep.subr.bf16.mxu0 0
        %4802 = vmatpush1.bf16.msra.mxu0 0
        %4803 = vmatprep.subr.bf16.mxu0 0
        %4804 = vmatpush1.bf16.msra.mxu0 0
        %4805 = vmatprep.subr.bf16.mxu0 0
        %4806 = vmatpush1.bf16.msra.mxu0 0
        %4807 = vmatprep.subr.bf16.mxu0 0
        %4808 = vmatpush1.bf16.msra.mxu0 0
        %4809 = vmatprep.subr.bf16.mxu0 0
        %4810 = vmatpush1.bf16.msra.mxu0 0
        %4811 = vmatprep.subr.bf16.mxu0 0
        %4812 = vmatpush1.bf16.msra.mxu0 %v4747
        %4813 = vmatprep.subr.bf16.mxu0 0
        %4814 = vmatpush2.bf16.msra.mxu0 0
        %4815 = vmatprep.subr.bf16.mxu0 0
        %4816 = vmatpush2.bf16.msra.mxu0 0
        %4817 = vmatprep.subr.bf16.mxu0 0
        %4818 = vmatpush2.bf16.msra.mxu0 0
        %4819 = vmatprep.subr.bf16.mxu0 0
        %4820 = vmatpush2.bf16.msra.mxu0 0
        %4821 = vmatprep.subr.bf16.mxu0 0
        %4822 = vmatpush2.bf16.msra.mxu0 0
        %4823 = vmatprep.subr.bf16.mxu0 0
        %4824 = vmatpush2.bf16.msra.mxu0 0
        %4825 = vmatprep.subr.bf16.mxu0 0
        %4826 = vmatpush2.bf16.msra.mxu0 0
        %4827 = vmatprep.subr.bf16.mxu0 0
        %4828 = vmatpush2.bf16.msra.mxu0 0
        %4829 = vmatprep.mubr.bf16.mxu0 0
        %4830 = vmatmul.mubr.bf16.gmra.mxu0 %v4750
        %v4831 = vpop.f32.mrf.mxu0
        %v4832 = vadd.f32 0.0, %v4831
        %v4833 = vpop.f32.mrf.mxu0
        %v4834 = vpop.f32.mrf.mxu0
        %v4835 = vadd.f32 0.0, %v4834
        %v4836 = vpop.f32.mrf.mxu0
        %4837 = vmatprep.mubr.bf16.mxu0 0
        %4838 = vmatmul.mubr.bf16.gmra.mxu0 %v4753
        %v4839 = vpop.f32.mrf.mxu0
        %v4840 = vadd.f32 0.0, %v4839
        %v4841 = vpop.f32.mrf.mxu0
        %v4842 = vpop.f32.mrf.mxu0
        %v4843 = vadd.f32 0.0, %v4842
        %v4844 = vpop.f32.mrf.mxu0
        %4845 = vmatprep.mubr.bf16.mxu0 0
        %4846 = vmatmul.mubr.bf16.gmra.mxu0 %v4756
        %v4847 = vpop.f32.mrf.mxu0
        %v4848 = vadd.f32 0.0, %v4847
        %v4849 = vpop.f32.mrf.mxu0
        %v4850 = vpop.f32.mrf.mxu0
        %v4851 = vadd.f32 0.0, %v4850
        %v4852 = vpop.f32.mrf.mxu0
        %4853 = vmatprep.mubr.bf16.mxu0 0
        %4854 = vmatmul.mubr.bf16.gmra.mxu0 %v4759
        %v4855 = vpop.f32.mrf.mxu0
        %v4856 = vadd.f32 0.0, %v4855
        %v4857 = vpop.f32.mrf.mxu0
        %v4858 = vpop.f32.mrf.mxu0
        %v4859 = vadd.f32 0.0, %v4858
        %v4860 = vpop.f32.mrf.mxu0
        %4861 = vmatprep.mubr.bf16.mxu0 0
        %4862 = vmatmul.mubr.bf16.gmra.mxu0 %v4762
        %v4863 = vpop.f32.mrf.mxu0
        %v4864 = vadd.f32 0.0, %v4863
        %v4865 = vpop.f32.mrf.mxu0
        %v4866 = vpop.f32.mrf.mxu0
        %v4867 = vadd.f32 0.0, %v4866
        %v4868 = vpop.f32.mrf.mxu0
        %4869 = vmatprep.mubr.bf16.mxu0 0
        %4870 = vmatmul.mubr.bf16.gmra.mxu0 %v4765
        %v4871 = vpop.f32.mrf.mxu0
        %v4872 = vadd.f32 0.0, %v4871
        %v4873 = vpop.f32.mrf.mxu0
        %v4874 = vpop.f32.mrf.mxu0
        %v4875 = vadd.f32 0.0, %v4874
        %v4876 = vpop.f32.mrf.mxu0
        %4877 = vmatprep.mubr.bf16.mxu0 0
        %4878 = vmatmul.mubr.bf16.gmra.mxu0 %v4768
        %v4879 = vpop.f32.mrf.mxu0
        %v4880 = vadd.f32 0.0, %v4879
        %v4881 = vpop.f32.mrf.mxu0
        %v4882 = vpop.f32.mrf.mxu0
        %v4883 = vadd.f32 0.0, %v4882
        %v4884 = vpop.f32.mrf.mxu0
        %4885 = vmatprep.mubr.bf16.mxu0 0
        %4886 = vmatmul.mubr.bf16.gmra.mxu0 %v4771
        %v4887 = vpop.f32.mrf.mxu0
        %v4888 = vadd.f32 0.0, %v4887
        %v4889 = vpop.f32.mrf.mxu0
        %v4890 = vpop.f32.mrf.mxu0
        %v4891 = vadd.f32 0.0, %v4890
        %v4892 = vpop.f32.mrf.mxu0
        %4893 = vmatprep.mubr.bf16.mxu0 0
        %4894 = vmatmul.mubr.bf16.gmra.mxu0 %v4774
        %v4895 = vpop.f32.mrf.mxu0
        %v4896 = vadd.f32 0.0, %v4895
        %v4897 = vpop.f32.mrf.mxu0
        %v4898 = vpop.f32.mrf.mxu0
        %v4899 = vadd.f32 0.0, %v4898
        %v4900 = vpop.f32.mrf.mxu0
        %4901 = vmatprep.mubr.bf16.mxu0 0
        %4902 = vmatmul.mubr.bf16.gmra.mxu0 %v4777
        %v4903 = vpop.f32.mrf.mxu0
        %v4904 = vadd.f32 0.0, %v4903
        %v4905 = vpop.f32.mrf.mxu0
        %v4906 = vpop.f32.mrf.mxu0
        %v4907 = vadd.f32 0.0, %v4906
        %v4908 = vpop.f32.mrf.mxu0
        %4909 = vmatprep.mubr.bf16.mxu0 0
        %4910 = vmatmul.mubr.bf16.gmra.mxu0 %v4780
        %v4911 = vpop.f32.mrf.mxu0
        %v4912 = vadd.f32 0.0, %v4911
        %v4913 = vpop.f32.mrf.mxu0
        %v4914 = vpop.f32.mrf.mxu0
        %v4915 = vadd.f32 0.0, %v4914
        %v4916 = vpop.f32.mrf.mxu0
        %4917 = vmatprep.mubr.bf16.mxu0 0
        %4918 = vmatmul.mubr.bf16.gmra.mxu0 %v4783
        %v4919 = vpop.f32.mrf.mxu0
        %v4920 = vadd.f32 0.0, %v4919
        %v4921 = vpop.f32.mrf.mxu0
        %v4922 = vpop.f32.mrf.mxu0
        %v4923 = vadd.f32 0.0, %v4922
        %v4924 = vpop.f32.mrf.mxu0
        %4925 = vmatprep.mubr.bf16.mxu0 0
        %4926 = vmatmul.mubr.bf16.gmra.mxu0 %v4786
        %v4927 = vpop.f32.mrf.mxu0
        %v4928 = vadd.f32 0.0, %v4927
        %v4929 = vpop.f32.mrf.mxu0
        %v4930 = vpop.f32.mrf.mxu0
        %v4931 = vadd.f32 0.0, %v4930
        %v4932 = vpop.f32.mrf.mxu0
        %4933 = vmatprep.mubr.bf16.mxu0 0
        %4934 = vmatmul.mubr.bf16.gmra.mxu0 %v4789
        %v4935 = vpop.f32.mrf.mxu0
        %v4936 = vadd.f32 0.0, %v4935
        %v4937 = vpop.f32.mrf.mxu0
        %v4938 = vpop.f32.mrf.mxu0
        %v4939 = vadd.f32 0.0, %v4938
        %v4940 = vpop.f32.mrf.mxu0
        %4941 = vmatprep.mubr.bf16.mxu0 0
        %4942 = vmatmul.mubr.bf16.gmra.mxu0 %v4792
        %v4943 = vpop.f32.mrf.mxu0
        %v4944 = vadd.f32 0.0, %v4943
        %v4945 = vpop.f32.mrf.mxu0
        %v4946 = vpop.f32.mrf.mxu0
        %v4947 = vadd.f32 0.0, %v4946
        %v4948 = vpop.f32.mrf.mxu0
        %4949 = vmatprep.mubr.bf16.mxu0 0
        %4950 = vmatmul.mubr.bf16.gmra.mxu0 %v4795
        %v4951 = vpop.f32.mrf.mxu0
        %v4952 = vadd.f32 0.0, %v4951
        %v4953 = vpop.f32.mrf.mxu0
        %v4954 = vpop.f32.mrf.mxu0
        %v4955 = vadd.f32 0.0, %v4954
        %v4956 = vpop.f32.mrf.mxu0
        %4957 = vdwg.mxu0
        %v4958 = vsel %vm1192, %v4832, 0.0
        %v4959 = vsel %vm1192, %v4835, 0.0
        %v4960 = vadd.f32 %v4958, %v4959
        %v4961 = vsel %vm1192, %v4840, 0.0
        %v4962 = vadd.f32 %v4960, %v4961
        %v4963 = vsel %vm1192, %v4843, 0.0
        %v4964 = vadd.f32 %v4962, %v4963
        %v4965 = vsel %vm1192, %v4848, 0.0
        %v4966 = vadd.f32 %v4964, %v4965
        %v4967 = vsel %vm1192, %v4851, 0.0
        %v4968 = vadd.f32 %v4966, %v4967
        %v4969 = vsel %vm1192, %v4856, 0.0
        %v4970 = vadd.f32 %v4968, %v4969
        %v4971 = vsel %vm1192, %v4859, 0.0
        %v4972 = vadd.f32 %v4970, %v4971
        %v4973 = vsel %vm1192, %v4864, 0.0
        %v4974 = vadd.f32 %v4972, %v4973
        %v4975 = vsel %vm1192, %v4867, 0.0
        %v4976 = vadd.f32 %v4974, %v4975
        %v4977 = vsel %vm1192, %v4872, 0.0
        %v4978 = vadd.f32 %v4976, %v4977
        %v4979 = vsel %vm1192, %v4875, 0.0
        %v4980 = vadd.f32 %v4978, %v4979
        %v4981 = vsel %vm1192, %v4880, 0.0
        %v4982 = vadd.f32 %v4980, %v4981
        %v4983 = vsel %vm1192, %v4883, 0.0
        %v4984 = vadd.f32 %v4982, %v4983
        %v4985 = vsel %vm1192, %v4888, 0.0
        %v4986 = vadd.f32 %v4984, %v4985
        %v4987 = vsel %vm1192, %v4891, 0.0
        %v4988 = vadd.f32 %v4986, %v4987
        %v4989 = vsel %vm1192, %v4896, 0.0
        %v4990 = vadd.f32 %v4988, %v4989
        %v4991 = vsel %vm1192, %v4899, 0.0
        %v4992 = vadd.f32 %v4990, %v4991
        %v4993 = vsel %vm1192, %v4904, 0.0
        %v4994 = vadd.f32 %v4992, %v4993
        %v4995 = vsel %vm1192, %v4907, 0.0
        %v4996 = vadd.f32 %v4994, %v4995
        %v4997 = vsel %vm1192, %v4912, 0.0
        %v4998 = vadd.f32 %v4996, %v4997
        %v4999 = vsel %vm1192, %v4915, 0.0
        %v5000 = vadd.f32 %v4998, %v4999
        %v5001 = vsel %vm1192, %v4920, 0.0
        %v5002 = vadd.f32 %v5000, %v5001
        %v5003 = vsel %vm1192, %v4923, 0.0
        %v5004 = vadd.f32 %v5002, %v5003
        %v5005 = vsel %vm1192, %v4928, 0.0
        %v5006 = vadd.f32 %v5004, %v5005
        %v5007 = vsel %vm1192, %v4931, 0.0
        %v5008 = vadd.f32 %v5006, %v5007
        %v5009 = vsel %vm1192, %v4936, 0.0
        %v5010 = vadd.f32 %v5008, %v5009
        %v5011 = vsel %vm1192, %v4939, 0.0
        %v5012 = vadd.f32 %v5010, %v5011
        %v5013 = vsel %vm1192, %v4944, 0.0
        %v5014 = vadd.f32 %v5012, %v5013
        %v5015 = vsel %vm1192, %v4947, 0.0
        %v5016 = vadd.f32 %v5014, %v5015
        %v5017 = vsel %vm1192, %v4952, 0.0
        %v5018 = vadd.f32 %v5016, %v5017
        %v5019 = vsel %vm1192, %v4955, 0.0
        %v5020 = vadd.f32 %v5018, %v5019
        %v5021 = vrot.slane %v5020, 4
        %v5022 = vadd.f32 %v5020, %v5021
        %v5023 = vrot.slane %v5022, 2
        %v5024 = vadd.f32 %v5022, %v5023
        %v5025 = vrot.slane %v5024, 1
        %v5026 = vadd.f32 %v5024, %v5025
        %v5027 = vadd.f32 %v3917, %v5026
        %v5028 = vmul.f32 %v4832, %v4832
        %v5029 = vmul.f32 %v4835, %v4835
        %v5030 = vmul.f32 %v4840, %v4840
        %v5031 = vmul.f32 %v4843, %v4843
        %v5032 = vmul.f32 %v4848, %v4848
        %v5033 = vmul.f32 %v4851, %v4851
        %v5034 = vmul.f32 %v4856, %v4856
        %v5035 = vmul.f32 %v4859, %v4859
        %v5036 = vmul.f32 %v4864, %v4864
        %v5037 = vmul.f32 %v4867, %v4867
        %v5038 = vmul.f32 %v4872, %v4872
        %v5039 = vmul.f32 %v4875, %v4875
        %v5040 = vmul.f32 %v4880, %v4880
        %v5041 = vmul.f32 %v4883, %v4883
        %v5042 = vmul.f32 %v4888, %v4888
        %v5043 = vmul.f32 %v4891, %v4891
        %v5044 = vmul.f32 %v4896, %v4896
        %v5045 = vmul.f32 %v4899, %v4899
        %v5046 = vmul.f32 %v4904, %v4904
        %v5047 = vmul.f32 %v4907, %v4907
        %v5048 = vmul.f32 %v4912, %v4912
        %v5049 = vmul.f32 %v4915, %v4915
        %v5050 = vmul.f32 %v4920, %v4920
        %v5051 = vmul.f32 %v4923, %v4923
        %v5052 = vmul.f32 %v4928, %v4928
        %v5053 = vmul.f32 %v4931, %v4931
        %v5054 = vmul.f32 %v4936, %v4936
        %v5055 = vmul.f32 %v4939, %v4939
        %v5056 = vmul.f32 %v4944, %v4944
        %v5057 = vmul.f32 %v4947, %v4947
        %v5058 = vmul.f32 %v4952, %v4952
        %v5059 = vmul.f32 %v4955, %v4955
        %v5060 = vsel %vm1192, %v5028, 0.0
        %v5061 = vsel %vm1192, %v5029, 0.0
        %v5062 = vadd.f32 %v5060, %v5061
        %v5063 = vsel %vm1192, %v5030, 0.0
        %v5064 = vadd.f32 %v5062, %v5063
        %v5065 = vsel %vm1192, %v5031, 0.0
        %v5066 = vadd.f32 %v5064, %v5065
        %v5067 = vsel %vm1192, %v5032, 0.0
        %v5068 = vadd.f32 %v5066, %v5067
        %v5069 = vsel %vm1192, %v5033, 0.0
        %v5070 = vadd.f32 %v5068, %v5069
        %v5071 = vsel %vm1192, %v5034, 0.0
        %v5072 = vadd.f32 %v5070, %v5071
        %v5073 = vsel %vm1192, %v5035, 0.0
        %v5074 = vadd.f32 %v5072, %v5073
        %v5075 = vsel %vm1192, %v5036, 0.0
        %v5076 = vadd.f32 %v5074, %v5075
        %v5077 = vsel %vm1192, %v5037, 0.0
        %v5078 = vadd.f32 %v5076, %v5077
        %v5079 = vsel %vm1192, %v5038, 0.0
        %v5080 = vadd.f32 %v5078, %v5079
        %v5081 = vsel %vm1192, %v5039, 0.0
        %v5082 = vadd.f32 %v5080, %v5081
        %v5083 = vsel %vm1192, %v5040, 0.0
        %v5084 = vadd.f32 %v5082, %v5083
        %v5085 = vsel %vm1192, %v5041, 0.0
        %v5086 = vadd.f32 %v5084, %v5085
        %v5087 = vsel %vm1192, %v5042, 0.0
        %v5088 = vadd.f32 %v5086, %v5087
        %v5089 = vsel %vm1192, %v5043, 0.0
        %v5090 = vadd.f32 %v5088, %v5089
        %v5091 = vsel %vm1192, %v5044, 0.0
        %v5092 = vadd.f32 %v5090, %v5091
        %v5093 = vsel %vm1192, %v5045, 0.0
        %v5094 = vadd.f32 %v5092, %v5093
        %v5095 = vsel %vm1192, %v5046, 0.0
        %v5096 = vadd.f32 %v5094, %v5095
        %v5097 = vsel %vm1192, %v5047, 0.0
        %v5098 = vadd.f32 %v5096, %v5097
        %v5099 = vsel %vm1192, %v5048, 0.0
        %v5100 = vadd.f32 %v5098, %v5099
        %v5101 = vsel %vm1192, %v5049, 0.0
        %v5102 = vadd.f32 %v5100, %v5101
        %v5103 = vsel %vm1192, %v5050, 0.0
        %v5104 = vadd.f32 %v5102, %v5103
        %v5105 = vsel %vm1192, %v5051, 0.0
        %v5106 = vadd.f32 %v5104, %v5105
        %v5107 = vsel %vm1192, %v5052, 0.0
        %v5108 = vadd.f32 %v5106, %v5107
        %v5109 = vsel %vm1192, %v5053, 0.0
        %v5110 = vadd.f32 %v5108, %v5109
        %v5111 = vsel %vm1192, %v5054, 0.0
        %v5112 = vadd.f32 %v5110, %v5111
        %v5113 = vsel %vm1192, %v5055, 0.0
        %v5114 = vadd.f32 %v5112, %v5113
        %v5115 = vsel %vm1192, %v5056, 0.0
        %v5116 = vadd.f32 %v5114, %v5115
        %v5117 = vsel %vm1192, %v5057, 0.0
        %v5118 = vadd.f32 %v5116, %v5117
        %v5119 = vsel %vm1192, %v5058, 0.0
        %v5120 = vadd.f32 %v5118, %v5119
        %v5121 = vsel %vm1192, %v5059, 0.0
        %v5122 = vadd.f32 %v5120, %v5121
        %v5123 = vrot.slane %v5122, 4
        %v5124 = vadd.f32 %v5122, %v5123
        %v5125 = vrot.slane %v5124, 2
        %v5126 = vadd.f32 %v5124, %v5125
        %v5127 = vrot.slane %v5126, 1
        %v5128 = vadd.f32 %v5126, %v5127
        %v5129 = vadd.f32 %v4019, %v5128
        %5162 = vrot.lane.b32.xlu0 %v4832, 16
        %v5163 = vpop.permute.xlu0 %5162
        %5164 = vrot.lane.b32.xlu0 %v4835, 16
        %v5165 = vpop.permute.xlu0 %5164
        %5166 = vrot.lane.b32.xlu0 %v4840, 16
        %v5167 = vpop.permute.xlu0 %5166
        %5168 = vrot.lane.b32.xlu0 %v4843, 16
        %v5169 = vpop.permute.xlu0 %5168
        %5170 = vrot.lane.b32.xlu0 %v4848, 16
        %v5171 = vpop.permute.xlu0 %5170
        %5172 = vrot.lane.b32.xlu0 %v4851, 16
        %v5173 = vpop.permute.xlu0 %5172
        %5174 = vrot.lane.b32.xlu0 %v4856, 16
        %v5175 = vpop.permute.xlu0 %5174
        %5176 = vrot.lane.b32.xlu0 %v4859, 16
        %v5177 = vpop.permute.xlu0 %5176
        %5178 = vrot.lane.b32.xlu0 %v4864, 16
        %v5179 = vpop.permute.xlu0 %5178
        %5180 = vrot.lane.b32.xlu0 %v4867, 16
        %v5181 = vpop.permute.xlu0 %5180
        %5182 = vrot.lane.b32.xlu0 %v4872, 16
        %v5183 = vpop.permute.xlu0 %5182
        %5184 = vrot.lane.b32.xlu0 %v4875, 16
        %v5185 = vpop.permute.xlu0 %5184
        %5186 = vrot.lane.b32.xlu0 %v4880, 16
        %v5187 = vpop.permute.xlu0 %5186
        %5188 = vrot.lane.b32.xlu0 %v4883, 16
        %v5189 = vpop.permute.xlu0 %5188
        %5190 = vrot.lane.b32.xlu0 %v4888, 16
        %v5191 = vpop.permute.xlu0 %5190
        %5192 = vrot.lane.b32.xlu0 %v4891, 16
        %v5193 = vpop.permute.xlu0 %5192
        %5194 = vrot.lane.b32.xlu0 %v4896, 16
        %v5195 = vpop.permute.xlu0 %5194
        %5196 = vrot.lane.b32.xlu0 %v4899, 16
        %v5197 = vpop.permute.xlu0 %5196
        %5198 = vrot.lane.b32.xlu0 %v4904, 16
        %v5199 = vpop.permute.xlu0 %5198
        %5200 = vrot.lane.b32.xlu0 %v4907, 16
        %v5201 = vpop.permute.xlu0 %5200
        %5202 = vrot.lane.b32.xlu0 %v4912, 16
        %v5203 = vpop.permute.xlu0 %5202
        %5204 = vrot.lane.b32.xlu0 %v4915, 16
        %v5205 = vpop.permute.xlu0 %5204
        %5206 = vrot.lane.b32.xlu0 %v4920, 16
        %v5207 = vpop.permute.xlu0 %5206
        %5208 = vrot.lane.b32.xlu0 %v4923, 16
        %v5209 = vpop.permute.xlu0 %5208
        %5210 = vrot.lane.b32.xlu0 %v4928, 16
        %v5211 = vpop.permute.xlu0 %5210
        %5212 = vrot.lane.b32.xlu0 %v4931, 16
        %v5213 = vpop.permute.xlu0 %5212
        %5214 = vrot.lane.b32.xlu0 %v4936, 16
        %v5215 = vpop.permute.xlu0 %5214
        %5216 = vrot.lane.b32.xlu0 %v4939, 16
        %v5217 = vpop.permute.xlu0 %5216
        %5218 = vrot.lane.b32.xlu0 %v4944, 16
        %v5219 = vpop.permute.xlu0 %5218
        %5220 = vrot.lane.b32.xlu0 %v4947, 16
        %v5221 = vpop.permute.xlu0 %5220
        %5222 = vrot.lane.b32.xlu0 %v4952, 16
        %v5223 = vpop.permute.xlu0 %5222
        %5224 = vrot.lane.b32.xlu0 %v4955, 16
        %v5225 = vpop.permute.xlu0 %5224
        %v5258 = vsel %vm1192, %v3722, %v5163
        %v5259 = vsel %vm1192, %v3725, %v5165
        %v5260 = vsel %vm1192, %v3730, %v5167
        %v5261 = vsel %vm1192, %v3733, %v5169
        %v5262 = vsel %vm1192, %v3738, %v5171
        %v5263 = vsel %vm1192, %v3741, %v5173
        %v5264 = vsel %vm1192, %v3746, %v5175
        %v5265 = vsel %vm1192, %v3749, %v5177
        %v5266 = vsel %vm1192, %v3754, %v5179
        %v5267 = vsel %vm1192, %v3757, %v5181
        %v5268 = vsel %vm1192, %v3762, %v5183
        %v5269 = vsel %vm1192, %v3765, %v5185
        %v5270 = vsel %vm1192, %v3770, %v5187
        %v5271 = vsel %vm1192, %v3773, %v5189
        %v5272 = vsel %vm1192, %v3778, %v5191
        %v5273 = vsel %vm1192, %v3781, %v5193
        %v5274 = vsel %vm1192, %v3786, %v5195
        %v5275 = vsel %vm1192, %v3789, %v5197
        %v5276 = vsel %vm1192, %v3794, %v5199
        %v5277 = vsel %vm1192, %v3797, %v5201
        %v5278 = vsel %vm1192, %v3802, %v5203
        %v5279 = vsel %vm1192, %v3805, %v5205
        %v5280 = vsel %vm1192, %v3810, %v5207
        %v5281 = vsel %vm1192, %v3813, %v5209
        %v5282 = vsel %vm1192, %v3818, %v5211
        %v5283 = vsel %vm1192, %v3821, %v5213
        %v5284 = vsel %vm1192, %v3826, %v5215
        %v5285 = vsel %vm1192, %v3829, %v5217
        %v5286 = vsel %vm1192, %v3834, %v5219
        %v5287 = vsel %vm1192, %v3837, %v5221
        %v5288 = vsel %vm1192, %v3842, %v5223
        %v5289 = vsel %vm1192, %v3845, %v5225
        %s5290 = scalar_lea.vmem %s244, 16 [#allocation2]
        %5291 = vst.msk [vmem:[%s5290] sm:$0xff] %vm3052, %v5258
        %5292 = vst.msk [vmem:[%s5290 + $0x8] sm:$0xff] %vm3052, %v5259
        %5293 = vst.msk [vmem:[%s5290 + $0x20] sm:$0xff] %vm3052, %v5260
        %5294 = vst.msk [vmem:[%s5290 + $0x28] sm:$0xff] %vm3052, %v5261
        %5295 = vst.msk [vmem:[%s5290 + $0x40] sm:$0xff] %vm3052, %v5262
        %5296 = vst.msk [vmem:[%s5290 + $0x48] sm:$0xff] %vm3052, %v5263
        %5297 = vst.msk [vmem:[%s5290 + $0x60] sm:$0xff] %vm3052, %v5264
        %5298 = vst.msk [vmem:[%s5290 + $0x68] sm:$0xff] %vm3052, %v5265
        %5299 = vst.msk [vmem:[%s5290 + $0x80] sm:$0xff] %vm3052, %v5266
        %5300 = vst.msk [vmem:[%s5290 + $0x88] sm:$0xff] %vm3052, %v5267
        %5301 = vst.msk [vmem:[%s5290 + $0xa0] sm:$0xff] %vm3052, %v5268
        %5302 = vst.msk [vmem:[%s5290 + $0xa8] sm:$0xff] %vm3052, %v5269
        %5303 = vst.msk [vmem:[%s5290 + $0xc0] sm:$0xff] %vm3052, %v5270
        %5304 = vst.msk [vmem:[%s5290 + $0xc8] sm:$0xff] %vm3052, %v5271
        %5305 = vst.msk [vmem:[%s5290 + $0xe0] sm:$0xff] %vm3052, %v5272
        %5306 = vst.msk [vmem:[%s5290 + $0xe8] sm:$0xff] %vm3052, %v5273
        %5307 = vst.msk [vmem:[%s5290 + $0x100] sm:$0xff] %vm3052, %v5274
        %5308 = vst.msk [vmem:[%s5290 + $0x108] sm:$0xff] %vm3052, %v5275
        %5309 = vst.msk [vmem:[%s5290 + $0x120] sm:$0xff] %vm3052, %v5276
        %5310 = vst.msk [vmem:[%s5290 + $0x128] sm:$0xff] %vm3052, %v5277
        %5311 = vst.msk [vmem:[%s5290 + $0x140] sm:$0xff] %vm3052, %v5278
        %5312 = vst.msk [vmem:[%s5290 + $0x148] sm:$0xff] %vm3052, %v5279
        %5313 = vst.msk [vmem:[%s5290 + $0x160] sm:$0xff] %vm3052, %v5280
        %5314 = vst.msk [vmem:[%s5290 + $0x168] sm:$0xff] %vm3052, %v5281
        %5315 = vst.msk [vmem:[%s5290 + $0x180] sm:$0xff] %vm3052, %v5282
        %5316 = vst.msk [vmem:[%s5290 + $0x188] sm:$0xff] %vm3052, %v5283
        %5317 = vst.msk [vmem:[%s5290 + $0x1a0] sm:$0xff] %vm3052, %v5284
        %5318 = vst.msk [vmem:[%s5290 + $0x1a8] sm:$0xff] %vm3052, %v5285
        %5319 = vst.msk [vmem:[%s5290 + $0x1c0] sm:$0xff] %vm3052, %v5286
        %5320 = vst.msk [vmem:[%s5290 + $0x1c8] sm:$0xff] %vm3052, %v5287
        %5321 = vst.msk [vmem:[%s5290 + $0x1e0] sm:$0xff] %vm3052, %v5288
        %5322 = vst.msk [vmem:[%s5290 + $0x1e8] sm:$0xff] %vm3052, %v5289
        %v5323 = vld [vmem:[%s2] sm:$0x1]
        %v5324 = vmul.f32 %v5323, 1024.0
        %v5325 = vadd.f32 %v5027, %v5324
        %v5326 = vmul.f32 %v5323, 2.0
        %v5327 = vmul.f32 %v5326, %v5027
        %v5328 = vadd.f32 %v5129, %v5327
        %v5329 = vmul.f32 %v5324, %v5323
        %v5330 = vadd.f32 %v5328, %v5329
        %v5331 = vld [vmem:[%s5] sm:$0xff]
        %v5332 = vld [vmem:[%s5 + $0x8] sm:$0xff]
        %v5334 = vsel %vm1192, %v5325, 0
        %5336 = vmatprep.subr.mxu0 0.0
        %5337 = vmatpush1.msra.mxu0 0.0
        %5338 = vmatprep.subr.mxu0 0.0
        %5339 = vmatpush1.msra.mxu0 0.0
        %5340 = vmatprep.subr.mxu0 0.0
        %5341 = vmatpush1.msra.mxu0 0.0
        %5342 = vmatprep.subr.mxu0 0.0
        %5343 = vmatpush1.msra.mxu0 0.0
        %5344 = vmatprep.subr.mxu0 0.0
        %5345 = vmatpush1.msra.mxu0 0.0
        %5346 = vmatprep.subr.mxu0 0.0
        %5347 = vmatpush1.msra.mxu0 0.0
        %5348 = vmatprep.subr.mxu0 0.0
        %5349 = vmatpush1.msra.mxu0 0.0
        %5350 = vmatprep.subr.mxu0 0.0
        %5351 = vmatpush1.msra.mxu0 0.0
        %5352 = vmatprep.subr.mxu0 0.0
        %5353 = vmatpush1.msra.mxu0 0.0
        %5354 = vmatprep.subr.mxu0 0.0
        %5355 = vmatpush1.msra.mxu0 0.0
        %5356 = vmatprep.subr.mxu0 0.0
        %5357 = vmatpush1.msra.mxu0 0.0
        %5358 = vmatprep.subr.mxu0 0.0
        %5359 = vmatpush1.msra.mxu0 0.0
        %5360 = vmatprep.subr.mxu0 0.0
        %5361 = vmatpush1.msra.mxu0 0.0
        %5362 = vmatprep.subr.mxu0 0.0
        %5363 = vmatpush1.msra.mxu0 0.0
        %5364 = vmatprep.subr.mxu0 0.0
        %5365 = vmatpush1.msra.mxu0 %v5332
        %5366 = vmatprep.subr.mxu0 0.0
        %5367 = vmatpush1.msra.mxu0 %v5331
        %5368 = vmatprep.subr.mxu0 0.0
        %5369 = vmatpush2.msra.mxu0 0.0
        %5370 = vmatprep.subr.mxu0 0.0
        %5371 = vmatpush2.msra.mxu0 0.0
        %5372 = vmatprep.subr.mxu0 0.0
        %5373 = vmatpush2.msra.mxu0 0.0
        %5374 = vmatprep.subr.mxu0 0.0
        %5375 = vmatpush2.msra.mxu0 0.0
        %5376 = vmatprep.subr.mxu0 0.0
        %5377 = vmatpush2.msra.mxu0 0.0
        %5378 = vmatprep.subr.mxu0 0.0
        %5379 = vmatpush2.msra.mxu0 0.0
        %5380 = vmatprep.subr.mxu0 0.0
        %5381 = vmatpush2.msra.mxu0 0.0
        %5382 = vmatprep.subr.mxu0 0.0
        %5383 = vmatpush2.msra.mxu0 0.0
        %5384 = vmatprep.subr.mxu0 0.0
        %5385 = vmatpush2.msra.mxu0 0.0
        %5386 = vmatprep.subr.mxu0 0.0
        %5387 = vmatpush2.msra.mxu0 0.0
        %5388 = vmatprep.subr.mxu0 0.0
        %5389 = vmatpush2.msra.mxu0 0.0
        %5390 = vmatprep.subr.mxu0 0.0
        %5391 = vmatpush2.msra.mxu0 0.0
        %5392 = vmatprep.subr.mxu0 0.0
        %5393 = vmatpush2.msra.mxu0 0.0
        %5394 = vmatprep.subr.mxu0 0.0
        %5395 = vmatpush2.msra.mxu0 0.0
        %5396 = vmatprep.subr.mxu0 0.0
        %5397 = vmatpush2.msra.mxu0 0.0
        %5398 = vmatprep.subr.mxu0 0.0
        %5399 = vmatpush2.msra.mxu0 0.0
        %5400 = vmatprep.mubr.f32.mxu0 0.0
        %5401 = vmatmul.mubr.f32.gmra.mxu0 %v5334
        %v5402 = vpop.f32.mrf.mxu0
        %v5403 = vadd.f32 0.0, %v5402
        %v5404 = vpop.f32.mrf.mxu0
        %5405 = vdwg.mxu0
        %v5407 = vsel %vm1192, %v5330, 0
        %5409 = vmatprep.subr.mxu0 0.0
        %5410 = vmatpush1.msra.mxu0 0.0
        %5411 = vmatprep.subr.mxu0 0.0
        %5412 = vmatpush1.msra.mxu0 0.0
        %5413 = vmatprep.subr.mxu0 0.0
        %5414 = vmatpush1.msra.mxu0 0.0
        %5415 = vmatprep.subr.mxu0 0.0
        %5416 = vmatpush1.msra.mxu0 0.0
        %5417 = vmatprep.subr.mxu0 0.0
        %5418 = vmatpush1.msra.mxu0 0.0
        %5419 = vmatprep.subr.mxu0 0.0
        %5420 = vmatpush1.msra.mxu0 0.0
        %5421 = vmatprep.subr.mxu0 0.0
        %5422 = vmatpush1.msra.mxu0 0.0
        %5423 = vmatprep.subr.mxu0 0.0
        %5424 = vmatpush1.msra.mxu0 0.0
        %5425 = vmatprep.subr.mxu0 0.0
        %5426 = vmatpush1.msra.mxu0 0.0
        %5427 = vmatprep.subr.mxu0 0.0
        %5428 = vmatpush1.msra.mxu0 0.0
        %5429 = vmatprep.subr.mxu0 0.0
        %5430 = vmatpush1.msra.mxu0 0.0
        %5431 = vmatprep.subr.mxu0 0.0
        %5432 = vmatpush1.msra.mxu0 0.0
        %5433 = vmatprep.subr.mxu0 0.0
        %5434 = vmatpush1.msra.mxu0 0.0
        %5435 = vmatprep.subr.mxu0 0.0
        %5436 = vmatpush1.msra.mxu0 0.0
        %5437 = vmatprep.subr.mxu0 0.0
        %5438 = vmatpush1.msra.mxu0 %v5332
        %5439 = vmatprep.subr.mxu0 0.0
        %5440 = vmatpush1.msra.mxu0 %v5331
        %5441 = vmatprep.subr.mxu0 0.0
        %5442 = vmatpush2.msra.mxu0 0.0
        %5443 = vmatprep.subr.mxu0 0.0
        %5444 = vmatpush2.msra.mxu0 0.0
        %5445 = vmatprep.subr.mxu0 0.0
        %5446 = vmatpush2.msra.mxu0 0.0
        %5447 = vmatprep.subr.mxu0 0.0
        %5448 = vmatpush2.msra.mxu0 0.0
        %5449 = vmatprep.subr.mxu0 0.0
        %5450 = vmatpush2.msra.mxu0 0.0
        %5451 = vmatprep.subr.mxu0 0.0
        %5452 = vmatpush2.msra.mxu0 0.0
        %5453 = vmatprep.subr.mxu0 0.0
        %5454 = vmatpush2.msra.mxu0 0.0
        %5455 = vmatprep.subr.mxu0 0.0
        %5456 = vmatpush2.msra.mxu0 0.0
        %5457 = vmatprep.subr.mxu0 0.0
        %5458 = vmatpush2.msra.mxu0 0.0
        %5459 = vmatprep.subr.mxu0 0.0
        %5460 = vmatpush2.msra.mxu0 0.0
        %5461 = vmatprep.subr.mxu0 0.0
        %5462 = vmatpush2.msra.mxu0 0.0
        %5463 = vmatprep.subr.mxu0 0.0
        %5464 = vmatpush2.msra.mxu0 0.0
        %5465 = vmatprep.subr.mxu0 0.0
        %5466 = vmatpush2.msra.mxu0 0.0
        %5467 = vmatprep.subr.mxu0 0.0
        %5468 = vmatpush2.msra.mxu0 0.0
        %5469 = vmatprep.subr.mxu0 0.0
        %5470 = vmatpush2.msra.mxu0 0.0
        %5471 = vmatprep.subr.mxu0 0.0
        %5472 = vmatpush2.msra.mxu0 0.0
        %5473 = vmatprep.mubr.f32.mxu0 0.0
        %5474 = vmatmul.mubr.f32.gmra.mxu0 %v5407
        %v5475 = vpop.f32.mrf.mxu0
        %v5476 = vadd.f32 0.0, %v5475
        %v5477 = vpop.f32.mrf.mxu0
        %5478 = vdwg.mxu0
        %v5479 = vmul.f32 %v5403, 0.00012207031
        %v5480 = vmul.f32 %v5476, 0.00012207031
        %v5481 = vmul.f32 %v5479, %v5479
        %v5482 = vsub.f32 %v5480, %v5481
        %v5483 = vld [vmem:[%s3] sm:$0x1]
        %v5484 = vadd.f32 %v5482, 1e-05
        %v5485 = vrsqrt.pop %v5484
        %v5486 = vmul.f32 %v5483, %v5485
        %v5487 = vld [vmem:[%s4] sm:$0x1]
        %v5488 = vsub.f32 %v5323, %v5479
        %v5489 = vmul.f32 %v5488, %v5486
        %v5490 = vadd.f32 %v5487, %v5489
        %v5492 = vlaneseq
        %v5493 = vshrl.u32 %v5492, 7
        %v5494 = vsub.s32 0, %v5493
        %v5495 = vrot.slane %v5486, %v5494
        %5496 = vrot.lane.b32.xlu0 %v5495, 16
        %v5497 = vpop.permute.xlu0 %5496
        %v5499 = vsel %vm1192, %v5486, %v5497
        %v5501 = vlaneseq
        %v5502 = vshrl.u32 %v5501, 7
        %v5503 = vsub.s32 0, %v5502
        %v5504 = vrot.slane %v5490, %v5503
        %5505 = vrot.lane.b32.xlu0 %v5504, 16
        %v5506 = vpop.permute.xlu0 %5505
        %v5508 = vsel %vm1192, %v5490, %v5506
        %v5509 = vld [vmem:[%s244] sm:$0xff]
        %v5510 = vld [vmem:[%s244 + $0x8] sm:$0xff]
        %v5511 = vld [vmem:[%s244 + $0x20] sm:$0xff]
        %v5512 = vld [vmem:[%s244 + $0x28] sm:$0xff]
        %v5513 = vld [vmem:[%s244 + $0x40] sm:$0xff]
        %v5514 = vld [vmem:[%s244 + $0x48] sm:$0xff]
        %v5515 = vld [vmem:[%s244 + $0x60] sm:$0xff]
        %v5516 = vld [vmem:[%s244 + $0x68] sm:$0xff]
        %v5517 = vld [vmem:[%s244 + $0x80] sm:$0xff]
        %v5518 = vld [vmem:[%s244 + $0x88] sm:$0xff]
        %v5519 = vld [vmem:[%s244 + $0xa0] sm:$0xff]
        %v5520 = vld [vmem:[%s244 + $0xa8] sm:$0xff]
        %v5521 = vld [vmem:[%s244 + $0xc0] sm:$0xff]
        %v5522 = vld [vmem:[%s244 + $0xc8] sm:$0xff]
        %v5523 = vld [vmem:[%s244 + $0xe0] sm:$0xff]
        %v5524 = vld [vmem:[%s244 + $0xe8] sm:$0xff]
        %v5525 = vld [vmem:[%s244 + $0x100] sm:$0xff]
        %v5526 = vld [vmem:[%s244 + $0x108] sm:$0xff]
        %v5527 = vld [vmem:[%s244 + $0x120] sm:$0xff]
        %v5528 = vld [vmem:[%s244 + $0x128] sm:$0xff]
        %v5529 = vld [vmem:[%s244 + $0x140] sm:$0xff]
        %v5530 = vld [vmem:[%s244 + $0x148] sm:$0xff]
        %v5531 = vld [vmem:[%s244 + $0x160] sm:$0xff]
        %v5532 = vld [vmem:[%s244 + $0x168] sm:$0xff]
        %v5533 = vld [vmem:[%s244 + $0x180] sm:$0xff]
        %v5534 = vld [vmem:[%s244 + $0x188] sm:$0xff]
        %v5535 = vld [vmem:[%s244 + $0x1a0] sm:$0xff]
        %v5536 = vld [vmem:[%s244 + $0x1a8] sm:$0xff]
        %v5537 = vld [vmem:[%s244 + $0x1c0] sm:$0xff]
        %v5538 = vld [vmem:[%s244 + $0x1c8] sm:$0xff]
        %v5539 = vld [vmem:[%s244 + $0x1e0] sm:$0xff]
        %v5540 = vld [vmem:[%s244 + $0x1e8] sm:$0xff]
        %v5541 = vlaneseq
        %v5542 = vshrl.u32 %v5541, 7
        %v5543 = vsub.s32 0, %v5542
        %v5544 = vrot.slane %v5499, %v5543
        %v5545 = vmul.f32 %v5509, %v5544
        %v5546 = vmul.f32 %v5510, %v5544
        %v5547 = vmul.f32 %v5511, %v5544
        %v5548 = vmul.f32 %v5512, %v5544
        %v5549 = vmul.f32 %v5513, %v5544
        %v5550 = vmul.f32 %v5514, %v5544
        %v5551 = vmul.f32 %v5515, %v5544
        %v5552 = vmul.f32 %v5516, %v5544
        %v5553 = vmul.f32 %v5517, %v5544
        %v5554 = vmul.f32 %v5518, %v5544
        %v5555 = vmul.f32 %v5519, %v5544
        %v5556 = vmul.f32 %v5520, %v5544
        %v5557 = vmul.f32 %v5521, %v5544
        %v5558 = vmul.f32 %v5522, %v5544
        %v5559 = vmul.f32 %v5523, %v5544
        %v5560 = vmul.f32 %v5524, %v5544
        %v5561 = vmul.f32 %v5525, %v5544
        %v5562 = vmul.f32 %v5526, %v5544
        %v5563 = vmul.f32 %v5527, %v5544
        %v5564 = vmul.f32 %v5528, %v5544
        %v5565 = vmul.f32 %v5529, %v5544
        %v5566 = vmul.f32 %v5530, %v5544
        %v5567 = vmul.f32 %v5531, %v5544
        %v5568 = vmul.f32 %v5532, %v5544
        %v5569 = vmul.f32 %v5533, %v5544
        %v5570 = vmul.f32 %v5534, %v5544
        %v5571 = vmul.f32 %v5535, %v5544
        %v5572 = vmul.f32 %v5536, %v5544
        %v5573 = vmul.f32 %v5537, %v5544
        %v5574 = vmul.f32 %v5538, %v5544
        %v5575 = vmul.f32 %v5539, %v5544
        %v5576 = vmul.f32 %v5540, %v5544
        %v5577 = vlaneseq
        %v5578 = vshrl.u32 %v5577, 7
        %v5579 = vsub.s32 0, %v5578
        %v5580 = vrot.slane %v5508, %v5579
        %v5581 = vadd.f32 %v5545, %v5580
        %v5582 = vadd.f32 %v5546, %v5580
        %v5583 = vadd.f32 %v5547, %v5580
        %v5584 = vadd.f32 %v5548, %v5580
        %v5585 = vadd.f32 %v5549, %v5580
        %v5586 = vadd.f32 %v5550, %v5580
        %v5587 = vadd.f32 %v5551, %v5580
        %v5588 = vadd.f32 %v5552, %v5580
        %v5589 = vadd.f32 %v5553, %v5580
        %v5590 = vadd.f32 %v5554, %v5580
        %v5591 = vadd.f32 %v5555, %v5580
        %v5592 = vadd.f32 %v5556, %v5580
        %v5593 = vadd.f32 %v5557, %v5580
        %v5594 = vadd.f32 %v5558, %v5580
        %v5595 = vadd.f32 %v5559, %v5580
        %v5596 = vadd.f32 %v5560, %v5580
        %v5597 = vadd.f32 %v5561, %v5580
        %v5598 = vadd.f32 %v5562, %v5580
        %v5599 = vadd.f32 %v5563, %v5580
        %v5600 = vadd.f32 %v5564, %v5580
        %v5601 = vadd.f32 %v5565, %v5580
        %v5602 = vadd.f32 %v5566, %v5580
        %v5603 = vadd.f32 %v5567, %v5580
        %v5604 = vadd.f32 %v5568, %v5580
        %v5605 = vadd.f32 %v5569, %v5580
        %v5606 = vadd.f32 %v5570, %v5580
        %v5607 = vadd.f32 %v5571, %v5580
        %v5608 = vadd.f32 %v5572, %v5580
        %v5609 = vadd.f32 %v5573, %v5580
        %v5610 = vadd.f32 %v5574, %v5580
        %v5611 = vadd.f32 %v5575, %v5580
        %v5612 = vadd.f32 %v5576, %v5580
        %v5613 = vxor.u32 %v5581, 2147483648
        %v5614 = vxor.u32 %v5582, 2147483648
        %v5615 = vxor.u32 %v5583, 2147483648
        %v5616 = vxor.u32 %v5584, 2147483648
        %v5617 = vxor.u32 %v5585, 2147483648
        %v5618 = vxor.u32 %v5586, 2147483648
        %v5619 = vxor.u32 %v5587, 2147483648
        %v5620 = vxor.u32 %v5588, 2147483648
        %v5621 = vxor.u32 %v5589, 2147483648
        %v5622 = vxor.u32 %v5590, 2147483648
        %v5623 = vxor.u32 %v5591, 2147483648
        %v5624 = vxor.u32 %v5592, 2147483648
        %v5625 = vxor.u32 %v5593, 2147483648
        %v5626 = vxor.u32 %v5594, 2147483648
        %v5627 = vxor.u32 %v5595, 2147483648
        %v5628 = vxor.u32 %v5596, 2147483648
        %v5629 = vxor.u32 %v5597, 2147483648
        %v5630 = vxor.u32 %v5598, 2147483648
        %v5631 = vxor.u32 %v5599, 2147483648
        %v5632 = vxor.u32 %v5600, 2147483648
        %v5633 = vxor.u32 %v5601, 2147483648
        %v5634 = vxor.u32 %v5602, 2147483648
        %v5635 = vxor.u32 %v5603, 2147483648
        %v5636 = vxor.u32 %v5604, 2147483648
        %v5637 = vxor.u32 %v5605, 2147483648
        %v5638 = vxor.u32 %v5606, 2147483648
        %v5639 = vxor.u32 %v5607, 2147483648
        %v5640 = vxor.u32 %v5608, 2147483648
        %v5641 = vxor.u32 %v5609, 2147483648
        %v5642 = vxor.u32 %v5610, 2147483648
        %v5643 = vxor.u32 %v5611, 2147483648
        %v5644 = vxor.u32 %v5612, 2147483648
        %v5645 = vmul.f32 %v5613, 1.442695
        %v5646 = vpow.pop %v5645
        %v5647 = vmul.f32 %v5614, 1.442695
        %v5648 = vpow.pop %v5647
        %v5649 = vmul.f32 %v5615, 1.442695
        %v5650 = vpow.pop %v5649
        %v5651 = vmul.f32 %v5616, 1.442695
        %v5652 = vpow.pop %v5651
        %v5653 = vmul.f32 %v5617, 1.442695
        %v5654 = vpow.pop %v5653
        %v5655 = vmul.f32 %v5618, 1.442695
        %v5656 = vpow.pop %v5655
        %v5657 = vmul.f32 %v5619, 1.442695
        %v5658 = vpow.pop %v5657
        %v5659 = vmul.f32 %v5620, 1.442695
        %v5660 = vpow.pop %v5659
        %v5661 = vmul.f32 %v5621, 1.442695
        %v5662 = vpow.pop %v5661
        %v5663 = vmul.f32 %v5622, 1.442695
        %v5664 = vpow.pop %v5663
        %v5665 = vmul.f32 %v5623, 1.442695
        %v5666 = vpow.pop %v5665
        %v5667 = vmul.f32 %v5624, 1.442695
        %v5668 = vpow.pop %v5667
        %v5669 = vmul.f32 %v5625, 1.442695
        %v5670 = vpow.pop %v5669
        %v5671 = vmul.f32 %v5626, 1.442695
        %v5672 = vpow.pop %v5671
        %v5673 = vmul.f32 %v5627, 1.442695
        %v5674 = vpow.pop %v5673
        %v5675 = vmul.f32 %v5628, 1.442695
        %v5676 = vpow.pop %v5675
        %v5677 = vmul.f32 %v5629, 1.442695
        %v5678 = vpow.pop %v5677
        %v5679 = vmul.f32 %v5630, 1.442695
        %v5680 = vpow.pop %v5679
        %v5681 = vmul.f32 %v5631, 1.442695
        %v5682 = vpow.pop %v5681
        %v5683 = vmul.f32 %v5632, 1.442695
        %v5684 = vpow.pop %v5683
        %v5685 = vmul.f32 %v5633, 1.442695
        %v5686 = vpow.pop %v5685
        %v5687 = vmul.f32 %v5634, 1.442695
        %v5688 = vpow.pop %v5687
        %v5689 = vmul.f32 %v5635, 1.442695
        %v5690 = vpow.pop %v5689
        %v5691 = vmul.f32 %v5636, 1.442695
        %v5692 = vpow.pop %v5691
        %v5693 = vmul.f32 %v5637, 1.442695
        %v5694 = vpow.pop %v5693
        %v5695 = vmul.f32 %v5638, 1.442695
        %v5696 = vpow.pop %v5695
        %v5697 = vmul.f32 %v5639, 1.442695
        %v5698 = vpow.pop %v5697
        %v5699 = vmul.f32 %v5640, 1.442695
        %v5700 = vpow.pop %v5699
        %v5701 = vmul.f32 %v5641, 1.442695
        %v5702 = vpow.pop %v5701
        %v5703 = vmul.f32 %v5642, 1.442695
        %v5704 = vpow.pop %v5703
        %v5705 = vmul.f32 %v5643, 1.442695
        %v5706 = vpow.pop %v5705
        %v5707 = vmul.f32 %v5644, 1.442695
        %v5708 = vpow.pop %v5707
        %v5709 = vadd.f32 %v5646, 1.0
        %v5710 = vadd.f32 %v5648, 1.0
        %v5711 = vadd.f32 %v5650, 1.0
        %v5712 = vadd.f32 %v5652, 1.0
        %v5713 = vadd.f32 %v5654, 1.0
        %v5714 = vadd.f32 %v5656, 1.0
        %v5715 = vadd.f32 %v5658, 1.0
        %v5716 = vadd.f32 %v5660, 1.0
        %v5717 = vadd.f32 %v5662, 1.0
        %v5718 = vadd.f32 %v5664, 1.0
        %v5719 = vadd.f32 %v5666, 1.0
        %v5720 = vadd.f32 %v5668, 1.0
        %v5721 = vadd.f32 %v5670, 1.0
        %v5722 = vadd.f32 %v5672, 1.0
        %v5723 = vadd.f32 %v5674, 1.0
        %v5724 = vadd.f32 %v5676, 1.0
        %v5725 = vadd.f32 %v5678, 1.0
        %v5726 = vadd.f32 %v5680, 1.0
        %v5727 = vadd.f32 %v5682, 1.0
        %v5728 = vadd.f32 %v5684, 1.0
        %v5729 = vadd.f32 %v5686, 1.0
        %v5730 = vadd.f32 %v5688, 1.0
        %v5731 = vadd.f32 %v5690, 1.0
        %v5732 = vadd.f32 %v5692, 1.0
        %v5733 = vadd.f32 %v5694, 1.0
        %v5734 = vadd.f32 %v5696, 1.0
        %v5735 = vadd.f32 %v5698, 1.0
        %v5736 = vadd.f32 %v5700, 1.0
        %v5737 = vadd.f32 %v5702, 1.0
        %v5738 = vadd.f32 %v5704, 1.0
        %v5739 = vadd.f32 %v5706, 1.0
        %v5740 = vadd.f32 %v5708, 1.0
        %v5741 = vrcp.pop %v5709
        %v5742 = vmul.f32 1.0, %v5741
        %v5743 = vrcp.pop %v5710
        %v5744 = vmul.f32 1.0, %v5743
        %v5745 = vrcp.pop %v5711
        %v5746 = vmul.f32 1.0, %v5745
        %v5747 = vrcp.pop %v5712
        %v5748 = vmul.f32 1.0, %v5747
        %v5749 = vrcp.pop %v5713
        %v5750 = vmul.f32 1.0, %v5749
        %v5751 = vrcp.pop %v5714
        %v5752 = vmul.f32 1.0, %v5751
        %v5753 = vrcp.pop %v5715
        %v5754 = vmul.f32 1.0, %v5753
        %v5755 = vrcp.pop %v5716
        %v5756 = vmul.f32 1.0, %v5755
        %v5757 = vrcp.pop %v5717
        %v5758 = vmul.f32 1.0, %v5757
        %v5759 = vrcp.pop %v5718
        %v5760 = vmul.f32 1.0, %v5759
        %v5761 = vrcp.pop %v5719
        %v5762 = vmul.f32 1.0, %v5761
        %v5763 = vrcp.pop %v5720
        %v5764 = vmul.f32 1.0, %v5763
        %v5765 = vrcp.pop %v5721
        %v5766 = vmul.f32 1.0, %v5765
        %v5767 = vrcp.pop %v5722
        %v5768 = vmul.f32 1.0, %v5767
        %v5769 = vrcp.pop %v5723
        %v5770 = vmul.f32 1.0, %v5769
        %v5771 = vrcp.pop %v5724
        %v5772 = vmul.f32 1.0, %v5771
        %v5773 = vrcp.pop %v5725
        %v5774 = vmul.f32 1.0, %v5773
        %v5775 = vrcp.pop %v5726
        %v5776 = vmul.f32 1.0, %v5775
        %v5777 = vrcp.pop %v5727
        %v5778 = vmul.f32 1.0, %v5777
        %v5779 = vrcp.pop %v5728
        %v5780 = vmul.f32 1.0, %v5779
        %v5781 = vrcp.pop %v5729
        %v5782 = vmul.f32 1.0, %v5781
        %v5783 = vrcp.pop %v5730
        %v5784 = vmul.f32 1.0, %v5783
        %v5785 = vrcp.pop %v5731
        %v5786 = vmul.f32 1.0, %v5785
        %v5787 = vrcp.pop %v5732
        %v5788 = vmul.f32 1.0, %v5787
        %v5789 = vrcp.pop %v5733
        %v5790 = vmul.f32 1.0, %v5789
        %v5791 = vrcp.pop %v5734
        %v5792 = vmul.f32 1.0, %v5791
        %v5793 = vrcp.pop %v5735
        %v5794 = vmul.f32 1.0, %v5793
        %v5795 = vrcp.pop %v5736
        %v5796 = vmul.f32 1.0, %v5795
        %v5797 = vrcp.pop %v5737
        %v5798 = vmul.f32 1.0, %v5797
        %v5799 = vrcp.pop %v5738
        %v5800 = vmul.f32 1.0, %v5799
        %v5801 = vrcp.pop %v5739
        %v5802 = vmul.f32 1.0, %v5801
        %v5803 = vrcp.pop %v5740
        %v5804 = vmul.f32 1.0, %v5803
        %v5805 = vmul.f32 %v5581, %v5742
        %v5806 = vmul.f32 %v5582, %v5744
        %v5807 = vmul.f32 %v5583, %v5746
        %v5808 = vmul.f32 %v5584, %v5748
        %v5809 = vmul.f32 %v5585, %v5750
        %v5810 = vmul.f32 %v5586, %v5752
        %v5811 = vmul.f32 %v5587, %v5754
        %v5812 = vmul.f32 %v5588, %v5756
        %v5813 = vmul.f32 %v5589, %v5758
        %v5814 = vmul.f32 %v5590, %v5760
        %v5815 = vmul.f32 %v5591, %v5762
        %v5816 = vmul.f32 %v5592, %v5764
        %v5817 = vmul.f32 %v5593, %v5766
        %v5818 = vmul.f32 %v5594, %v5768
        %v5819 = vmul.f32 %v5595, %v5770
        %v5820 = vmul.f32 %v5596, %v5772
        %v5821 = vmul.f32 %v5597, %v5774
        %v5822 = vmul.f32 %v5598, %v5776
        %v5823 = vmul.f32 %v5599, %v5778
        %v5824 = vmul.f32 %v5600, %v5780
        %v5825 = vmul.f32 %v5601, %v5782
        %v5826 = vmul.f32 %v5602, %v5784
        %v5827 = vmul.f32 %v5603, %v5786
        %v5828 = vmul.f32 %v5604, %v5788
        %v5829 = vmul.f32 %v5605, %v5790
        %v5830 = vmul.f32 %v5606, %v5792
        %v5831 = vmul.f32 %v5607, %v5794
        %v5832 = vmul.f32 %v5608, %v5796
        %v5833 = vmul.f32 %v5609, %v5798
        %v5834 = vmul.f32 %v5610, %v5800
        %v5835 = vmul.f32 %v5611, %v5802
        %v5836 = vmul.f32 %v5612, %v5804
        %5837 = vst.msk [vmem:[%s244] sm:$0xff] %vm3052, %v5805
        %5838 = vst.msk [vmem:[%s244 + $0x8] sm:$0xff] %vm3052, %v5806
        %5839 = vst.msk [vmem:[%s244 + $0x20] sm:$0xff] %vm3052, %v5807
        %5840 = vst.msk [vmem:[%s244 + $0x28] sm:$0xff] %vm3052, %v5808
        %5841 = vst.msk [vmem:[%s244 + $0x40] sm:$0xff] %vm3052, %v5809
        %5842 = vst.msk [vmem:[%s244 + $0x48] sm:$0xff] %vm3052, %v5810
        %5843 = vst.msk [vmem:[%s244 + $0x60] sm:$0xff] %vm3052, %v5811
        %5844 = vst.msk [vmem:[%s244 + $0x68] sm:$0xff] %vm3052, %v5812
        %5845 = vst.msk [vmem:[%s244 + $0x80] sm:$0xff] %vm3052, %v5813
        %5846 = vst.msk [vmem:[%s244 + $0x88] sm:$0xff] %vm3052, %v5814
        %5847 = vst.msk [vmem:[%s244 + $0xa0] sm:$0xff] %vm3052, %v5815
        %5848 = vst.msk [vmem:[%s244 + $0xa8] sm:$0xff] %vm3052, %v5816
        %5849 = vst.msk [vmem:[%s244 + $0xc0] sm:$0xff] %vm3052, %v5817
        %5850 = vst.msk [vmem:[%s244 + $0xc8] sm:$0xff] %vm3052, %v5818
        %5851 = vst.msk [vmem:[%s244 + $0xe0] sm:$0xff] %vm3052, %v5819
        %5852 = vst.msk [vmem:[%s244 + $0xe8] sm:$0xff] %vm3052, %v5820
        %5853 = vst.msk [vmem:[%s244 + $0x100] sm:$0xff] %vm3052, %v5821
        %5854 = vst.msk [vmem:[%s244 + $0x108] sm:$0xff] %vm3052, %v5822
        %5855 = vst.msk [vmem:[%s244 + $0x120] sm:$0xff] %vm3052, %v5823
        %5856 = vst.msk [vmem:[%s244 + $0x128] sm:$0xff] %vm3052, %v5824
        %5857 = vst.msk [vmem:[%s244 + $0x140] sm:$0xff] %vm3052, %v5825
        %5858 = vst.msk [vmem:[%s244 + $0x148] sm:$0xff] %vm3052, %v5826
        %5859 = vst.msk [vmem:[%s244 + $0x160] sm:$0xff] %vm3052, %v5827
        %5860 = vst.msk [vmem:[%s244 + $0x168] sm:$0xff] %vm3052, %v5828
        %5861 = vst.msk [vmem:[%s244 + $0x180] sm:$0xff] %vm3052, %v5829
        %5862 = vst.msk [vmem:[%s244 + $0x188] sm:$0xff] %vm3052, %v5830
        %5863 = vst.msk [vmem:[%s244 + $0x1a0] sm:$0xff] %vm3052, %v5831
        %5864 = vst.msk [vmem:[%s244 + $0x1a8] sm:$0xff] %vm3052, %v5832
        %5865 = vst.msk [vmem:[%s244 + $0x1c0] sm:$0xff] %vm3052, %v5833
        %5866 = vst.msk [vmem:[%s244 + $0x1c8] sm:$0xff] %vm3052, %v5834
        %5867 = vst.msk [vmem:[%s244 + $0x1e0] sm:$0xff] %vm3052, %v5835
        %5868 = vst.msk [vmem:[%s244 + $0x1e8] sm:$0xff] %vm3052, %v5836
        %v5869 = vld [vmem:[%s5290] sm:$0xff]
        %v5870 = vld [vmem:[%s5290 + $0x8] sm:$0xff]
        %v5871 = vld [vmem:[%s5290 + $0x20] sm:$0xff]
        %v5872 = vld [vmem:[%s5290 + $0x28] sm:$0xff]
        %v5873 = vld [vmem:[%s5290 + $0x40] sm:$0xff]
        %v5874 = vld [vmem:[%s5290 + $0x48] sm:$0xff]
        %v5875 = vld [vmem:[%s5290 + $0x60] sm:$0xff]
        %v5876 = vld [vmem:[%s5290 + $0x68] sm:$0xff]
        %v5877 = vld [vmem:[%s5290 + $0x80] sm:$0xff]
        %v5878 = vld [vmem:[%s5290 + $0x88] sm:$0xff]
        %v5879 = vld [vmem:[%s5290 + $0xa0] sm:$0xff]
        %v5880 = vld [vmem:[%s5290 + $0xa8] sm:$0xff]
        %v5881 = vld [vmem:[%s5290 + $0xc0] sm:$0xff]
        %v5882 = vld [vmem:[%s5290 + $0xc8] sm:$0xff]
        %v5883 = vld [vmem:[%s5290 + $0xe0] sm:$0xff]
        %v5884 = vld [vmem:[%s5290 + $0xe8] sm:$0xff]
        %v5885 = vld [vmem:[%s5290 + $0x100] sm:$0xff]
        %v5886 = vld [vmem:[%s5290 + $0x108] sm:$0xff]
        %v5887 = vld [vmem:[%s5290 + $0x120] sm:$0xff]
        %v5888 = vld [vmem:[%s5290 + $0x128] sm:$0xff]
        %v5889 = vld [vmem:[%s5290 + $0x140] sm:$0xff]
        %v5890 = vld [vmem:[%s5290 + $0x148] sm:$0xff]
        %v5891 = vld [vmem:[%s5290 + $0x160] sm:$0xff]
        %v5892 = vld [vmem:[%s5290 + $0x168] sm:$0xff]
        %v5893 = vld [vmem:[%s5290 + $0x180] sm:$0xff]
        %v5894 = vld [vmem:[%s5290 + $0x188] sm:$0xff]
        %v5895 = vld [vmem:[%s5290 + $0x1a0] sm:$0xff]
        %v5896 = vld [vmem:[%s5290 + $0x1a8] sm:$0xff]
        %v5897 = vld [vmem:[%s5290 + $0x1c0] sm:$0xff]
        %v5898 = vld [vmem:[%s5290 + $0x1c8] sm:$0xff]
        %v5899 = vld [vmem:[%s5290 + $0x1e0] sm:$0xff]
        %v5900 = vld [vmem:[%s5290 + $0x1e8] sm:$0xff]
        %v5901 = vmul.f32 %v5869, %v5544
        %v5902 = vmul.f32 %v5870, %v5544
        %v5903 = vmul.f32 %v5871, %v5544
        %v5904 = vmul.f32 %v5872, %v5544
        %v5905 = vmul.f32 %v5873, %v5544
        %v5906 = vmul.f32 %v5874, %v5544
        %v5907 = vmul.f32 %v5875, %v5544
        %v5908 = vmul.f32 %v5876, %v5544
        %v5909 = vmul.f32 %v5877, %v5544
        %v5910 = vmul.f32 %v5878, %v5544
        %v5911 = vmul.f32 %v5879, %v5544
        %v5912 = vmul.f32 %v5880, %v5544
        %v5913 = vmul.f32 %v5881, %v5544
        %v5914 = vmul.f32 %v5882, %v5544
        %v5915 = vmul.f32 %v5883, %v5544
        %v5916 = vmul.f32 %v5884, %v5544
        %v5917 = vmul.f32 %v5885, %v5544
        %v5918 = vmul.f32 %v5886, %v5544
        %v5919 = vmul.f32 %v5887, %v5544
        %v5920 = vmul.f32 %v5888, %v5544
        %v5921 = vmul.f32 %v5889, %v5544
        %v5922 = vmul.f32 %v5890, %v5544
        %v5923 = vmul.f32 %v5891, %v5544
        %v5924 = vmul.f32 %v5892, %v5544
        %v5925 = vmul.f32 %v5893, %v5544
        %v5926 = vmul.f32 %v5894, %v5544
        %v5927 = vmul.f32 %v5895, %v5544
        %v5928 = vmul.f32 %v5896, %v5544
        %v5929 = vmul.f32 %v5897, %v5544
        %v5930 = vmul.f32 %v5898, %v5544
        %v5931 = vmul.f32 %v5899, %v5544
        %v5932 = vmul.f32 %v5900, %v5544
        %v5933 = vadd.f32 %v5901, %v5580
        %v5934 = vadd.f32 %v5902, %v5580
        %v5935 = vadd.f32 %v5903, %v5580
        %v5936 = vadd.f32 %v5904, %v5580
        %v5937 = vadd.f32 %v5905, %v5580
        %v5938 = vadd.f32 %v5906, %v5580
        %v5939 = vadd.f32 %v5907, %v5580
        %v5940 = vadd.f32 %v5908, %v5580
        %v5941 = vadd.f32 %v5909, %v5580
        %v5942 = vadd.f32 %v5910, %v5580
        %v5943 = vadd.f32 %v5911, %v5580
        %v5944 = vadd.f32 %v5912, %v5580
        %v5945 = vadd.f32 %v5913, %v5580
        %v5946 = vadd.f32 %v5914, %v5580
        %v5947 = vadd.f32 %v5915, %v5580
        %v5948 = vadd.f32 %v5916, %v5580
        %v5949 = vadd.f32 %v5917, %v5580
        %v5950 = vadd.f32 %v5918, %v5580
        %v5951 = vadd.f32 %v5919, %v5580
        %v5952 = vadd.f32 %v5920, %v5580
        %v5953 = vadd.f32 %v5921, %v5580
        %v5954 = vadd.f32 %v5922, %v5580
        %v5955 = vadd.f32 %v5923, %v5580
        %v5956 = vadd.f32 %v5924, %v5580
        %v5957 = vadd.f32 %v5925, %v5580
        %v5958 = vadd.f32 %v5926, %v5580
        %v5959 = vadd.f32 %v5927, %v5580
        %v5960 = vadd.f32 %v5928, %v5580
        %v5961 = vadd.f32 %v5929, %v5580
        %v5962 = vadd.f32 %v5930, %v5580
        %v5963 = vadd.f32 %v5931, %v5580
        %v5964 = vadd.f32 %v5932, %v5580
        %v5965 = vxor.u32 %v5933, 2147483648
        %v5966 = vxor.u32 %v5934, 2147483648
        %v5967 = vxor.u32 %v5935, 2147483648
        %v5968 = vxor.u32 %v5936, 2147483648
        %v5969 = vxor.u32 %v5937, 2147483648
        %v5970 = vxor.u32 %v5938, 2147483648
        %v5971 = vxor.u32 %v5939, 2147483648
        %v5972 = vxor.u32 %v5940, 2147483648
        %v5973 = vxor.u32 %v5941, 2147483648
        %v5974 = vxor.u32 %v5942, 2147483648
        %v5975 = vxor.u32 %v5943, 2147483648
        %v5976 = vxor.u32 %v5944, 2147483648
        %v5977 = vxor.u32 %v5945, 2147483648
        %v5978 = vxor.u32 %v5946, 2147483648
        %v5979 = vxor.u32 %v5947, 2147483648
        %v5980 = vxor.u32 %v5948, 2147483648
        %v5981 = vxor.u32 %v5949, 2147483648
        %v5982 = vxor.u32 %v5950, 2147483648
        %v5983 = vxor.u32 %v5951, 2147483648
        %v5984 = vxor.u32 %v5952, 2147483648
        %v5985 = vxor.u32 %v5953, 2147483648
        %v5986 = vxor.u32 %v5954, 2147483648
        %v5987 = vxor.u32 %v5955, 2147483648
        %v5988 = vxor.u32 %v5956, 2147483648
        %v5989 = vxor.u32 %v5957, 2147483648
        %v5990 = vxor.u32 %v5958, 2147483648
        %v5991 = vxor.u32 %v5959, 2147483648
        %v5992 = vxor.u32 %v5960, 2147483648
        %v5993 = vxor.u32 %v5961, 2147483648
        %v5994 = vxor.u32 %v5962, 2147483648
        %v5995 = vxor.u32 %v5963, 2147483648
        %v5996 = vxor.u32 %v5964, 2147483648
        %v5997 = vmul.f32 %v5965, 1.442695
        %v5998 = vpow.pop %v5997
        %v5999 = vmul.f32 %v5966, 1.442695
        %v6000 = vpow.pop %v5999
        %v6001 = vmul.f32 %v5967, 1.442695
        %v6002 = vpow.pop %v6001
        %v6003 = vmul.f32 %v5968, 1.442695
        %v6004 = vpow.pop %v6003
        %v6005 = vmul.f32 %v5969, 1.442695
        %v6006 = vpow.pop %v6005
        %v6007 = vmul.f32 %v5970, 1.442695
        %v6008 = vpow.pop %v6007
        %v6009 = vmul.f32 %v5971, 1.442695
        %v6010 = vpow.pop %v6009
        %v6011 = vmul.f32 %v5972, 1.442695
        %v6012 = vpow.pop %v6011
        %v6013 = vmul.f32 %v5973, 1.442695
        %v6014 = vpow.pop %v6013
        %v6015 = vmul.f32 %v5974, 1.442695
        %v6016 = vpow.pop %v6015
        %v6017 = vmul.f32 %v5975, 1.442695
        %v6018 = vpow.pop %v6017
        %v6019 = vmul.f32 %v5976, 1.442695
        %v6020 = vpow.pop %v6019
        %v6021 = vmul.f32 %v5977, 1.442695
        %v6022 = vpow.pop %v6021
        %v6023 = vmul.f32 %v5978, 1.442695
        %v6024 = vpow.pop %v6023
        %v6025 = vmul.f32 %v5979, 1.442695
        %v6026 = vpow.pop %v6025
        %v6027 = vmul.f32 %v5980, 1.442695
        %v6028 = vpow.pop %v6027
        %v6029 = vmul.f32 %v5981, 1.442695
        %v6030 = vpow.pop %v6029
        %v6031 = vmul.f32 %v5982, 1.442695
        %v6032 = vpow.pop %v6031
        %v6033 = vmul.f32 %v5983, 1.442695
        %v6034 = vpow.pop %v6033
        %v6035 = vmul.f32 %v5984, 1.442695
        %v6036 = vpow.pop %v6035
        %v6037 = vmul.f32 %v5985, 1.442695
        %v6038 = vpow.pop %v6037
        %v6039 = vmul.f32 %v5986, 1.442695
        %v6040 = vpow.pop %v6039
        %v6041 = vmul.f32 %v5987, 1.442695
        %v6042 = vpow.pop %v6041
        %v6043 = vmul.f32 %v5988, 1.442695
        %v6044 = vpow.pop %v6043
        %v6045 = vmul.f32 %v5989, 1.442695
        %v6046 = vpow.pop %v6045
        %v6047 = vmul.f32 %v5990, 1.442695
        %v6048 = vpow.pop %v6047
        %v6049 = vmul.f32 %v5991, 1.442695
        %v6050 = vpow.pop %v6049
        %v6051 = vmul.f32 %v5992, 1.442695
        %v6052 = vpow.pop %v6051
        %v6053 = vmul.f32 %v5993, 1.442695
        %v6054 = vpow.pop %v6053
        %v6055 = vmul.f32 %v5994, 1.442695
        %v6056 = vpow.pop %v6055
        %v6057 = vmul.f32 %v5995, 1.442695
        %v6058 = vpow.pop %v6057
        %v6059 = vmul.f32 %v5996, 1.442695
        %v6060 = vpow.pop %v6059
        %v6061 = vadd.f32 %v5998, 1.0
        %v6062 = vadd.f32 %v6000, 1.0
        %v6063 = vadd.f32 %v6002, 1.0
        %v6064 = vadd.f32 %v6004, 1.0
        %v6065 = vadd.f32 %v6006, 1.0
        %v6066 = vadd.f32 %v6008, 1.0
        %v6067 = vadd.f32 %v6010, 1.0
        %v6068 = vadd.f32 %v6012, 1.0
        %v6069 = vadd.f32 %v6014, 1.0
        %v6070 = vadd.f32 %v6016, 1.0
        %v6071 = vadd.f32 %v6018, 1.0
        %v6072 = vadd.f32 %v6020, 1.0
        %v6073 = vadd.f32 %v6022, 1.0
        %v6074 = vadd.f32 %v6024, 1.0
        %v6075 = vadd.f32 %v6026, 1.0
        %v6076 = vadd.f32 %v6028, 1.0
        %v6077 = vadd.f32 %v6030, 1.0
        %v6078 = vadd.f32 %v6032, 1.0
        %v6079 = vadd.f32 %v6034, 1.0
        %v6080 = vadd.f32 %v6036, 1.0
        %v6081 = vadd.f32 %v6038, 1.0
        %v6082 = vadd.f32 %v6040, 1.0
        %v6083 = vadd.f32 %v6042, 1.0
        %v6084 = vadd.f32 %v6044, 1.0
        %v6085 = vadd.f32 %v6046, 1.0
        %v6086 = vadd.f32 %v6048, 1.0
        %v6087 = vadd.f32 %v6050, 1.0
        %v6088 = vadd.f32 %v6052, 1.0
        %v6089 = vadd.f32 %v6054, 1.0
        %v6090 = vadd.f32 %v6056, 1.0
        %v6091 = vadd.f32 %v6058, 1.0
        %v6092 = vadd.f32 %v6060, 1.0
        %v6093 = vrcp.pop %v6061
        %v6094 = vmul.f32 1.0, %v6093
        %v6095 = vrcp.pop %v6062
        %v6096 = vmul.f32 1.0, %v6095
        %v6097 = vrcp.pop %v6063
        %v6098 = vmul.f32 1.0, %v6097
        %v6099 = vrcp.pop %v6064
        %v6100 = vmul.f32 1.0, %v6099
        %v6101 = vrcp.pop %v6065
        %v6102 = vmul.f32 1.0, %v6101
        %v6103 = vrcp.pop %v6066
        %v6104 = vmul.f32 1.0, %v6103
        %v6105 = vrcp.pop %v6067
        %v6106 = vmul.f32 1.0, %v6105
        %v6107 = vrcp.pop %v6068
        %v6108 = vmul.f32 1.0, %v6107
        %v6109 = vrcp.pop %v6069
        %v6110 = vmul.f32 1.0, %v6109
        %v6111 = vrcp.pop %v6070
        %v6112 = vmul.f32 1.0, %v6111
        %v6113 = vrcp.pop %v6071
        %v6114 = vmul.f32 1.0, %v6113
        %v6115 = vrcp.pop %v6072
        %v6116 = vmul.f32 1.0, %v6115
        %v6117 = vrcp.pop %v6073
        %v6118 = vmul.f32 1.0, %v6117
        %v6119 = vrcp.pop %v6074
        %v6120 = vmul.f32 1.0, %v6119
        %v6121 = vrcp.pop %v6075
        %v6122 = vmul.f32 1.0, %v6121
        %v6123 = vrcp.pop %v6076
        %v6124 = vmul.f32 1.0, %v6123
        %v6125 = vrcp.pop %v6077
        %v6126 = vmul.f32 1.0, %v6125
        %v6127 = vrcp.pop %v6078
        %v6128 = vmul.f32 1.0, %v6127
        %v6129 = vrcp.pop %v6079
        %v6130 = vmul.f32 1.0, %v6129
        %v6131 = vrcp.pop %v6080
        %v6132 = vmul.f32 1.0, %v6131
        %v6133 = vrcp.pop %v6081
        %v6134 = vmul.f32 1.0, %v6133
        %v6135 = vrcp.pop %v6082
        %v6136 = vmul.f32 1.0, %v6135
        %v6137 = vrcp.pop %v6083
        %v6138 = vmul.f32 1.0, %v6137
        %v6139 = vrcp.pop %v6084
        %v6140 = vmul.f32 1.0, %v6139
        %v6141 = vrcp.pop %v6085
        %v6142 = vmul.f32 1.0, %v6141
        %v6143 = vrcp.pop %v6086
        %v6144 = vmul.f32 1.0, %v6143
        %v6145 = vrcp.pop %v6087
        %v6146 = vmul.f32 1.0, %v6145
        %v6147 = vrcp.pop %v6088
        %v6148 = vmul.f32 1.0, %v6147
        %v6149 = vrcp.pop %v6089
        %v6150 = vmul.f32 1.0, %v6149
        %v6151 = vrcp.pop %v6090
        %v6152 = vmul.f32 1.0, %v6151
        %v6153 = vrcp.pop %v6091
        %v6154 = vmul.f32 1.0, %v6153
        %v6155 = vrcp.pop %v6092
        %v6156 = vmul.f32 1.0, %v6155
        %v6157 = vmul.f32 %v5933, %v6094
        %v6158 = vmul.f32 %v5934, %v6096
        %v6159 = vmul.f32 %v5935, %v6098
        %v6160 = vmul.f32 %v5936, %v6100
        %v6161 = vmul.f32 %v5937, %v6102
        %v6162 = vmul.f32 %v5938, %v6104
        %v6163 = vmul.f32 %v5939, %v6106
        %v6164 = vmul.f32 %v5940, %v6108
        %v6165 = vmul.f32 %v5941, %v6110
        %v6166 = vmul.f32 %v5942, %v6112
        %v6167 = vmul.f32 %v5943, %v6114
        %v6168 = vmul.f32 %v5944, %v6116
        %v6169 = vmul.f32 %v5945, %v6118
        %v6170 = vmul.f32 %v5946, %v6120
        %v6171 = vmul.f32 %v5947, %v6122
        %v6172 = vmul.f32 %v5948, %v6124
        %v6173 = vmul.f32 %v5949, %v6126
        %v6174 = vmul.f32 %v5950, %v6128
        %v6175 = vmul.f32 %v5951, %v6130
        %v6176 = vmul.f32 %v5952, %v6132
        %v6177 = vmul.f32 %v5953, %v6134
        %v6178 = vmul.f32 %v5954, %v6136
        %v6179 = vmul.f32 %v5955, %v6138
        %v6180 = vmul.f32 %v5956, %v6140
        %v6181 = vmul.f32 %v5957, %v6142
        %v6182 = vmul.f32 %v5958, %v6144
        %v6183 = vmul.f32 %v5959, %v6146
        %v6184 = vmul.f32 %v5960, %v6148
        %v6185 = vmul.f32 %v5961, %v6150
        %v6186 = vmul.f32 %v5962, %v6152
        %v6187 = vmul.f32 %v5963, %v6154
        %v6188 = vmul.f32 %v5964, %v6156
        %6189 = vst.msk [vmem:[%s5290] sm:$0xff] %vm3052, %v6157
        %6190 = vst.msk [vmem:[%s5290 + $0x8] sm:$0xff] %vm3052, %v6158
        %6191 = vst.msk [vmem:[%s5290 + $0x20] sm:$0xff] %vm3052, %v6159
        %6192 = vst.msk [vmem:[%s5290 + $0x28] sm:$0xff] %vm3052, %v6160
        %6193 = vst.msk [vmem:[%s5290 + $0x40] sm:$0xff] %vm3052, %v6161
        %6194 = vst.msk [vmem:[%s5290 + $0x48] sm:$0xff] %vm3052, %v6162
        %6195 = vst.msk [vmem:[%s5290 + $0x60] sm:$0xff] %vm3052, %v6163
        %6196 = vst.msk [vmem:[%s5290 + $0x68] sm:$0xff] %vm3052, %v6164
        %6197 = vst.msk [vmem:[%s5290 + $0x80] sm:$0xff] %vm3052, %v6165
        %6198 = vst.msk [vmem:[%s5290 + $0x88] sm:$0xff] %vm3052, %v6166
        %6199 = vst.msk [vmem:[%s5290 + $0xa0] sm:$0xff] %vm3052, %v6167
        %6200 = vst.msk [vmem:[%s5290 + $0xa8] sm:$0xff] %vm3052, %v6168
        %6201 = vst.msk [vmem:[%s5290 + $0xc0] sm:$0xff] %vm3052, %v6169
        %6202 = vst.msk [vmem:[%s5290 + $0xc8] sm:$0xff] %vm3052, %v6170
        %6203 = vst.msk [vmem:[%s5290 + $0xe0] sm:$0xff] %vm3052, %v6171
        %6204 = vst.msk [vmem:[%s5290 + $0xe8] sm:$0xff] %vm3052, %v6172
        %6205 = vst.msk [vmem:[%s5290 + $0x100] sm:$0xff] %vm3052, %v6173
        %6206 = vst.msk [vmem:[%s5290 + $0x108] sm:$0xff] %vm3052, %v6174
        %6207 = vst.msk [vmem:[%s5290 + $0x120] sm:$0xff] %vm3052, %v6175
        %6208 = vst.msk [vmem:[%s5290 + $0x128] sm:$0xff] %vm3052, %v6176
        %6209 = vst.msk [vmem:[%s5290 + $0x140] sm:$0xff] %vm3052, %v6177
        %6210 = vst.msk [vmem:[%s5290 + $0x148] sm:$0xff] %vm3052, %v6178
        %6211 = vst.msk [vmem:[%s5290 + $0x160] sm:$0xff] %vm3052, %v6179
        %6212 = vst.msk [vmem:[%s5290 + $0x168] sm:$0xff] %vm3052, %v6180
        %6213 = vst.msk [vmem:[%s5290 + $0x180] sm:$0xff] %vm3052, %v6181
        %6214 = vst.msk [vmem:[%s5290 + $0x188] sm:$0xff] %vm3052, %v6182
        %6215 = vst.msk [vmem:[%s5290 + $0x1a0] sm:$0xff] %vm3052, %v6183
        %6216 = vst.msk [vmem:[%s5290 + $0x1a8] sm:$0xff] %vm3052, %v6184
        %6217 = vst.msk [vmem:[%s5290 + $0x1c0] sm:$0xff] %vm3052, %v6185
        %6218 = vst.msk [vmem:[%s5290 + $0x1c8] sm:$0xff] %vm3052, %v6186
        %6219 = vst.msk [vmem:[%s5290 + $0x1e0] sm:$0xff] %vm3052, %v6187
        %6220 = vst.msk [vmem:[%s5290 + $0x1e8] sm:$0xff] %vm3052, %v6188
        %s6221 = sand.u32 %s159, 1
        %s6222 = scalar_lea.sflag [#allocation3], %s6221
        %s6223 = sand.u32 %s159, 1
        %s6224 = smul.addr %s6223, 512
        %s6225 = scalar_lea.vmem [#allocation2], %s6224
        // Predicated region
        $region45: #{tpu_custom_call.1} parent=43 // pred_check
          %p6226 = pneg %p169
        $region46: #{tpu_custom_call.1} parent=43 // pred_check_branch
          %6228 = sbr.rel (%p6226) target = $region48
        $region47: #{tpu_custom_call.1} parent=43 // pred_region
          %s6230 = ssub.s32 8192, 8192
          %6231 = vsyncadd %s6222, %s6230
          %s6232 = smul.addr %s20, 64
          %s6233 = smul.addr %s6232, 128
          %s6234 = scalar_lea.hbm %s6, %s6233
          %s6235 = sshll.u32 %s6225, 4
          %s6236 = int_to_ptr.vmem [resolvable:$true] %s6235
          %6241 = dma.vmem_to_hbm [thread:$0]  %s6236, 8192, %s6234, %s6222, 128, 128, 8
        $region48: #{tpu_custom_call.1} parent=43 // pred_fallthru
          _
      $region44: #{tpu_custom_call.1} parent=5 // pred_fallthru
        _
      %p6242 = scmp.le.s32.totalorder 2, %s15
      // Predicated region
      $region49: #{tpu_custom_call.1} parent=5 // pred_check
        %p6243 = pneg %p6242
      $region50: #{tpu_custom_call.1} parent=5 // pred_check_branch
        %6245 = sbr.rel (%p6243) target = $region52
      $region51: #{tpu_custom_call.1} parent=5 // pred_region
        %s6246 = ssub.s32 %s15, 2
        // Predicated region
        $region53: #{tpu_custom_call.1} parent=51 // pred_check
          %p6247 = pneg %p175
        $region54: #{tpu_custom_call.1} parent=51 // pred_check_branch
          %6249 = sbr.rel (%p6247) target = $region56
        $region55: #{tpu_custom_call.1} parent=51 // pred_region
          %s6250 = sand.u32 %s160, 1
          %s6251 = scalar_lea.sflag [#allocation3], %s6250
          %s6252 = sand.u32 %s160, 1
          %s6253 = smul.addr %s6252, 512
          %s6254 = scalar_lea.vmem [#allocation2], %s6253
          %6255 = dma.done %s6251, 8192
        $region56: #{tpu_custom_call.1} parent=51 // pred_fallthru
          _
      $region52: #{tpu_custom_call.1} parent=5 // pred_fallthru
        _
    $region6: #{tpu_custom_call.1} parent=1 // loop_footer
      %s19 = sadd.s32 1, %s15
    $region7: #{tpu_custom_call.1} parent=1 // loop_footer_branch
      %14 = sbr.rel target = $region3
    $region8: #{tpu_custom_call.1} parent=1 // loop_exit
      _
    %6256 = vsyncpa [#allocation3], 1
    %s6257 = scalar_lea.sflag [#allocation3], 1
    %6258 = vsyncpa %s6257, 1

</llo_original>
